<compile_context>
chip_gen: v6e
topology: v6e:2x2x1
jax: 0.10.0
libtpu: 0.0.40
codegen_flags: <defaults>
</compile_context>

<pallas_src>
import functools
from math import ceil, sqrt

import jax
import jax.numpy as jnp
from jax.experimental import pallas as pl
from jax.experimental.pallas import tpu as pltpu

NUM_SAGE_LAYERS = 3
_EPS = 1e-15
_BN_EPS = 1e-5
_LOSS_LANE0 = 8          # lanes [8, 8 + 2*num_layers) of the output row: losses
_OUT_LANES = 128         # lane-dense output row width


def _round_up(x, m):
    return ((x + m - 1) // m) * m


# ---------------------------------------------------------------------------
# Weight packing: everything goes into two f32 slabs (matrices / vectors)
# ---------------------------------------------------------------------------

class _SlabPacker:
    """Packs 2-D weight matrices and 1-D bias-like vectors into two slabs.

    Every matrix starts at a sublane offset that is a multiple of 8 so the
    in-kernel static slices stay tile-aligned; vectors occupy one row each.
    """

    def __init__(self):
        self._mats = []
        self._vecs = []
        self._mrow = 0

    def mat(self, w):
        w = jnp.asarray(w, jnp.float32)
        r, c = w.shape
        handle = (self._mrow, r, c)
        self._mats.append(w)
        self._mrow += _round_up(r, 8)
        return handle

    def vec(self, v):
        v = jnp.asarray(v, jnp.float32).reshape(-1)
        handle = (len(self._vecs), v.shape[0])
        self._vecs.append(v)
        return handle

    def finalize(self):
        mw = max(w.shape[1] for w in self._mats)
        vw = max(v.shape[0] for v in self._vecs)
        mat = jnp.zeros((_round_up(self._mrow, 8), mw), jnp.float32)
        off = 0
        for w in self._mats:
            r, c = w.shape
            mat = mat.at[off:off + r, :c].set(w)
            off += _round_up(r, 8)
        vec = jnp.zeros((_round_up(len(self._vecs), 8), vw), jnp.float32)
        for i, v in enumerate(self._vecs):
            vec = vec.at[i, :v.shape[0]].set(v)
        return mat, vec


def _fold_bn(bn):
    gamma, beta, mean, var = bn
    scale = gamma / jnp.sqrt(var + _BN_EPS)
    shift = beta - mean * scale
    return scale, shift


def _block_diag(a, b):
    r1, c1 = a.shape
    r2, c2 = b.shape
    top = jnp.concatenate([a, jnp.zeros((r1, c2), a.dtype)], axis=1)
    bot = jnp.concatenate([jnp.zeros((r2, c1), b.dtype), b], axis=1)
    return jnp.concatenate([top, bot], axis=0)


def _pack_dual_sage(pk, pool, embed):
    """DiffPoolLayer weights: channel order [embed | pool]; each conv weight is
    the row-stack [W_rel ; W_root] so the conv is one matmul on cat([agg, h])."""
    he = embed['conv1'][0].shape[1]
    hp = pool['conv1'][0].shape[1]
    ce = embed['conv3'][0].shape[1]
    cp = pool['conv3'][0].shape[1]

    def cat_cols(a, b):
        return jnp.concatenate([a, b], axis=1)

    w1 = jnp.concatenate([cat_cols(embed['conv1'][0], pool['conv1'][0]),
                          cat_cols(embed['conv1'][1], pool['conv1'][1])], axis=0)
    w2 = jnp.concatenate([_block_diag(embed['conv2'][0], pool['conv2'][0]),
                          _block_diag(embed['conv2'][1], pool['conv2'][1])], axis=0)
    w3 = jnp.concatenate([_block_diag(embed['conv3'][0], pool['conv3'][0]),
                          _block_diag(embed['conv3'][1], pool['conv3'][1])], axis=0)

    sc1e, sh1e = _fold_bn(embed['bn1'])
    sc1p, sh1p = _fold_bn(pool['bn1'])
    sc2e, sh2e = _fold_bn(embed['bn2'])
    sc2p, sh2p = _fold_bn(pool['bn2'])

    # pool `lin`: zero-pad so each term is a full-width matmul (no lane slices).
    wl, bl = pool['lin']                     # (2*hp + cp, cp), (cp,)
    h = he + hp
    wl1 = jnp.zeros((h, cp), jnp.float32).at[he:, :].set(wl[:hp])
    wl2 = jnp.zeros((h, cp), jnp.float32).at[he:, :].set(wl[hp:2 * hp])
    wl3 = jnp.zeros((ce + cp, cp), jnp.float32).at[ce:, :].set(wl[2 * hp:])

    return dict(
        He=he, Hp=hp, Ce=ce, Cp=cp,
        W1=pk.mat(w1), W2=pk.mat(w2), W3=pk.mat(w3),
        WL1=pk.mat(wl1), WL2=pk.mat(wl2), WL3=pk.mat(wl3),
        b1=pk.vec(jnp.concatenate([embed['conv1'][2], pool['conv1'][2]])),
        sc1=pk.vec(jnp.concatenate([sc1e, sc1p])),
        sh1=pk.vec(jnp.concatenate([sh1e, sh1p])),
        b2=pk.vec(jnp.concatenate([embed['conv2'][2], pool['conv2'][2]])),
        sc2=pk.vec(jnp.concatenate([sc2e, sc2p])),
        sh2=pk.vec(jnp.concatenate([sh2e, sh2p])),
        b3=pk.vec(jnp.concatenate([embed['conv3'][2], pool['conv3'][2]])),
        bl=pk.vec(bl),
    )


def _pack_single_sage(pk, p):
    sc1, sh1 = _fold_bn(p['bn1'])
    sc2, sh2 = _fold_bn(p['bn2'])
    w1 = jnp.concatenate([p['conv1'][0], p['conv1'][1]], axis=0)
    w2 = jnp.concatenate([p['conv2'][0], p['conv2'][1]], axis=0)
    w3 = jnp.concatenate([p['conv3'][0], p['conv3'][1]], axis=0)
    return dict(
        He=p['conv1'][0].shape[1], Ce=p['conv3'][0].shape[1],
        W1=pk.mat(w1), W2=pk.mat(w2), W3=pk.mat(w3),
        b1=pk.vec(p['conv1'][2]), sc1=pk.vec(sc1), sh1=pk.vec(sh1),
        b2=pk.vec(p['conv2'][2]), sc2=pk.vec(sc2), sh2=pk.vec(sh2),
        b3=pk.vec(p['conv3'][2]),
    )


def build_plan(params, num_nodes0):
    """Folds / stacks all model weights into two slabs + static metadata."""
    pk = _SlabPacker()
    layers = []
    node_counts = []
    n = num_nodes0
    for lp in params['layers']:
        meta = _pack_dual_sage(pk, lp['pool'], lp['embed'])
        layers.append(meta)
        node_counts.append(n)
        n = meta['Cp']
    final = _pack_single_sage(pk, params['final_embed'])

    # lin1 split into per-graph-embedding row blocks (no wide concat in-kernel):
    # one 48-wide block per diffpool layer + (x1, x2, x3) blocks of final_embed.
    lin1_w, lin1_b = params['lin1']
    lin2_w, lin2_b = params['lin2']
    emb_sizes = [2 * m['He'] + m['Ce'] for m in layers]
    emb_sizes += [final['He'], final['He'], final['Ce']]
    w1_blocks = []
    off = 0
    for sz in emb_sizes:
        w1_blocks.append(pk.mat(lin1_w[off:off + sz]))
        off += sz
    assert off == lin1_w.shape[0]

    head = dict(W1=tuple(w1_blocks), b1=pk.vec(lin1_b),
                W2=pk.mat(lin2_w), b2=pk.vec(lin2_b), T=lin2_w.shape[1])
    mat_slab, vec_slab = pk.finalize()
    plan = dict(layers=tuple(layers), final=final, head=head,
                node_counts=tuple(node_counts))
    return mat_slab, vec_slab, plan


# ---------------------------------------------------------------------------
# Fused forward kernel (one grid step == one graph)
# ---------------------------------------------------------------------------

def _diffpool_forward_kernel(x_ref, adj_ref, mask_ref, mat_ref, vec_ref,
                             o_ref, *, plan):
    def mat(h):
        off, r, c = h
        return mat_ref[off:off + r, :c]

    def vec(h):
        row, c = h
        return vec_ref[row:row + 1, :c]

    def conv(adj, rdeg, h, w_h, b_h, m):
        # DenseSAGEConv: lin_rel(mean_agg(h)) + lin_root(h), as ONE matmul on
        # cat([agg, h]) against the row-stacked [W_rel ; W_root] weight.
        agg = jnp.dot(adj, h, preferred_element_type=jnp.float32) * rdeg
        out = (jnp.dot(jnp.concatenate([agg, h], axis=-1), mat(w_h),
                       preferred_element_type=jnp.float32) + vec(b_h))
        if m is not None:
            out = out * m
        return out

    def sage_stack(sp, x, adj, m):
        n = x.shape[0]
        # degree on the MXU (adj @ 1) instead of an XLU cross-lane reduce
        ones = jnp.ones((n, 1), jnp.float32)
        deg = jnp.maximum(
            jnp.dot(adj, ones, preferred_element_type=jnp.float32), 1.0)
        rdeg = 1.0 / deg     # exact divide (parity with the torch reference)
        x1 = conv(adj, rdeg, x, sp['W1'], sp['b1'], m)
        x1 = jnp.maximum(x1, 0.0) * vec(sp['sc1']) + vec(sp['sh1'])   # eval BN
        x2 = conv(adj, rdeg, x1, sp['W2'], sp['b2'], m)
        x2 = jnp.maximum(x2, 0.0) * vec(sp['sc2']) + vec(sp['sh2'])
        x3 = conv(adj, rdeg, x2, sp['W3'], sp['b3'], m)
        return x1, x2, x3

    def diffpool_layer(lp, x, adj, m):
        he, ce = lp['He'], lp['Ce']
        x1, x2, x3 = sage_stack(lp, x, adj, m)
        # pool `lin` on zero-padded full-width weights (no mid-tile slices)
        s_raw = (jnp.dot(x1, mat(lp['WL1']), preferred_element_type=jnp.float32)
                 + jnp.dot(x2, mat(lp['WL2']), preferred_element_type=jnp.float32)
                 + jnp.dot(x3, mat(lp['WL3']), preferred_element_type=jnp.float32)
                 + vec(lp['bl']))
        # ---- dense_diff_pool ----
        s = jax.nn.softmax(s_raw, axis=-1)
        z = jnp.concatenate([x1[:, :he], x2[:, :he], x3[:, :ce]], axis=-1)
        if m is not None:
            s = s * m
            z = z * m
        dn = (((0,), (0,)), ((), ()))         # contract over the node axis (s^T .)
        out_x = jax.lax.dot_general(s, z, dn, preferred_element_type=jnp.float32)
        a_s = jnp.dot(adj, s, preferred_element_type=jnp.float32)
        out_adj = jax.lax.dot_general(s, a_s, dn,
                                      preferred_element_type=jnp.float32)
        # link loss computed directly (numerically robust); adj is already
        # resident in VMEM so the (N, N) temp is free at these sizes.
        # TODO(synk): use the trace identity + node-tiling for large max_num_nodes.
        ssT = jax.lax.dot_general(s, s, (((1,), (1,)), ((), ())),
                                  preferred_element_type=jnp.float32)
        diff = adj - ssT
        link_sq = jnp.sum(diff * diff)
        ent = jnp.sum(-s * jnp.log(s + _EPS))
        return out_x, out_adj, link_sq, ent

    x = x_ref[0]            # (N0, Cin)
    adj = adj_ref[0]        # (N0, N0)
    m = mask_ref[0]         # (N0, 1)

    graph_embs = []
    losses = []
    for li, lp in enumerate(plan['layers']):
        x, adj, link_sq, ent = diffpool_layer(lp, x, adj, m if li == 0 else None)
        graph_embs.append(jnp.max(x, axis=0, keepdims=True))   # in-kernel max-pool
        losses += [link_sq, ent]

    fx1, fx2, fx3 = sage_stack(plan['final'], x, adj, None)
    graph_embs.append(jnp.max(fx1, axis=0, keepdims=True))
    graph_embs.append(jnp.max(fx2, axis=0, keepdims=True))
    graph_embs.append(jnp.max(fx3, axis=0, keepdims=True))

    # ---- MLP head (lin1 as per-block matmuls; eval-mode sigmoid) ----
    head = plan['head']
    acc = vec(head['b1'])
    for gi, wh in zip(graph_embs, head['W1']):
        acc = acc + jnp.dot(gi, mat(wh), preferred_element_type=jnp.float32)
    h = jnp.maximum(acc, 0.0)
    y = (jnp.dot(h, mat(head['W2']), preferred_element_type=jnp.float32)
         + vec(head['b2']))
    y = 1.0 / (1.0 + jnp.exp(-y))

    # one lane-dense (1, 128) output row: [probs | per-layer (link_sq, ent) | 0...]
    lane = jax.lax.broadcasted_iota(jnp.int32, (1, _OUT_LANES), 1)
    row = jnp.zeros((1, _OUT_LANES), jnp.float32)
    for i, v in enumerate(losses):
        row = jnp.where(lane == (_LOSS_LANE0 + i), v, row)
    o_ref[0] = row
    o_ref[0, :, 0:head['T']] = y


# ---------------------------------------------------------------------------
# Forward wrapper: ONE pallas_call for the whole model
# ---------------------------------------------------------------------------

def diffpool_forward(params, x, adj, mask=None):
    B, N, C = x.shape
    if mask is None:
        mask = jnp.ones((B, N), jnp.float32)
    mask3 = mask.astype(jnp.float32).reshape(B, N, 1)

    mat_slab, vec_slab, plan = build_plan(params, N)
    T = plan['head']['T']
    L = len(plan['layers'])
    assert T <= _LOSS_LANE0 and _LOSS_LANE0 + 2 * L <= _OUT_LANES

    slab = pl.pallas_call(
        functools.partial(_diffpool_forward_kernel, plan=plan),
        out_shape=jax.ShapeDtypeStruct((B, 1, _OUT_LANES), jnp.float32),
        grid=(B,),
        in_specs=[
            pl.BlockSpec((1, N, C), lambda i: (i, 0, 0)),
            pl.BlockSpec((1, N, N), lambda i: (i, 0, 0)),
            pl.BlockSpec((1, N, 1), lambda i: (i, 0, 0)),
            pl.BlockSpec(mat_slab.shape, lambda i: (0, 0)),
            pl.BlockSpec(vec_slab.shape, lambda i: (0, 0)),
        ],
        out_specs=pl.BlockSpec((1, 1, _OUT_LANES), lambda i: (i, 0, 0)),
        compiler_params=pltpu.CompilerParams(
            dimension_semantics=("parallel",),          # v7x: graphs across TCs
            vmem_limit_bytes=32 * 1024 * 1024),
    )(x.astype(jnp.float32), adj.astype(jnp.float32), mask3, mat_slab, vec_slab)

    probs = slab[:, 0, :T]
    l_total = 0.0
    e_total = 0.0
    for li, n_nodes in enumerate(plan['node_counts']):
        link_sq = jnp.sum(slab[:, 0, _LOSS_LANE0 + 2 * li])
        ent = jnp.sum(slab[:, 0, _LOSS_LANE0 + 2 * li + 1])
        # torch.norm(adj - s s^T, p=2) is Frobenius over the full (B, N, N)
        l_total = l_total + jnp.sqrt(jnp.maximum(link_sq, 0.0)) / float(B * n_nodes * n_nodes)
        e_total = e_total + ent / float(B * n_nodes)
    return probs, l_total, e_total


# ---------------------------------------------------------------------------
# Deterministic parameter initialization (same structure as the torch module)
# ---------------------------------------------------------------------------

def _init_lin(key, din, dout):
    k1, k2 = jax.random.split(key)
    lim = 1.0 / sqrt(din)
    W = jax.random.uniform(k1, (din, dout), jnp.float32, -lim, lim)
    b = jax.random.uniform(k2, (dout,), jnp.float32, -lim, lim)
    return (W, b)


def _init_sage_conv(key, din, dout):
    k1, k2, k3 = jax.random.split(key, 3)
    lim = 1.0 / sqrt(din)
    wrel = jax.random.uniform(k1, (din, dout), jnp.float32, -lim, lim)
    wroot = jax.random.uniform(k2, (din, dout), jnp.float32, -lim, lim)
    b = jax.random.uniform(k3, (dout,), jnp.float32, -lim, lim)
    return (wrel, wroot, b)


def _init_bn(key, c):
    k1, k2, k3, k4 = jax.random.split(key, 4)
    gamma = 1.0 + 0.1 * jax.random.normal(k1, (c,), jnp.float32)
    beta = 0.1 * jax.random.normal(k2, (c,), jnp.float32)
    rm = 0.1 * jax.random.normal(k3, (c,), jnp.float32)
    rv = 1.0 + 0.1 * jnp.abs(jax.random.normal(k4, (c,), jnp.float32))
    return (gamma, beta, rm, rv)


def init_sage_convolutions(key, in_c, hid, out_c, lin=True):
    keys = jax.random.split(key, 6)
    p = {'conv1': _init_sage_conv(keys[0], in_c, hid),
         'bn1': _init_bn(keys[1], hid),
         'conv2': _init_sage_conv(keys[2], hid, hid),
         'bn2': _init_bn(keys[3], hid),
         'conv3': _init_sage_conv(keys[4], hid, out_c)}
    if lin:
        p['lin'] = _init_lin(keys[5], (NUM_SAGE_LAYERS - 1) * hid + out_c, out_c)
    return p


def init_diffpool(key, dim_features, dim_target, num_layers, gnn_dim_hidden,
                  dim_embedding, dim_embedding_MLP, max_num_nodes):
    coarse_factor = 0.1 if num_layers == 1 else 0.25
    gnn_dim_input = dim_features
    no_new_clusters = ceil(coarse_factor * max_num_nodes)
    embed_out = (NUM_SAGE_LAYERS - 1) * gnn_dim_hidden + dim_embedding
    keys = jax.random.split(key, 2 * num_layers + 3)
    ki = 0
    layers = []
    for _ in range(num_layers):
        pool = init_sage_convolutions(keys[ki], gnn_dim_input, gnn_dim_hidden,
                                      no_new_clusters, lin=True); ki += 1
        embed = init_sage_convolutions(keys[ki], gnn_dim_input, gnn_dim_hidden,
                                       dim_embedding, lin=False); ki += 1
        layers.append({'pool': pool, 'embed': embed})
        gnn_dim_input = embed_out
        no_new_clusters = ceil(no_new_clusters * coarse_factor)
    final_embed = init_sage_convolutions(keys[ki], embed_out, gnn_dim_hidden,
                                         dim_embedding, lin=False); ki += 1
    final_dim = embed_out * (num_layers + 1)
    lin1 = _init_lin(keys[ki], final_dim, dim_embedding_MLP); ki += 1
    lin2 = _init_lin(keys[ki], dim_embedding_MLP, dim_target)
    return {'layers': layers, 'final_embed': final_embed,
            'lin1': lin1, 'lin2': lin2}


# ---------------------------------------------------------------------------
# Main
# ---------------------------------------------------------------------------

if __name__ == "__main__":
    dim_features = 8
    dim_target = 3
    num_layers = 2
    gnn_dim_hidden = 16
    dim_embedding = 16
    dim_embedding_MLP = 32
    max_num_nodes = 16

    key = jax.random.PRNGKey(0)
    k_params, k_x, k_adj = jax.random.split(key, 3)
    params = init_diffpool(k_params, dim_features, dim_target, num_layers,
                           gnn_dim_hidden, dim_embedding, dim_embedding_MLP,
                           max_num_nodes)

    # Dense batch (equivalent to to_dense_batch / to_dense_adj output):
    # graph 0 has 16 nodes, graph 1 has 12 nodes.
    B, Nmax = 2, 16
    num_nodes = jnp.array([16, 12])
    mask = (jnp.arange(Nmax)[None, :] < num_nodes[:, None]).astype(jnp.float32)

    x = jax.random.normal(k_x, (B, Nmax, dim_features), jnp.float32)
    x = x * mask[:, :, None]

    a = jax.random.bernoulli(k_adj, 0.3, (B, Nmax, Nmax)).astype(jnp.float32)
    adj = jnp.maximum(a, jnp.swapaxes(a, 1, 2))          # symmetric
    adj = adj * (1.0 - jnp.eye(Nmax))[None]              # no self loops
    adj = adj * mask[:, :, None] * mask[:, None, :]      # respect padding

    out, l_total, e_total = diffpool_forward(params, x, adj, mask)
    out = jax.block_until_ready(out)
    jax.block_until_ready(l_total)
    jax.block_until_ready(e_total)

    assert out.shape == (B, dim_target)
    assert bool(jnp.all(jnp.isfinite(out)))
    assert bool(jnp.isfinite(l_total)) and bool(jnp.isfinite(e_total))
    print("KERNEL_OK")
</pallas_src>

<mosaic_0001>
module attributes {stable_mosaic.version = 11 : i64} {
  func.func @_diffpool_forward_kernel(%arg0: i32, %arg1: memref<1x16x8xf32, #tpu.memory_space<vmem>>, %arg2: memref<1x16x16xf32, #tpu.memory_space<vmem>>, %arg3: memref<1x16x1xf32, #tpu.memory_space<vmem>>, %arg4: memref<880x32xf32, #tpu.memory_space<vmem>>, %arg5: memref<32x32xf32, #tpu.memory_space<vmem>>, %arg6: memref<1x1x128xf32, #tpu.memory_space<vmem>>) attributes {dimension_semantics = [#tpu.dimension_semantics<parallel>], iteration_bounds = array<i64: 2>, scalar_prefetch = 0 : i64, scratch_operands = 0 : i64, tpu.core_type = #tpu.core_type<tc>, window_params = [{transform_indices = @transform_0, window_bounds = array<i64: 1, 16, 8>}, {transform_indices = @transform_1, window_bounds = array<i64: 1, 16, 16>}, {transform_indices = @transform_2, window_bounds = array<i64: 1, 16, 1>}, {pipeline_mode = #tpu.pipeline_mode<synchronous>, transform_indices = @transform_3, window_bounds = array<i64: 880, 32>}, {pipeline_mode = #tpu.pipeline_mode<synchronous>, transform_indices = @transform_4, window_bounds = array<i64: 32, 32>}, {transform_indices = @transform_5, window_bounds = array<i64: 1, 1, 128>}]} {
    %c0 = arith.constant 0 : index
    %c0_0 = arith.constant 0 : index
    %c0_1 = arith.constant 0 : index
    %0 = vector.load %arg1[%c0, %c0_0, %c0_1] : memref<1x16x8xf32, #tpu.memory_space<vmem>>, vector<1x16x8xf32>
    %1 = vector.shape_cast %0 : vector<1x16x8xf32> to vector<16x8xf32>
    %c0_2 = arith.constant 0 : index
    %c0_3 = arith.constant 0 : index
    %c0_4 = arith.constant 0 : index
    %2 = vector.load %arg2[%c0_2, %c0_3, %c0_4] : memref<1x16x16xf32, #tpu.memory_space<vmem>>, vector<1x16x16xf32>
    %3 = vector.shape_cast %2 : vector<1x16x16xf32> to vector<16x16xf32>
    %c0_5 = arith.constant 0 : index
    %c0_6 = arith.constant 0 : index
    %c0_7 = arith.constant 0 : index
    %4 = vector.load %arg3[%c0_5, %c0_6, %c0_7] : memref<1x16x1xf32, #tpu.memory_space<vmem>>, vector<1x16x1xf32>
    %5 = vector.shape_cast %4 : vector<1x16x1xf32> to vector<16x1xf32>
    %cst = arith.constant 1.000000e+00 : f32
    %6 = vector.broadcast %cst : f32 to vector<16x1xf32>
    %cst_8 = arith.constant dense<0.000000e+00> : vector<16x1xf32>
    %7 = tpu.matmul %3, %6, %cst_8 {dimension_numbers = #tpu.dot_dimension_numbers<[1], [0], [0], [1], [0, 0, 1, 1], [], []>} : vector<16x16xf32>, vector<16x1xf32>, vector<16x1xf32> -> vector<16x1xf32>
    %cst_9 = arith.constant 1.000000e+00 : f32
    %8 = vector.broadcast %cst_9 : f32 to vector<16x1xf32>
    %9 = arith.maximumf %7, %8 : vector<16x1xf32>
    %cst_10 = arith.constant 1.000000e+00 : f32
    %10 = vector.broadcast %cst_10 : f32 to vector<16x1xf32>
    %11 = arith.divf %10, %9 : vector<16x1xf32>
    %cst_11 = arith.constant dense<0.000000e+00> : vector<16x8xf32>
    %12 = tpu.matmul %3, %1, %cst_11 {dimension_numbers = #tpu.dot_dimension_numbers<[1], [0], [0], [1], [0, 0, 1, 1], [], []>} : vector<16x16xf32>, vector<16x8xf32>, vector<16x8xf32> -> vector<16x8xf32>
    %13 = vector.broadcast %11 : vector<16x1xf32> to vector<16x8xf32>
    %14 = arith.mulf %12, %13 : vector<16x8xf32>
    %15 = tpu.concatenate %14, %1 in 1 : vector<16x8xf32>, vector<16x8xf32> -> vector<16x16xf32>
    %c0_12 = arith.constant 0 : index
    %c0_13 = arith.constant 0 : index
    %16 = vector.load %arg4[%c0_12, %c0_13] : memref<880x32xf32, #tpu.memory_space<vmem>>, vector<16x32xf32>
    %cst_14 = arith.constant dense<0.000000e+00> : vector<16x32xf32>
    %17 = tpu.matmul %15, %16, %cst_14 {dimension_numbers = #tpu.dot_dimension_numbers<[1], [0], [0], [1], [0, 0, 1, 1], [], []>} : vector<16x16xf32>, vector<16x32xf32>, vector<16x32xf32> -> vector<16x32xf32>
    %c0_15 = arith.constant 0 : index
    %c0_16 = arith.constant 0 : index
    %18 = vector.load %arg5[%c0_15, %c0_16] : memref<32x32xf32, #tpu.memory_space<vmem>>, vector<1x32xf32>
    %19 = vector.broadcast %18 : vector<1x32xf32> to vector<16x32xf32>
    %20 = arith.addf %17, %19 : vector<16x32xf32>
    %21 = vector.broadcast %5 : vector<16x1xf32> to vector<16x32xf32>
    %22 = arith.mulf %20, %21 : vector<16x32xf32>
    %cst_17 = arith.constant 0.000000e+00 : f32
    %23 = vector.broadcast %cst_17 : f32 to vector<16x32xf32>
    %24 = arith.maximumf %22, %23 : vector<16x32xf32>
    %c1 = arith.constant 1 : index
    %c0_18 = arith.constant 0 : index
    %25 = vector.load %arg5[%c1, %c0_18] : memref<32x32xf32, #tpu.memory_space<vmem>>, vector<1x32xf32>
    %26 = vector.broadcast %25 : vector<1x32xf32> to vector<16x32xf32>
    %27 = arith.mulf %24, %26 : vector<16x32xf32>
    %c2 = arith.constant 2 : index
    %c0_19 = arith.constant 0 : index
    %28 = vector.load %arg5[%c2, %c0_19] : memref<32x32xf32, #tpu.memory_space<vmem>>, vector<1x32xf32>
    %29 = vector.broadcast %28 : vector<1x32xf32> to vector<16x32xf32>
    %30 = arith.addf %27, %29 : vector<16x32xf32>
    %cst_20 = arith.constant dense<0.000000e+00> : vector<16x32xf32>
    %31 = tpu.matmul %3, %30, %cst_20 {dimension_numbers = #tpu.dot_dimension_numbers<[1], [0], [0], [1], [0, 0, 1, 1], [], []>} : vector<16x16xf32>, vector<16x32xf32>, vector<16x32xf32> -> vector<16x32xf32>
    %32 = vector.broadcast %11 : vector<16x1xf32> to vector<16x32xf32>
    %33 = arith.mulf %31, %32 : vector<16x32xf32>
    %34 = tpu.concatenate %33, %30 in 1 : vector<16x32xf32>, vector<16x32xf32> -> vector<16x64xf32>
    %c16 = arith.constant 16 : index
    %c0_21 = arith.constant 0 : index
    %35 = vector.load %arg4[%c16, %c0_21] : memref<880x32xf32, #tpu.memory_space<vmem>>, vector<64x32xf32>
    %cst_22 = arith.constant dense<0.000000e+00> : vector<16x32xf32>
    %36 = tpu.matmul %34, %35, %cst_22 {dimension_numbers = #tpu.dot_dimension_numbers<[1], [0], [0], [1], [0, 0, 1, 1], [], []>} : vector<16x64xf32>, vector<64x32xf32>, vector<16x32xf32> -> vector<16x32xf32>
    %c3 = arith.constant 3 : index
    %c0_23 = arith.constant 0 : index
    %37 = vector.load %arg5[%c3, %c0_23] : memref<32x32xf32, #tpu.memory_space<vmem>>, vector<1x32xf32>
    %38 = vector.broadcast %37 : vector<1x32xf32> to vector<16x32xf32>
    %39 = arith.addf %36, %38 : vector<16x32xf32>
    %40 = vector.broadcast %5 : vector<16x1xf32> to vector<16x32xf32>
    %41 = arith.mulf %39, %40 : vector<16x32xf32>
    %cst_24 = arith.constant 0.000000e+00 : f32
    %42 = vector.broadcast %cst_24 : f32 to vector<16x32xf32>
    %43 = arith.maximumf %41, %42 : vector<16x32xf32>
    %c4 = arith.constant 4 : index
    %c0_25 = arith.constant 0 : index
    %44 = vector.load %arg5[%c4, %c0_25] : memref<32x32xf32, #tpu.memory_space<vmem>>, vector<1x32xf32>
    %45 = vector.broadcast %44 : vector<1x32xf32> to vector<16x32xf32>
    %46 = arith.mulf %43, %45 : vector<16x32xf32>
    %c5 = arith.constant 5 : index
    %c0_26 = arith.constant 0 : index
    %47 = vector.load %arg5[%c5, %c0_26] : memref<32x32xf32, #tpu.memory_space<vmem>>, vector<1x32xf32>
    %48 = vector.broadcast %47 : vector<1x32xf32> to vector<16x32xf32>
    %49 = arith.addf %46, %48 : vector<16x32xf32>
    %cst_27 = arith.constant dense<0.000000e+00> : vector<16x32xf32>
    %50 = tpu.matmul %3, %49, %cst_27 {dimension_numbers = #tpu.dot_dimension_numbers<[1], [0], [0], [1], [0, 0, 1, 1], [], []>} : vector<16x16xf32>, vector<16x32xf32>, vector<16x32xf32> -> vector<16x32xf32>
    %51 = vector.broadcast %11 : vector<16x1xf32> to vector<16x32xf32>
    %52 = arith.mulf %50, %51 : vector<16x32xf32>
    %53 = tpu.concatenate %52, %49 in 1 : vector<16x32xf32>, vector<16x32xf32> -> vector<16x64xf32>
    %c80 = arith.constant 80 : index
    %c0_28 = arith.constant 0 : index
    %54 = vector.load %arg4[%c80, %c0_28] : memref<880x32xf32, #tpu.memory_space<vmem>>, vector<64x20xf32>
    %cst_29 = arith.constant dense<0.000000e+00> : vector<16x20xf32>
    %55 = tpu.matmul %53, %54, %cst_29 {dimension_numbers = #tpu.dot_dimension_numbers<[1], [0], [0], [1], [0, 0, 1, 1], [], []>} : vector<16x64xf32>, vector<64x20xf32>, vector<16x20xf32> -> vector<16x20xf32>
    %c6 = arith.constant 6 : index
    %c0_30 = arith.constant 0 : index
    %56 = vector.load %arg5[%c6, %c0_30] : memref<32x32xf32, #tpu.memory_space<vmem>>, vector<1x20xf32>
    %57 = vector.broadcast %56 : vector<1x20xf32> to vector<16x20xf32>
    %58 = arith.addf %55, %57 : vector<16x20xf32>
    %59 = vector.broadcast %5 : vector<16x1xf32> to vector<16x20xf32>
    %60 = arith.mulf %58, %59 : vector<16x20xf32>
    %c144 = arith.constant 144 : index
    %c0_31 = arith.constant 0 : index
    %61 = vector.load %arg4[%c144, %c0_31] : memref<880x32xf32, #tpu.memory_space<vmem>>, vector<32x4xf32>
    %cst_32 = arith.constant dense<0.000000e+00> : vector<16x4xf32>
    %62 = tpu.matmul %30, %61, %cst_32 {dimension_numbers = #tpu.dot_dimension_numbers<[1], [0], [0], [1], [0, 0, 1, 1], [], []>} : vector<16x32xf32>, vector<32x4xf32>, vector<16x4xf32> -> vector<16x4xf32>
    %c176 = arith.constant 176 : index
    %c0_33 = arith.constant 0 : index
    %63 = vector.load %arg4[%c176, %c0_33] : memref<880x32xf32, #tpu.memory_space<vmem>>, vector<32x4xf32>
    %cst_34 = arith.constant dense<0.000000e+00> : vector<16x4xf32>
    %64 = tpu.matmul %49, %63, %cst_34 {dimension_numbers = #tpu.dot_dimension_numbers<[1], [0], [0], [1], [0, 0, 1, 1], [], []>} : vector<16x32xf32>, vector<32x4xf32>, vector<16x4xf32> -> vector<16x4xf32>
    %65 = arith.addf %62, %64 : vector<16x4xf32>
    %c208 = arith.constant 208 : index
    %c0_35 = arith.constant 0 : index
    %66 = vector.load %arg4[%c208, %c0_35] : memref<880x32xf32, #tpu.memory_space<vmem>>, vector<20x4xf32>
    %cst_36 = arith.constant dense<0.000000e+00> : vector<16x4xf32>
    %67 = tpu.matmul %60, %66, %cst_36 {dimension_numbers = #tpu.dot_dimension_numbers<[1], [0], [0], [1], [0, 0, 1, 1], [], []>} : vector<16x20xf32>, vector<20x4xf32>, vector<16x4xf32> -> vector<16x4xf32>
    %68 = arith.addf %65, %67 : vector<16x4xf32>
    %c7 = arith.constant 7 : index
    %c0_37 = arith.constant 0 : index
    %69 = vector.load %arg5[%c7, %c0_37] : memref<32x32xf32, #tpu.memory_space<vmem>>, vector<1x4xf32>
    %70 = vector.broadcast %69 : vector<1x4xf32> to vector<16x4xf32>
    %71 = arith.addf %68, %70 : vector<16x4xf32>
    %cst_38 = arith.constant dense<0xFF800000> : vector<16xf32>
    %72 = vector.multi_reduction <maximumf>, %71, %cst_38 [1] : vector<16x4xf32> to vector<16xf32>
    %cst_39 = arith.constant 0xFF800000 : f32
    %73 = vector.broadcast %cst_39 : f32 to vector<16xf32>
    %74 = arith.maximumf %73, %72 : vector<16xf32>
    %75 = vector.shape_cast %74 : vector<16xf32> to vector<16x1xf32>
    %76 = vector.broadcast %75 : vector<16x1xf32> to vector<16x4xf32>
    %77 = arith.subf %71, %76 : vector<16x4xf32>
    %78 = math.exp %77 : vector<16x4xf32>
    %cst_40 = arith.constant dense<0.000000e+00> : vector<16xf32>
    %79 = vector.multi_reduction <add>, %78, %cst_40 [1] : vector<16x4xf32> to vector<16xf32>
    %80 = vector.shape_cast %79 : vector<16xf32> to vector<16x1xf32>
    %81 = vector.broadcast %80 : vector<16x1xf32> to vector<16x4xf32>
    %82 = arith.divf %78, %81 : vector<16x4xf32>
    %83 = vector.extract_strided_slice %30 {offsets = [0, 0], sizes = [16, 16], strides = [1, 1]} : vector<16x32xf32> to vector<16x16xf32>
    %84 = vector.extract_strided_slice %49 {offsets = [0, 0], sizes = [16, 16], strides = [1, 1]} : vector<16x32xf32> to vector<16x16xf32>
    %85 = vector.extract_strided_slice %60 {offsets = [0, 0], sizes = [16, 16], strides = [1, 1]} : vector<16x20xf32> to vector<16x16xf32>
    %86 = tpu.concatenate %83, %84, %85 in 1 : vector<16x16xf32>, vector<16x16xf32>, vector<16x16xf32> -> vector<16x48xf32>
    %87 = vector.broadcast %5 : vector<16x1xf32> to vector<16x4xf32>
    %88 = arith.mulf %82, %87 : vector<16x4xf32>
    %89 = vector.broadcast %5 : vector<16x1xf32> to vector<16x48xf32>
    %90 = arith.mulf %86, %89 : vector<16x48xf32>
    %cst_41 = arith.constant dense<0.000000e+00> : vector<4x48xf32>
    %91 = tpu.matmul %88, %90, %cst_41 {dimension_numbers = #tpu.dot_dimension_numbers<[0], [0], [1], [1], [0, 1, 1, 1], [], []>} : vector<16x4xf32>, vector<16x48xf32>, vector<4x48xf32> -> vector<4x48xf32>
    %cst_42 = arith.constant dense<0.000000e+00> : vector<16x4xf32>
    %92 = tpu.matmul %3, %88, %cst_42 {dimension_numbers = #tpu.dot_dimension_numbers<[1], [0], [0], [1], [0, 0, 1, 1], [], []>} : vector<16x16xf32>, vector<16x4xf32>, vector<16x4xf32> -> vector<16x4xf32>
    %cst_43 = arith.constant dense<0.000000e+00> : vector<4x4xf32>
    %93 = tpu.matmul %88, %92, %cst_43 {dimension_numbers = #tpu.dot_dimension_numbers<[0], [0], [1], [1], [0, 1, 1, 1], [], []>} : vector<16x4xf32>, vector<16x4xf32>, vector<4x4xf32> -> vector<4x4xf32>
    %cst_44 = arith.constant dense<0.000000e+00> : vector<16x16xf32>
    %94 = tpu.matmul %88, %88, %cst_44 {dimension_numbers = #tpu.dot_dimension_numbers<[1], [1], [0], [0], [0, 0, 1, 0], [], []>} : vector<16x4xf32>, vector<16x4xf32>, vector<16x16xf32> -> vector<16x16xf32>
    %95 = arith.subf %3, %94 : vector<16x16xf32>
    %96 = arith.mulf %95, %95 : vector<16x16xf32>
    %97 = vector.shape_cast %96 : vector<16x16xf32> to vector<1x16x16xf32>
    %cst_45 = arith.constant dense<0.000000e+00> : vector<1xf32>
    %98 = vector.multi_reduction <add>, %97, %cst_45 [1, 2] : vector<1x16x16xf32> to vector<1xf32>
    %99 = vector.shape_cast %98 : vector<1xf32> to vector<1x1x1xf32>
    %100 = vector.extract %99[0, 0, 0] : f32 from vector<1x1x1xf32>
    %cst_46 = arith.constant 0.000000e+00 : f32
    %101 = vector.broadcast %cst_46 : f32 to vector<16x4xf32>
    %102 = arith.subf %101, %88 : vector<16x4xf32>
    %cst_47 = arith.constant 1.000000e-15 : f32
    %103 = vector.broadcast %cst_47 : f32 to vector<16x4xf32>
    %104 = arith.addf %88, %103 : vector<16x4xf32>
    %105 = math.log %104 : vector<16x4xf32>
    %106 = arith.mulf %102, %105 : vector<16x4xf32>
    %107 = vector.shape_cast %106 : vector<16x4xf32> to vector<1x16x4xf32>
    %cst_48 = arith.constant dense<0.000000e+00> : vector<1xf32>
    %108 = vector.multi_reduction <add>, %107, %cst_48 [1, 2] : vector<1x16x4xf32> to vector<1xf32>
    %109 = vector.shape_cast %108 : vector<1xf32> to vector<1x1x1xf32>
    %110 = vector.extract %109[0, 0, 0] : f32 from vector<1x1x1xf32>
    %cst_49 = arith.constant dense<0xFF800000> : vector<48xf32>
    %111 = vector.multi_reduction <maximumf>, %91, %cst_49 [0] : vector<4x48xf32> to vector<48xf32>
    %112 = vector.shape_cast %111 : vector<48xf32> to vector<1x48xf32>
    %cst_50 = arith.constant 1.000000e+00 : f32
    %113 = vector.broadcast %cst_50 : f32 to vector<4x1xf32>
    %cst_51 = arith.constant dense<0.000000e+00> : vector<4x1xf32>
    %114 = tpu.matmul %93, %113, %cst_51 {dimension_numbers = #tpu.dot_dimension_numbers<[1], [0], [0], [1], [0, 0, 1, 1], [], []>} : vector<4x4xf32>, vector<4x1xf32>, vector<4x1xf32> -> vector<4x1xf32>
    %cst_52 = arith.constant 1.000000e+00 : f32
    %115 = vector.broadcast %cst_52 : f32 to vector<4x1xf32>
    %116 = arith.maximumf %114, %115 : vector<4x1xf32>
    %cst_53 = arith.constant 1.000000e+00 : f32
    %117 = vector.broadcast %cst_53 : f32 to vector<4x1xf32>
    %118 = arith.divf %117, %116 : vector<4x1xf32>
    %cst_54 = arith.constant dense<0.000000e+00> : vector<4x48xf32>
    %119 = tpu.matmul %93, %91, %cst_54 {dimension_numbers = #tpu.dot_dimension_numbers<[1], [0], [0], [1], [0, 0, 1, 1], [], []>} : vector<4x4xf32>, vector<4x48xf32>, vector<4x48xf32> -> vector<4x48xf32>
    %120 = vector.broadcast %118 : vector<4x1xf32> to vector<4x48xf32>
    %121 = arith.mulf %119, %120 : vector<4x48xf32>
    %122 = tpu.concatenate %121, %91 in 1 : vector<4x48xf32>, vector<4x48xf32> -> vector<4x96xf32>
    %c232 = arith.constant 232 : index
    %c0_55 = arith.constant 0 : index
    %123 = vector.load %arg4[%c232, %c0_55] : memref<880x32xf32, #tpu.memory_space<vmem>>, vector<96x32xf32>
    %cst_56 = arith.constant dense<0.000000e+00> : vector<4x32xf32>
    %124 = tpu.matmul %122, %123, %cst_56 {dimension_numbers = #tpu.dot_dimension_numbers<[1], [0], [0], [1], [0, 0, 1, 1], [], []>} : vector<4x96xf32>, vector<96x32xf32>, vector<4x32xf32> -> vector<4x32xf32>
    %c8 = arith.constant 8 : index
    %c0_57 = arith.constant 0 : index
    %125 = vector.load %arg5[%c8, %c0_57] : memref<32x32xf32, #tpu.memory_space<vmem>>, vector<1x32xf32>
    %126 = vector.broadcast %125 : vector<1x32xf32> to vector<4x32xf32>
    %127 = arith.addf %124, %126 : vector<4x32xf32>
    %cst_58 = arith.constant 0.000000e+00 : f32
    %128 = vector.broadcast %cst_58 : f32 to vector<4x32xf32>
    %129 = arith.maximumf %127, %128 : vector<4x32xf32>
    %c9 = arith.constant 9 : index
    %c0_59 = arith.constant 0 : index
    %130 = vector.load %arg5[%c9, %c0_59] : memref<32x32xf32, #tpu.memory_space<vmem>>, vector<1x32xf32>
    %131 = vector.broadcast %130 : vector<1x32xf32> to vector<4x32xf32>
    %132 = arith.mulf %129, %131 : vector<4x32xf32>
    %c10 = arith.constant 10 : index
    %c0_60 = arith.constant 0 : index
    %133 = vector.load %arg5[%c10, %c0_60] : memref<32x32xf32, #tpu.memory_space<vmem>>, vector<1x32xf32>
    %134 = vector.broadcast %133 : vector<1x32xf32> to vector<4x32xf32>
    %135 = arith.addf %132, %134 : vector<4x32xf32>
    %cst_61 = arith.constant dense<0.000000e+00> : vector<4x32xf32>
    %136 = tpu.matmul %93, %135, %cst_61 {dimension_numbers = #tpu.dot_dimension_numbers<[1], [0], [0], [1], [0, 0, 1, 1], [], []>} : vector<4x4xf32>, vector<4x32xf32>, vector<4x32xf32> -> vector<4x32xf32>
    %137 = vector.broadcast %118 : vector<4x1xf32> to vector<4x32xf32>
    %138 = arith.mulf %136, %137 : vector<4x32xf32>
    %139 = tpu.concatenate %138, %135 in 1 : vector<4x32xf32>, vector<4x32xf32> -> vector<4x64xf32>
    %c328 = arith.constant 328 : index
    %c0_62 = arith.constant 0 : index
    %140 = vector.load %arg4[%c328, %c0_62] : memref<880x32xf32, #tpu.memory_space<vmem>>, vector<64x32xf32>
    %cst_63 = arith.constant dense<0.000000e+00> : vector<4x32xf32>
    %141 = tpu.matmul %139, %140, %cst_63 {dimension_numbers = #tpu.dot_dimension_numbers<[1], [0], [0], [1], [0, 0, 1, 1], [], []>} : vector<4x64xf32>, vector<64x32xf32>, vector<4x32xf32> -> vector<4x32xf32>
    %c11 = arith.constant 11 : index
    %c0_64 = arith.constant 0 : index
    %142 = vector.load %arg5[%c11, %c0_64] : memref<32x32xf32, #tpu.memory_space<vmem>>, vector<1x32xf32>
    %143 = vector.broadcast %142 : vector<1x32xf32> to vector<4x32xf32>
    %144 = arith.addf %141, %143 : vector<4x32xf32>
    %cst_65 = arith.constant 0.000000e+00 : f32
    %145 = vector.broadcast %cst_65 : f32 to vector<4x32xf32>
    %146 = arith.maximumf %144, %145 : vector<4x32xf32>
    %c12 = arith.constant 12 : index
    %c0_66 = arith.constant 0 : index
    %147 = vector.load %arg5[%c12, %c0_66] : memref<32x32xf32, #tpu.memory_space<vmem>>, vector<1x32xf32>
    %148 = vector.broadcast %147 : vector<1x32xf32> to vector<4x32xf32>
    %149 = arith.mulf %146, %148 : vector<4x32xf32>
    %c13 = arith.constant 13 : index
    %c0_67 = arith.constant 0 : index
    %150 = vector.load %arg5[%c13, %c0_67] : memref<32x32xf32, #tpu.memory_space<vmem>>, vector<1x32xf32>
    %151 = vector.broadcast %150 : vector<1x32xf32> to vector<4x32xf32>
    %152 = arith.addf %149, %151 : vector<4x32xf32>
    %cst_68 = arith.constant dense<0.000000e+00> : vector<4x32xf32>
    %153 = tpu.matmul %93, %152, %cst_68 {dimension_numbers = #tpu.dot_dimension_numbers<[1], [0], [0], [1], [0, 0, 1, 1], [], []>} : vector<4x4xf32>, vector<4x32xf32>, vector<4x32xf32> -> vector<4x32xf32>
    %154 = vector.broadcast %118 : vector<4x1xf32> to vector<4x32xf32>
    %155 = arith.mulf %153, %154 : vector<4x32xf32>
    %156 = tpu.concatenate %155, %152 in 1 : vector<4x32xf32>, vector<4x32xf32> -> vector<4x64xf32>
    %c392 = arith.constant 392 : index
    %c0_69 = arith.constant 0 : index
    %157 = vector.load %arg4[%c392, %c0_69] : memref<880x32xf32, #tpu.memory_space<vmem>>, vector<64x17xf32>
    %cst_70 = arith.constant dense<0.000000e+00> : vector<4x17xf32>
    %158 = tpu.matmul %156, %157, %cst_70 {dimension_numbers = #tpu.dot_dimension_numbers<[1], [0], [0], [1], [0, 0, 1, 1], [], []>} : vector<4x64xf32>, vector<64x17xf32>, vector<4x17xf32> -> vector<4x17xf32>
    %c14 = arith.constant 14 : index
    %c0_71 = arith.constant 0 : index
    %159 = vector.load %arg5[%c14, %c0_71] : memref<32x32xf32, #tpu.memory_space<vmem>>, vector<1x17xf32>
    %160 = vector.broadcast %159 : vector<1x17xf32> to vector<4x17xf32>
    %161 = arith.addf %158, %160 : vector<4x17xf32>
    %c456 = arith.constant 456 : index
    %c0_72 = arith.constant 0 : index
    %162 = vector.load %arg4[%c456, %c0_72] : memref<880x32xf32, #tpu.memory_space<vmem>>, vector<32x1xf32>
    %cst_73 = arith.constant dense<0.000000e+00> : vector<4x1xf32>
    %163 = tpu.matmul %135, %162, %cst_73 {dimension_numbers = #tpu.dot_dimension_numbers<[1], [0], [0], [1], [0, 0, 1, 1], [], []>} : vector<4x32xf32>, vector<32x1xf32>, vector<4x1xf32> -> vector<4x1xf32>
    %c488 = arith.constant 488 : index
    %c0_74 = arith.constant 0 : index
    %164 = vector.load %arg4[%c488, %c0_74] : memref<880x32xf32, #tpu.memory_space<vmem>>, vector<32x1xf32>
    %cst_75 = arith.constant dense<0.000000e+00> : vector<4x1xf32>
    %165 = tpu.matmul %152, %164, %cst_75 {dimension_numbers = #tpu.dot_dimension_numbers<[1], [0], [0], [1], [0, 0, 1, 1], [], []>} : vector<4x32xf32>, vector<32x1xf32>, vector<4x1xf32> -> vector<4x1xf32>
    %166 = arith.addf %163, %165 : vector<4x1xf32>
    %c520 = arith.constant 520 : index
    %c0_76 = arith.constant 0 : index
    %167 = vector.load %arg4[%c520, %c0_76] : memref<880x32xf32, #tpu.memory_space<vmem>>, vector<17x1xf32>
    %cst_77 = arith.constant dense<0.000000e+00> : vector<4x1xf32>
    %168 = tpu.matmul %161, %167, %cst_77 {dimension_numbers = #tpu.dot_dimension_numbers<[1], [0], [0], [1], [0, 0, 1, 1], [], []>} : vector<4x17xf32>, vector<17x1xf32>, vector<4x1xf32> -> vector<4x1xf32>
    %169 = arith.addf %166, %168 : vector<4x1xf32>
    %c15 = arith.constant 15 : index
    %c0_78 = arith.constant 0 : index
    %170 = vector.load %arg5[%c15, %c0_78] : memref<32x32xf32, #tpu.memory_space<vmem>>, vector<1x1xf32>
    %171 = vector.broadcast %170 : vector<1x1xf32> to vector<4x1xf32>
    %172 = arith.addf %169, %171 : vector<4x1xf32>
    %cst_79 = arith.constant dense<0xFF800000> : vector<4xf32>
    %173 = vector.multi_reduction <maximumf>, %172, %cst_79 [1] : vector<4x1xf32> to vector<4xf32>
    %cst_80 = arith.constant 0xFF800000 : f32
    %174 = vector.broadcast %cst_80 : f32 to vector<4xf32>
    %175 = arith.maximumf %174, %173 : vector<4xf32>
    %176 = vector.shape_cast %175 : vector<4xf32> to vector<4x1xf32>
    %177 = arith.subf %172, %176 : vector<4x1xf32>
    %178 = math.exp %177 : vector<4x1xf32>
    %cst_81 = arith.constant dense<0.000000e+00> : vector<4xf32>
    %179 = vector.multi_reduction <add>, %178, %cst_81 [1] : vector<4x1xf32> to vector<4xf32>
    %180 = vector.shape_cast %179 : vector<4xf32> to vector<4x1xf32>
    %181 = arith.divf %178, %180 : vector<4x1xf32>
    %182 = vector.extract_strided_slice %135 {offsets = [0, 0], sizes = [4, 16], strides = [1, 1]} : vector<4x32xf32> to vector<4x16xf32>
    %183 = vector.extract_strided_slice %152 {offsets = [0, 0], sizes = [4, 16], strides = [1, 1]} : vector<4x32xf32> to vector<4x16xf32>
    %184 = vector.extract_strided_slice %161 {offsets = [0, 0], sizes = [4, 16], strides = [1, 1]} : vector<4x17xf32> to vector<4x16xf32>
    %185 = tpu.concatenate %182, %183, %184 in 1 : vector<4x16xf32>, vector<4x16xf32>, vector<4x16xf32> -> vector<4x48xf32>
    %cst_82 = arith.constant dense<0.000000e+00> : vector<1x48xf32>
    %186 = tpu.matmul %181, %185, %cst_82 {dimension_numbers = #tpu.dot_dimension_numbers<[0], [0], [1], [1], [0, 1, 1, 1], [], []>} : vector<4x1xf32>, vector<4x48xf32>, vector<1x48xf32> -> vector<1x48xf32>
    %cst_83 = arith.constant dense<0.000000e+00> : vector<4x1xf32>
    %187 = tpu.matmul %93, %181, %cst_83 {dimension_numbers = #tpu.dot_dimension_numbers<[1], [0], [0], [1], [0, 0, 1, 1], [], []>} : vector<4x4xf32>, vector<4x1xf32>, vector<4x1xf32> -> vector<4x1xf32>
    %cst_84 = arith.constant dense<0.000000e+00> : vector<1x1xf32>
    %188 = tpu.matmul %181, %187, %cst_84 {dimension_numbers = #tpu.dot_dimension_numbers<[0], [0], [1], [1], [0, 1, 1, 1], [], []>} : vector<4x1xf32>, vector<4x1xf32>, vector<1x1xf32> -> vector<1x1xf32>
    %cst_85 = arith.constant dense<0.000000e+00> : vector<4x4xf32>
    %189 = tpu.matmul %181, %181, %cst_85 {dimension_numbers = #tpu.dot_dimension_numbers<[1], [1], [0], [0], [0, 0, 1, 0], [], []>} : vector<4x1xf32>, vector<4x1xf32>, vector<4x4xf32> -> vector<4x4xf32>
    %190 = arith.subf %93, %189 : vector<4x4xf32>
    %191 = arith.mulf %190, %190 : vector<4x4xf32>
    %192 = vector.shape_cast %191 : vector<4x4xf32> to vector<1x4x4xf32>
    %cst_86 = arith.constant dense<0.000000e+00> : vector<1xf32>
    %193 = vector.multi_reduction <add>, %192, %cst_86 [1, 2] : vector<1x4x4xf32> to vector<1xf32>
    %194 = vector.shape_cast %193 : vector<1xf32> to vector<1x1x1xf32>
    %195 = vector.extract %194[0, 0, 0] : f32 from vector<1x1x1xf32>
    %cst_87 = arith.constant 0.000000e+00 : f32
    %196 = vector.broadcast %cst_87 : f32 to vector<4x1xf32>
    %197 = arith.subf %196, %181 : vector<4x1xf32>
    %cst_88 = arith.constant 1.000000e-15 : f32
    %198 = vector.broadcast %cst_88 : f32 to vector<4x1xf32>
    %199 = arith.addf %181, %198 : vector<4x1xf32>
    %200 = math.log %199 : vector<4x1xf32>
    %201 = arith.mulf %197, %200 : vector<4x1xf32>
    %202 = vector.shape_cast %201 : vector<4x1xf32> to vector<1x4x1xf32>
    %cst_89 = arith.constant dense<0.000000e+00> : vector<1xf32>
    %203 = vector.multi_reduction <add>, %202, %cst_89 [1, 2] : vector<1x4x1xf32> to vector<1xf32>
    %204 = vector.shape_cast %203 : vector<1xf32> to vector<1x1x1xf32>
    %205 = vector.extract %204[0, 0, 0] : f32 from vector<1x1x1xf32>
    %cst_90 = arith.constant dense<0xFF800000> : vector<48xf32>
    %206 = vector.multi_reduction <maximumf>, %186, %cst_90 [0] : vector<1x48xf32> to vector<48xf32>
    %207 = vector.shape_cast %206 : vector<48xf32> to vector<1x48xf32>
    %cst_91 = arith.constant 1.000000e+00 : f32
    %208 = vector.broadcast %cst_91 : f32 to vector<1x1xf32>
    %cst_92 = arith.constant dense<0.000000e+00> : vector<1x1xf32>
    %209 = tpu.matmul %188, %208, %cst_92 {dimension_numbers = #tpu.dot_dimension_numbers<[1], [0], [0], [1], [0, 0, 1, 1], [], []>} : vector<1x1xf32>, vector<1x1xf32>, vector<1x1xf32> -> vector<1x1xf32>
    %cst_93 = arith.constant 1.000000e+00 : f32
    %210 = vector.broadcast %cst_93 : f32 to vector<1x1xf32>
    %211 = arith.maximumf %209, %210 : vector<1x1xf32>
    %cst_94 = arith.constant 1.000000e+00 : f32
    %212 = vector.broadcast %cst_94 : f32 to vector<1x1xf32>
    %213 = arith.divf %212, %211 : vector<1x1xf32>
    %cst_95 = arith.constant dense<0.000000e+00> : vector<1x48xf32>
    %214 = tpu.matmul %188, %186, %cst_95 {dimension_numbers = #tpu.dot_dimension_numbers<[1], [0], [0], [1], [0, 0, 1, 1], [], []>} : vector<1x1xf32>, vector<1x48xf32>, vector<1x48xf32> -> vector<1x48xf32>
    %215 = vector.broadcast %213 : vector<1x1xf32> to vector<1x48xf32>
    %216 = arith.mulf %214, %215 : vector<1x48xf32>
    %217 = tpu.concatenate %216, %186 in 1 : vector<1x48xf32>, vector<1x48xf32> -> vector<1x96xf32>
    %c544 = arith.constant 544 : index
    %c0_96 = arith.constant 0 : index
    %218 = vector.load %arg4[%c544, %c0_96] : memref<880x32xf32, #tpu.memory_space<vmem>>, vector<96x16xf32>
    %cst_97 = arith.constant dense<0.000000e+00> : vector<1x16xf32>
    %219 = tpu.matmul %217, %218, %cst_97 {dimension_numbers = #tpu.dot_dimension_numbers<[1], [0], [0], [1], [0, 0, 1, 1], [], []>} : vector<1x96xf32>, vector<96x16xf32>, vector<1x16xf32> -> vector<1x16xf32>
    %c16_98 = arith.constant 16 : index
    %c0_99 = arith.constant 0 : index
    %220 = vector.load %arg5[%c16_98, %c0_99] : memref<32x32xf32, #tpu.memory_space<vmem>>, vector<1x16xf32>
    %221 = arith.addf %219, %220 : vector<1x16xf32>
    %cst_100 = arith.constant 0.000000e+00 : f32
    %222 = vector.broadcast %cst_100 : f32 to vector<1x16xf32>
    %223 = arith.maximumf %221, %222 : vector<1x16xf32>
    %c17 = arith.constant 17 : index
    %c0_101 = arith.constant 0 : index
    %224 = vector.load %arg5[%c17, %c0_101] : memref<32x32xf32, #tpu.memory_space<vmem>>, vector<1x16xf32>
    %225 = arith.mulf %223, %224 : vector<1x16xf32>
    %c18 = arith.constant 18 : index
    %c0_102 = arith.constant 0 : index
    %226 = vector.load %arg5[%c18, %c0_102] : memref<32x32xf32, #tpu.memory_space<vmem>>, vector<1x16xf32>
    %227 = arith.addf %225, %226 : vector<1x16xf32>
    %cst_103 = arith.constant dense<0.000000e+00> : vector<1x16xf32>
    %228 = tpu.matmul %188, %227, %cst_103 {dimension_numbers = #tpu.dot_dimension_numbers<[1], [0], [0], [1], [0, 0, 1, 1], [], []>} : vector<1x1xf32>, vector<1x16xf32>, vector<1x16xf32> -> vector<1x16xf32>
    %229 = vector.broadcast %213 : vector<1x1xf32> to vector<1x16xf32>
    %230 = arith.mulf %228, %229 : vector<1x16xf32>
    %231 = tpu.concatenate %230, %227 in 1 : vector<1x16xf32>, vector<1x16xf32> -> vector<1x32xf32>
    %c640 = arith.constant 640 : index
    %c0_104 = arith.constant 0 : index
    %232 = vector.load %arg4[%c640, %c0_104] : memref<880x32xf32, #tpu.memory_space<vmem>>, vector<32x16xf32>
    %cst_105 = arith.constant dense<0.000000e+00> : vector<1x16xf32>
    %233 = tpu.matmul %231, %232, %cst_105 {dimension_numbers = #tpu.dot_dimension_numbers<[1], [0], [0], [1], [0, 0, 1, 1], [], []>} : vector<1x32xf32>, vector<32x16xf32>, vector<1x16xf32> -> vector<1x16xf32>
    %c19 = arith.constant 19 : index
    %c0_106 = arith.constant 0 : index
    %234 = vector.load %arg5[%c19, %c0_106] : memref<32x32xf32, #tpu.memory_space<vmem>>, vector<1x16xf32>
    %235 = arith.addf %233, %234 : vector<1x16xf32>
    %cst_107 = arith.constant 0.000000e+00 : f32
    %236 = vector.broadcast %cst_107 : f32 to vector<1x16xf32>
    %237 = arith.maximumf %235, %236 : vector<1x16xf32>
    %c20 = arith.constant 20 : index
    %c0_108 = arith.constant 0 : index
    %238 = vector.load %arg5[%c20, %c0_108] : memref<32x32xf32, #tpu.memory_space<vmem>>, vector<1x16xf32>
    %239 = arith.mulf %237, %238 : vector<1x16xf32>
    %c21 = arith.constant 21 : index
    %c0_109 = arith.constant 0 : index
    %240 = vector.load %arg5[%c21, %c0_109] : memref<32x32xf32, #tpu.memory_space<vmem>>, vector<1x16xf32>
    %241 = arith.addf %239, %240 : vector<1x16xf32>
    %cst_110 = arith.constant dense<0.000000e+00> : vector<1x16xf32>
    %242 = tpu.matmul %188, %241, %cst_110 {dimension_numbers = #tpu.dot_dimension_numbers<[1], [0], [0], [1], [0, 0, 1, 1], [], []>} : vector<1x1xf32>, vector<1x16xf32>, vector<1x16xf32> -> vector<1x16xf32>
    %243 = vector.broadcast %213 : vector<1x1xf32> to vector<1x16xf32>
    %244 = arith.mulf %242, %243 : vector<1x16xf32>
    %245 = tpu.concatenate %244, %241 in 1 : vector<1x16xf32>, vector<1x16xf32> -> vector<1x32xf32>
    %c672 = arith.constant 672 : index
    %c0_111 = arith.constant 0 : index
    %246 = vector.load %arg4[%c672, %c0_111] : memref<880x32xf32, #tpu.memory_space<vmem>>, vector<32x16xf32>
    %cst_112 = arith.constant dense<0.000000e+00> : vector<1x16xf32>
    %247 = tpu.matmul %245, %246, %cst_112 {dimension_numbers = #tpu.dot_dimension_numbers<[1], [0], [0], [1], [0, 0, 1, 1], [], []>} : vector<1x32xf32>, vector<32x16xf32>, vector<1x16xf32> -> vector<1x16xf32>
    %c22 = arith.constant 22 : index
    %c0_113 = arith.constant 0 : index
    %248 = vector.load %arg5[%c22, %c0_113] : memref<32x32xf32, #tpu.memory_space<vmem>>, vector<1x16xf32>
    %249 = arith.addf %247, %248 : vector<1x16xf32>
    %cst_114 = arith.constant dense<0xFF800000> : vector<16xf32>
    %250 = vector.multi_reduction <maximumf>, %227, %cst_114 [0] : vector<1x16xf32> to vector<16xf32>
    %251 = vector.shape_cast %250 : vector<16xf32> to vector<1x16xf32>
    %cst_115 = arith.constant dense<0xFF800000> : vector<16xf32>
    %252 = vector.multi_reduction <maximumf>, %241, %cst_115 [0] : vector<1x16xf32> to vector<16xf32>
    %253 = vector.shape_cast %252 : vector<16xf32> to vector<1x16xf32>
    %cst_116 = arith.constant dense<0xFF800000> : vector<16xf32>
    %254 = vector.multi_reduction <maximumf>, %249, %cst_116 [0] : vector<1x16xf32> to vector<16xf32>
    %255 = vector.shape_cast %254 : vector<16xf32> to vector<1x16xf32>
    %c23 = arith.constant 23 : index
    %c0_117 = arith.constant 0 : index
    %256 = vector.load %arg5[%c23, %c0_117] : memref<32x32xf32, #tpu.memory_space<vmem>>, vector<1x32xf32>
    %c704 = arith.constant 704 : index
    %c0_118 = arith.constant 0 : index
    %257 = vector.load %arg4[%c704, %c0_118] : memref<880x32xf32, #tpu.memory_space<vmem>>, vector<48x32xf32>
    %cst_119 = arith.constant dense<0.000000e+00> : vector<1x32xf32>
    %258 = tpu.matmul %112, %257, %cst_119 {dimension_numbers = #tpu.dot_dimension_numbers<[1], [0], [0], [1], [0, 0, 1, 1], [], []>} : vector<1x48xf32>, vector<48x32xf32>, vector<1x32xf32> -> vector<1x32xf32>
    %259 = arith.addf %256, %258 : vector<1x32xf32>
    %c752 = arith.constant 752 : index
    %c0_120 = arith.constant 0 : index
    %260 = vector.load %arg4[%c752, %c0_120] : memref<880x32xf32, #tpu.memory_space<vmem>>, vector<48x32xf32>
    %cst_121 = arith.constant dense<0.000000e+00> : vector<1x32xf32>
    %261 = tpu.matmul %207, %260, %cst_121 {dimension_numbers = #tpu.dot_dimension_numbers<[1], [0], [0], [1], [0, 0, 1, 1], [], []>} : vector<1x48xf32>, vector<48x32xf32>, vector<1x32xf32> -> vector<1x32xf32>
    %262 = arith.addf %259, %261 : vector<1x32xf32>
    %c800 = arith.constant 800 : index
    %c0_122 = arith.constant 0 : index
    %263 = vector.load %arg4[%c800, %c0_122] : memref<880x32xf32, #tpu.memory_space<vmem>>, vector<16x32xf32>
    %cst_123 = arith.constant dense<0.000000e+00> : vector<1x32xf32>
    %264 = tpu.matmul %251, %263, %cst_123 {dimension_numbers = #tpu.dot_dimension_numbers<[1], [0], [0], [1], [0, 0, 1, 1], [], []>} : vector<1x16xf32>, vector<16x32xf32>, vector<1x32xf32> -> vector<1x32xf32>
    %265 = arith.addf %262, %264 : vector<1x32xf32>
    %c816 = arith.constant 816 : index
    %c0_124 = arith.constant 0 : index
    %266 = vector.load %arg4[%c816, %c0_124] : memref<880x32xf32, #tpu.memory_space<vmem>>, vector<16x32xf32>
    %cst_125 = arith.constant dense<0.000000e+00> : vector<1x32xf32>
    %267 = tpu.matmul %253, %266, %cst_125 {dimension_numbers = #tpu.dot_dimension_numbers<[1], [0], [0], [1], [0, 0, 1, 1], [], []>} : vector<1x16xf32>, vector<16x32xf32>, vector<1x32xf32> -> vector<1x32xf32>
    %268 = arith.addf %265, %267 : vector<1x32xf32>
    %c832 = arith.constant 832 : index
    %c0_126 = arith.constant 0 : index
    %269 = vector.load %arg4[%c832, %c0_126] : memref<880x32xf32, #tpu.memory_space<vmem>>, vector<16x32xf32>
    %cst_127 = arith.constant dense<0.000000e+00> : vector<1x32xf32>
    %270 = tpu.matmul %255, %269, %cst_127 {dimension_numbers = #tpu.dot_dimension_numbers<[1], [0], [0], [1], [0, 0, 1, 1], [], []>} : vector<1x16xf32>, vector<16x32xf32>, vector<1x32xf32> -> vector<1x32xf32>
    %271 = arith.addf %268, %270 : vector<1x32xf32>
    %cst_128 = arith.constant 0.000000e+00 : f32
    %272 = vector.broadcast %cst_128 : f32 to vector<1x32xf32>
    %273 = arith.maximumf %271, %272 : vector<1x32xf32>
    %c848 = arith.constant 848 : index
    %c0_129 = arith.constant 0 : index
    %274 = vector.load %arg4[%c848, %c0_129] : memref<880x32xf32, #tpu.memory_space<vmem>>, vector<32x3xf32>
    %cst_130 = arith.constant dense<0.000000e+00> : vector<1x3xf32>
    %275 = tpu.matmul %273, %274, %cst_130 {dimension_numbers = #tpu.dot_dimension_numbers<[1], [0], [0], [1], [0, 0, 1, 1], [], []>} : vector<1x32xf32>, vector<32x3xf32>, vector<1x3xf32> -> vector<1x3xf32>
    %c24 = arith.constant 24 : index
    %c0_131 = arith.constant 0 : index
    %276 = vector.load %arg5[%c24, %c0_131] : memref<32x32xf32, #tpu.memory_space<vmem>>, vector<1x3xf32>
    %277 = arith.addf %275, %276 : vector<1x3xf32>
    %cst_132 = arith.constant 0.000000e+00 : f32
    %278 = vector.broadcast %cst_132 : f32 to vector<1x3xf32>
    %279 = arith.subf %278, %277 : vector<1x3xf32>
    %280 = math.exp %279 : vector<1x3xf32>
    %cst_133 = arith.constant 1.000000e+00 : f32
    %281 = vector.broadcast %cst_133 : f32 to vector<1x3xf32>
    %282 = arith.addf %281, %280 : vector<1x3xf32>
    %cst_134 = arith.constant 1.000000e+00 : f32
    %283 = vector.broadcast %cst_134 : f32 to vector<1x3xf32>
    %284 = arith.divf %283, %282 : vector<1x3xf32>
    %285 = tpu.iota {dimensions = array<i32: 1>} : vector<1x128xi32>
    %cst_135 = arith.constant 0.000000e+00 : f32
    %286 = vector.broadcast %cst_135 : f32 to vector<1x128xf32>
    %c8_i32 = arith.constant 8 : i32
    %287 = vector.broadcast %c8_i32 : i32 to vector<1x128xi32>
    %288 = arith.cmpi eq, %285, %287 : vector<1x128xi32>
    %289 = vector.broadcast %100 : f32 to vector<1x128xf32>
    %290 = arith.select %288, %289, %286 : vector<1x128xi1>, vector<1x128xf32>
    %c9_i32 = arith.constant 9 : i32
    %291 = vector.broadcast %c9_i32 : i32 to vector<1x128xi32>
    %292 = arith.cmpi eq, %285, %291 : vector<1x128xi32>
    %293 = vector.broadcast %110 : f32 to vector<1x128xf32>
    %294 = arith.select %292, %293, %290 : vector<1x128xi1>, vector<1x128xf32>
    %c10_i32 = arith.constant 10 : i32
    %295 = vector.broadcast %c10_i32 : i32 to vector<1x128xi32>
    %296 = arith.cmpi eq, %285, %295 : vector<1x128xi32>
    %297 = vector.broadcast %195 : f32 to vector<1x128xf32>
    %298 = arith.select %296, %297, %294 : vector<1x128xi1>, vector<1x128xf32>
    %c11_i32 = arith.constant 11 : i32
    %299 = vector.broadcast %c11_i32 : i32 to vector<1x128xi32>
    %300 = arith.cmpi eq, %285, %299 : vector<1x128xi32>
    %301 = vector.broadcast %205 : f32 to vector<1x128xf32>
    %302 = arith.select %300, %301, %298 : vector<1x128xi1>, vector<1x128xf32>
    %c0_136 = arith.constant 0 : index
    %c0_137 = arith.constant 0 : index
    %c0_138 = arith.constant 0 : index
    %303 = vector.load %arg6[%c0_136, %c0_137, %c0_138] : memref<1x1x128xf32, #tpu.memory_space<vmem>>, vector<1x1x128xf32>
    %304 = vector.shape_cast %303 : vector<1x1x128xf32> to vector<1x128xf32>
    %305 = vector.shape_cast %302 : vector<1x128xf32> to vector<1x1x128xf32>
    tpu.vector_store %arg6[%c0_136, %c0_137, %c0_138], %305 {strides = array<i32>} : memref<1x1x128xf32, #tpu.memory_space<vmem>>, vector<1x1x128xf32>,
    %c0_139 = arith.constant 0 : index
    %c0_140 = arith.constant 0 : index
    %c0_141 = arith.constant 0 : index
    %306 = vector.load %arg6[%c0_139, %c0_140, %c0_141] : memref<1x1x128xf32, #tpu.memory_space<vmem>>, vector<1x1x3xf32>
    %307 = vector.shape_cast %306 : vector<1x1x3xf32> to vector<1x3xf32>
    %308 = vector.shape_cast %284 : vector<1x3xf32> to vector<1x1x3xf32>
    tpu.vector_store %arg6[%c0_139, %c0_140, %c0_141], %308 {strides = array<i32>} : memref<1x1x128xf32, #tpu.memory_space<vmem>>, vector<1x1x3xf32>,
    return
  }
  func.func @transform_0(%arg0: i32) -> (i32, i32, i32) {
    %c0_i32 = arith.constant 0 : i32
    %c0_i32_0 = arith.constant 0 : i32
    %c0_i32_1 = arith.constant 0 : i32
    return %arg0, %c0_i32, %c0_i32_0 : i32, i32, i32
  }
  func.func @transform_1(%arg0: i32) -> (i32, i32, i32) {
    %c0_i32 = arith.constant 0 : i32
    %c0_i32_0 = arith.constant 0 : i32
    %c0_i32_1 = arith.constant 0 : i32
    return %arg0, %c0_i32, %c0_i32_0 : i32, i32, i32
  }
  func.func @transform_2(%arg0: i32) -> (i32, i32, i32) {
    %c0_i32 = arith.constant 0 : i32
    %c0_i32_0 = arith.constant 0 : i32
    %c0_i32_1 = arith.constant 0 : i32
    return %arg0, %c0_i32, %c0_i32_0 : i32, i32, i32
  }
  func.func @transform_3(%arg0: i32) -> (i32, i32) {
    %c0_i32 = arith.constant 0 : i32
    %c0_i32_0 = arith.constant 0 : i32
    %c0_i32_1 = arith.constant 0 : i32
    return %c0_i32, %c0_i32_0 : i32, i32
  }
  func.func @transform_4(%arg0: i32) -> (i32, i32) {
    %c0_i32 = arith.constant 0 : i32
    %c0_i32_0 = arith.constant 0 : i32
    %c0_i32_1 = arith.constant 0 : i32
    return %c0_i32, %c0_i32_0 : i32, i32
  }
  func.func @transform_5(%arg0: i32) -> (i32, i32, i32) {
    %c0_i32 = arith.constant 0 : i32
    %c0_i32_0 = arith.constant 0 : i32
    %c0_i32_1 = arith.constant 0 : i32
    return %arg0, %c0_i32, %c0_i32_0 : i32, i32, i32
  }
}

</mosaic_0001>

<llo_original>
// kernel: tpu_custom_call.1
$region0: #{tpu_custom_call.1}
  #allocation0 [shape = 'u32[]', space=smem, size = 0x4, offset = 0x4, fixed_abs, tag = 'smem constant byte address 0x4 - core index']
  #allocation1 [shape = 'u32[144,128]{1,0:T(1,128)}', space=vmem, size = 0x12000, scoped, tag = 'internal scratch']
  %s0 = inlined_call_operand.vmem [shape: f32[2,16,8], index: 0, kind: input, shape index: {}]
  %s1 = inlined_call_operand.vmem [shape: f32[2,16,16], index: 1, kind: input, shape index: {}]
  %s2 = inlined_call_operand.vmem [shape: f32[2,16,1], index: 2, kind: input, shape index: {}]
  %s3 = inlined_call_operand.vmem [shape: f32[880,32], index: 3, kind: input, shape index: {}]
  %s4 = inlined_call_operand.vmem [shape: f32[32,32], index: 4, kind: input, shape index: {}]
  %s5 = inlined_call_operand.hbm [shape: f32[2,1,128], index: 5, kind: output, shape index: {}]
  %s6 = sld [smem:[#allocation0]]
  $region53: #{tpu_custom_call.1} parent=0
    _
  %s8 = ssub.s32 1, %s6
  %s9 = scalar_select 0, %s8, %s6
  $region1: #{tpu_custom_call.1} parent=0
    #allocation2 [shape = 'u8[1024]{0}', space=vmem, size = 0x400, scoped, tag = 'output window, operand 0']
    #allocation3 [shape = 's32[2]{0}', space=sflag, size = 0x8, scoped, tag = 'scoped memory for tpu_custom_call.1']
    %10 = vsyncpa [#allocation3], 0
    %s11 = scalar_lea.sflag [#allocation3], 1
    %12 = vsyncpa %s11, 0
    loop: start=0, step=1, limit=4
    $region2: #{tpu_custom_call.1} parent=1 // loop_pre_header
      _
    $region3: #{tpu_custom_call.1} parent=1 // loop_header
      %s14 = sphi 0, %s18
      %p15 = scmp.ge.s32.totalorder %s14, 4
      %s24 = sphi 0, %s26
      %s27 = sphi 0, %s24
      %s28 = sphi 0, %s27
      %s44 = sphi 0, %s28
      %s50 = sphi 0, %s52
      %s53 = sphi 0, %s50
      %s54 = sphi 0, %s53
      %s70 = sphi 0, %s54
      %s76 = sphi 0, %s78
      %s79 = sphi 0, %s76
      %s80 = sphi 0, %s79
      %s96 = sphi 0, %s80
      %s100 = sphi 0, %s100
      %s102 = sphi 0, %s100
      %s103 = sphi 0, %s102
      %s117 = sphi 0, %s103
      %s121 = sphi 0, %s121
      %s123 = sphi 0, %s121
      %s124 = sphi 0, %s123
      %s138 = sphi 0, %s124
      %s144 = sphi 0, %s146
      %s147 = sphi 0, %s144
      %s148 = sphi 0, %s147
      %s164 = sphi 0, %s148
    $region4: #{tpu_custom_call.1} parent=1 // loop_header_branch
      %17 = sbr.rel (%p15) target = $region8
    $region5: #{tpu_custom_call.1} parent=1 // loop_body
      %s19 = ssub.s32 %s14, 1
      %s20 = ssub.s32 %s14, 2
      %s21 = sadd.s32 %s14, 1
      %s22 = ssub.s32 %s14, %s21
      %p23 = scmp.eq.s32.totalorder %s22, 0
      %s25 = sadd.s32 %s24, 1
      %s26 = scalar_select %p23, %s24, %s25
      %p29 = pneg %p23
      %p30 = scmp.eq.s32.totalorder %s14, 1
      %p31 = por %p29, %p30
      %p32 = scmp.ne.s32.totalorder %s24, %s27
      %p33 = scmp.eq.s32.totalorder %s14, 0
      %p34 = por %p32, %p33
      %p35 = scmp.ne.s32.totalorder %s24, %s27
      %p36 = scmp.eq.s32.totalorder %s19, 1
      %p37 = por %p35, %p36
      %p38 = scmp.ne.s32.totalorder %s27, %s28
      %p39 = scmp.eq.s32.totalorder %s19, 0
      %p40 = por %p38, %p39
      %p41 = scmp.ne.s32.totalorder %s27, %s28
      %p42 = scmp.eq.s32.totalorder %s20, 1
      %p43 = por %p41, %p42
      %p45 = scmp.ne.s32.totalorder %s28, %s44
      %p46 = scmp.eq.s32.totalorder %s20, 0
      %p47 = por %p45, %p46
      %s48 = ssub.s32 %s14, %s21
      %p49 = scmp.eq.s32.totalorder %s48, 0
      %s51 = sadd.s32 %s50, 1
      %s52 = scalar_select %p49, %s50, %s51
      %p55 = pneg %p49
      %p56 = scmp.eq.s32.totalorder %s14, 1
      %p57 = por %p55, %p56
      %p58 = scmp.ne.s32.totalorder %s50, %s53
      %p59 = scmp.eq.s32.totalorder %s14, 0
      %p60 = por %p58, %p59
      %p61 = scmp.ne.s32.totalorder %s50, %s53
      %p62 = scmp.eq.s32.totalorder %s19, 1
      %p63 = por %p61, %p62
      %p64 = scmp.ne.s32.totalorder %s53, %s54
      %p65 = scmp.eq.s32.totalorder %s19, 0
      %p66 = por %p64, %p65
      %p67 = scmp.ne.s32.totalorder %s53, %s54
      %p68 = scmp.eq.s32.totalorder %s20, 1
      %p69 = por %p67, %p68
      %p71 = scmp.ne.s32.totalorder %s54, %s70
      %p72 = scmp.eq.s32.totalorder %s20, 0
      %p73 = por %p71, %p72
      %s74 = ssub.s32 %s14, %s21
      %p75 = scmp.eq.s32.totalorder %s74, 0
      %s77 = sadd.s32 %s76, 1
      %s78 = scalar_select %p75, %s76, %s77
      %p81 = pneg %p75
      %p82 = scmp.eq.s32.totalorder %s14, 1
      %p83 = por %p81, %p82
      %p84 = scmp.ne.s32.totalorder %s76, %s79
      %p85 = scmp.eq.s32.totalorder %s14, 0
      %p86 = por %p84, %p85
      %p87 = scmp.ne.s32.totalorder %s76, %s79
      %p88 = scmp.eq.s32.totalorder %s19, 1
      %p89 = por %p87, %p88
      %p90 = scmp.ne.s32.totalorder %s79, %s80
      %p91 = scmp.eq.s32.totalorder %s19, 0
      %p92 = por %p90, %p91
      %p93 = scmp.ne.s32.totalorder %s79, %s80
      %p94 = scmp.eq.s32.totalorder %s20, 1
      %p95 = por %p93, %p94
      %p97 = scmp.ne.s32.totalorder %s80, %s96
      %p98 = scmp.eq.s32.totalorder %s20, 0
      %p99 = por %p97, %p98
      %s101 = sadd.s32 %s100, 1
      %p104 = scmp.eq.s32.totalorder %s14, 1
      %p105 = scmp.ne.s32.totalorder %s100, %s102
      %p106 = scmp.eq.s32.totalorder %s14, 0
      %p107 = por %p105, %p106
      %p108 = scmp.ne.s32.totalorder %s100, %s102
      %p109 = scmp.eq.s32.totalorder %s19, 1
      %p110 = por %p108, %p109
      %p111 = scmp.ne.s32.totalorder %s102, %s103
      %p112 = scmp.eq.s32.totalorder %s19, 0
      %p113 = por %p111, %p112
      %p114 = scmp.ne.s32.totalorder %s102, %s103
      %p115 = scmp.eq.s32.totalorder %s20, 1
      %p116 = por %p114, %p115
      %p118 = scmp.ne.s32.totalorder %s103, %s117
      %p119 = scmp.eq.s32.totalorder %s20, 0
      %p120 = por %p118, %p119
      %s122 = sadd.s32 %s121, 1
      %p125 = scmp.eq.s32.totalorder %s14, 1
      %p126 = scmp.ne.s32.totalorder %s121, %s123
      %p127 = scmp.eq.s32.totalorder %s14, 0
      %p128 = por %p126, %p127
      %p129 = scmp.ne.s32.totalorder %s121, %s123
      %p130 = scmp.eq.s32.totalorder %s19, 1
      %p131 = por %p129, %p130
      %p132 = scmp.ne.s32.totalorder %s123, %s124
      %p133 = scmp.eq.s32.totalorder %s19, 0
      %p134 = por %p132, %p133
      %p135 = scmp.ne.s32.totalorder %s123, %s124
      %p136 = scmp.eq.s32.totalorder %s20, 1
      %p137 = por %p135, %p136
      %p139 = scmp.ne.s32.totalorder %s124, %s138
      %p140 = scmp.eq.s32.totalorder %s20, 0
      %p141 = por %p139, %p140
      %s142 = ssub.s32 %s14, %s21
      %p143 = scmp.eq.s32.totalorder %s142, 0
      %s145 = sadd.s32 %s144, 1
      %s146 = scalar_select %p143, %s144, %s145
      %p149 = pneg %p143
      %p150 = scmp.eq.s32.totalorder %s14, 1
      %p151 = por %p149, %p150
      %p152 = scmp.ne.s32.totalorder %s144, %s147
      %p153 = scmp.eq.s32.totalorder %s14, 0
      %p154 = por %p152, %p153
      %p155 = scmp.ne.s32.totalorder %s144, %s147
      %p156 = scmp.eq.s32.totalorder %s19, 1
      %p157 = por %p155, %p156
      %p158 = scmp.ne.s32.totalorder %s147, %s148
      %p159 = scmp.eq.s32.totalorder %s19, 0
      %p160 = por %p158, %p159
      %p161 = scmp.ne.s32.totalorder %s147, %s148
      %p162 = scmp.eq.s32.totalorder %s20, 1
      %p163 = por %p161, %p162
      %p165 = scmp.ne.s32.totalorder %s148, %s164
      %p166 = scmp.eq.s32.totalorder %s20, 0
      %p167 = por %p165, %p166
      %p168 = scmp.le.s32.totalorder 1, %s14
      %p169 = scmp.lt.s32.totalorder %s14, 3
      %p170 = pnand %p168, %p169
      %p171 = pneg %p170
      // Predicated region
      $region9: #{tpu_custom_call.1} parent=5 // pred_check
        _
      $region10: #{tpu_custom_call.1} parent=5 // pred_check_branch
        %173 = sbr.rel (%p170) target = $region12
      $region11: #{tpu_custom_call.1} parent=5 // pred_region
        %s174 = ssub.s32 %s14, 1
        // Predicated region
        $region13: #{tpu_custom_call.1} parent=11 // pred_check
          %p175 = pneg %p113
        $region14: #{tpu_custom_call.1} parent=11 // pred_check_branch
          %177 = sbr.rel (%p175) target = $region16
        $region15: #{tpu_custom_call.1} parent=11 // pred_region
          _
        $region16: #{tpu_custom_call.1} parent=11 // pred_fallthru
          _
        // Predicated region
        $region17: #{tpu_custom_call.1} parent=11 // pred_check
          %p178 = pneg %p134
        $region18: #{tpu_custom_call.1} parent=11 // pred_check_branch
          %180 = sbr.rel (%p178) target = $region20
        $region19: #{tpu_custom_call.1} parent=11 // pred_region
          _
        $region20: #{tpu_custom_call.1} parent=11 // pred_fallthru
          _
      $region12: #{tpu_custom_call.1} parent=5 // pred_fallthru
        _
      %p181 = scmp.lt.s32.totalorder %s14, 2
      // Predicated region
      $region21: #{tpu_custom_call.1} parent=5 // pred_check
        %p182 = pneg %p181
      $region22: #{tpu_custom_call.1} parent=5 // pred_check_branch
        %184 = sbr.rel (%p182) target = $region24
      $region23: #{tpu_custom_call.1} parent=5 // pred_region
        // Predicated region
        $region25: #{tpu_custom_call.1} parent=23 // pred_check
          %p185 = pneg %p34
        $region26: #{tpu_custom_call.1} parent=23 // pred_check_branch
          %187 = sbr.rel (%p185) target = $region28
        $region27: #{tpu_custom_call.1} parent=23 // pred_region
          %p188 = scmp.lt.s32.totalorder %s14, 1
          %s189 = scalar_select %p188, %s14, 1
          %s190 = smul.addr %s189, 2
          %s191 = smul.addr %s190, 8
          %s192 = scalar_lea.vmem %s0, %s191
        $region28: #{tpu_custom_call.1} parent=23 // pred_fallthru
          _
        // Predicated region
        $region29: #{tpu_custom_call.1} parent=23 // pred_check
          %p193 = pneg %p60
        $region30: #{tpu_custom_call.1} parent=23 // pred_check_branch
          %195 = sbr.rel (%p193) target = $region32
        $region31: #{tpu_custom_call.1} parent=23 // pred_region
          %p196 = scmp.lt.s32.totalorder %s14, 1
          %s197 = scalar_select %p196, %s14, 1
          %s198 = smul.addr %s197, 2
          %s199 = smul.addr %s198, 8
          %s200 = scalar_lea.vmem %s1, %s199
        $region32: #{tpu_custom_call.1} parent=23 // pred_fallthru
          _
        // Predicated region
        $region33: #{tpu_custom_call.1} parent=23 // pred_check
          %p201 = pneg %p86
        $region34: #{tpu_custom_call.1} parent=23 // pred_check_branch
          %203 = sbr.rel (%p201) target = $region36
        $region35: #{tpu_custom_call.1} parent=23 // pred_region
          %p204 = scmp.lt.s32.totalorder %s14, 1
          %s205 = scalar_select %p204, %s14, 1
          %s206 = smul.addr %s205, 2
          %s207 = smul.addr %s206, 8
          %s208 = scalar_lea.vmem %s2, %s207
        $region36: #{tpu_custom_call.1} parent=23 // pred_fallthru
          _
      $region24: #{tpu_custom_call.1} parent=5 // pred_fallthru
        _
      %p209 = scmp.le.s32.totalorder 1, %s14
      %p210 = scmp.lt.s32.totalorder %s14, 3
      %p211 = pnand %p209, %p210
      %p212 = pneg %p211
      // Predicated region
      $region37: #{tpu_custom_call.1} parent=5 // pred_check
        _
      $region38: #{tpu_custom_call.1} parent=5 // pred_check_branch
        %214 = sbr.rel (%p211) target = $region40
      $region39: #{tpu_custom_call.1} parent=5 // pred_region
        %s215 = ssub.s32 %s14, 1
        %p216 = scmp.lt.s32.totalorder %s19, 1
        %s217 = scalar_select %p216, %s19, 1
        %s218 = smul.addr %s217, 2
        %s219 = smul.addr %s218, 8
        %s220 = scalar_lea.vmem %s0, %s219
        %p221 = pneg %p40
        %p222 = pneg %p37
        %p223 = scmp.lt.s32.totalorder %s19, 1
        %s224 = scalar_select %p223, %s19, 1
        %s225 = smul.addr %s224, 2
        %s226 = smul.addr %s225, 8
        %s227 = scalar_lea.vmem %s1, %s226
        %p228 = pneg %p66
        %p229 = pneg %p63
        %p230 = scmp.lt.s32.totalorder %s19, 1
        %s231 = scalar_select %p230, %s19, 1
        %s232 = smul.addr %s231, 2
        %s233 = smul.addr %s232, 8
        %s234 = scalar_lea.vmem %s2, %s233
        %p235 = pneg %p92
        %p236 = pneg %p89
        %p237 = pneg %p113
        %p238 = pneg %p110
        %p239 = pneg %p134
        %p240 = pneg %p131
        %p241 = pneg %p160
        %p242 = pneg %p157
        %s243 = sand.u32 %s147, 1
        %s244 = scalar_lea.sflag [#allocation3], %s243
        %s245 = sand.u32 %s147, 1
        %s246 = scalar_lea.vmem [#allocation2], %s245
        %p247 = scmp.lt.s32.totalorder %s19, 1
        %s248 = scalar_select %p247, %s19, 1
        %s249 = smul.addr %s248, 2
        %s250 = smul.addr %s249, 8
        %s251 = scalar_lea.vmem %s0, %s250
        %p252 = scmp.lt.s32.totalorder %s19, 1
        %s253 = scalar_select %p252, %s19, 1
        %s254 = smul.addr %s253, 2
        %s255 = smul.addr %s254, 8
        %s256 = scalar_lea.vmem %s1, %s255
        %p257 = scmp.lt.s32.totalorder %s19, 1
        %s258 = scalar_select %p257, %s19, 1
        %s259 = smul.addr %s258, 2
        %s260 = smul.addr %s259, 8
        %s261 = scalar_lea.vmem %s2, %s260
        %v262 = vld [vmem:[%s251] sm:$0xff]
        %v263 = vld [vmem:[%s251 + $0x8] sm:$0xff]
        %v264 = vld [vmem:[%s256] sm:$0xff]
        %v265 = vld [vmem:[%s256 + $0x8] sm:$0xff]
        %v266 = vld [vmem:[%s261] sm:$0xff]
        %v267 = vld [vmem:[%s261 + $0x8] sm:$0xff]
        %vm268 = vcmask 130048
        %v270 = vsel %vm268, %v264, 0
        %v273 = vsel %vm268, %v265, 0
        %275 = vmatprep.subr.mxu0 0.0
        %276 = vmatpush1.msra.mxu0 0.0
        %277 = vmatprep.subr.mxu0 0.0
        %278 = vmatpush1.msra.mxu0 0.0
        %279 = vmatprep.subr.mxu0 0.0
        %280 = vmatpush1.msra.mxu0 0.0
        %281 = vmatprep.subr.mxu0 0.0
        %282 = vmatpush1.msra.mxu0 0.0
        %283 = vmatprep.subr.mxu0 0.0
        %284 = vmatpush1.msra.mxu0 0.0
        %285 = vmatprep.subr.mxu0 0.0
        %286 = vmatpush1.msra.mxu0 0.0
        %287 = vmatprep.subr.mxu0 0.0
        %288 = vmatpush1.msra.mxu0 0.0
        %289 = vmatprep.subr.mxu0 0.0
        %290 = vmatpush1.msra.mxu0 0.0
        %291 = vmatprep.subr.mxu0 0.0
        %292 = vmatpush1.msra.mxu0 0.0
        %293 = vmatprep.subr.mxu0 0.0
        %294 = vmatpush1.msra.mxu0 0.0
        %295 = vmatprep.subr.mxu0 0.0
        %296 = vmatpush1.msra.mxu0 0.0
        %297 = vmatprep.subr.mxu0 0.0
        %298 = vmatpush1.msra.mxu0 0.0
        %299 = vmatprep.subr.mxu0 0.0
        %300 = vmatpush1.msra.mxu0 0.0
        %301 = vmatprep.subr.mxu0 0.0
        %302 = vmatpush1.msra.mxu0 0.0
        %303 = vmatprep.subr.mxu0 0.0
        %304 = vmatpush1.msra.mxu0 1.0
        %305 = vmatprep.subr.mxu0 0.0
        %306 = vmatpush1.msra.mxu0 1.0
        %307 = vmatprep.subr.mxu0 0.0
        %308 = vmatpush2.msra.mxu0 0.0
        %309 = vmatprep.subr.mxu0 0.0
        %310 = vmatpush2.msra.mxu0 0.0
        %311 = vmatprep.subr.mxu0 0.0
        %312 = vmatpush2.msra.mxu0 0.0
        %313 = vmatprep.subr.mxu0 0.0
        %314 = vmatpush2.msra.mxu0 0.0
        %315 = vmatprep.subr.mxu0 0.0
        %316 = vmatpush2.msra.mxu0 0.0
        %317 = vmatprep.subr.mxu0 0.0
        %318 = vmatpush2.msra.mxu0 0.0
        %319 = vmatprep.subr.mxu0 0.0
        %320 = vmatpush2.msra.mxu0 0.0
        %321 = vmatprep.subr.mxu0 0.0
        %322 = vmatpush2.msra.mxu0 0.0
        %323 = vmatprep.subr.mxu0 0.0
        %324 = vmatpush2.msra.mxu0 0.0
        %325 = vmatprep.subr.mxu0 0.0
        %326 = vmatpush2.msra.mxu0 0.0
        %327 = vmatprep.subr.mxu0 0.0
        %328 = vmatpush2.msra.mxu0 0.0
        %329 = vmatprep.subr.mxu0 0.0
        %330 = vmatpush2.msra.mxu0 0.0
        %331 = vmatprep.subr.mxu0 0.0
        %332 = vmatpush2.msra.mxu0 0.0
        %333 = vmatprep.subr.mxu0 0.0
        %334 = vmatpush2.msra.mxu0 0.0
        %335 = vmatprep.subr.mxu0 0.0
        %336 = vmatpush2.msra.mxu0 0.0
        %337 = vmatprep.subr.mxu0 0.0
        %338 = vmatpush2.msra.mxu0 0.0
        %339 = vmatprep.mubr.f32.mxu0 0.0
        %340 = vmatmul.mubr.f32.gmra.mxu0 %v270
        %v341 = vpop.f32.mrf.mxu0
        %v342 = vadd.f32 0.0, %v341
        %v343 = vpop.f32.mrf.mxu0
        %344 = vmatprep.mubr.f32.mxu0 0.0
        %345 = vmatmul.mubr.f32.gmra.mxu0 %v273
        %v346 = vpop.f32.mrf.mxu0
        %v347 = vadd.f32 0.0, %v346
        %v348 = vpop.f32.mrf.mxu0
        %349 = vdwg.mxu0
        %v350 = vmax.f32 %v342, 1.0
        %v351 = vmax.f32 %v347, 1.0
        %v352 = vrcp.pop %v350
        %v353 = vmul.f32 1.0, %v352
        %v354 = vrcp.pop %v351
        %v355 = vmul.f32 1.0, %v354
        %356 = vmatprep.subr.mxu0 0.0
        %357 = vmatpush1.msra.mxu0 0.0
        %358 = vmatprep.subr.mxu0 0.0
        %359 = vmatpush1.msra.mxu0 0.0
        %360 = vmatprep.subr.mxu0 0.0
        %361 = vmatpush1.msra.mxu0 0.0
        %362 = vmatprep.subr.mxu0 0.0
        %363 = vmatpush1.msra.mxu0 0.0
        %364 = vmatprep.subr.mxu0 0.0
        %365 = vmatpush1.msra.mxu0 0.0
        %366 = vmatprep.subr.mxu0 0.0
        %367 = vmatpush1.msra.mxu0 0.0
        %368 = vmatprep.subr.mxu0 0.0
        %369 = vmatpush1.msra.mxu0 0.0
        %370 = vmatprep.subr.mxu0 0.0
        %371 = vmatpush1.msra.mxu0 0.0
        %372 = vmatprep.subr.mxu0 0.0
        %373 = vmatpush1.msra.mxu0 0.0
        %374 = vmatprep.subr.mxu0 0.0
        %375 = vmatpush1.msra.mxu0 0.0
        %376 = vmatprep.subr.mxu0 0.0
        %377 = vmatpush1.msra.mxu0 0.0
        %378 = vmatprep.subr.mxu0 0.0
        %379 = vmatpush1.msra.mxu0 0.0
        %380 = vmatprep.subr.mxu0 0.0
        %381 = vmatpush1.msra.mxu0 0.0
        %382 = vmatprep.subr.mxu0 0.0
        %383 = vmatpush1.msra.mxu0 0.0
        %384 = vmatprep.subr.mxu0 0.0
        %385 = vmatpush1.msra.mxu0 %v263
        %386 = vmatprep.subr.mxu0 0.0
        %387 = vmatpush1.msra.mxu0 %v262
        %388 = vmatprep.subr.mxu0 0.0
        %389 = vmatpush2.msra.mxu0 0.0
        %390 = vmatprep.subr.mxu0 0.0
        %391 = vmatpush2.msra.mxu0 0.0
        %392 = vmatprep.subr.mxu0 0.0
        %393 = vmatpush2.msra.mxu0 0.0
        %394 = vmatprep.subr.mxu0 0.0
        %395 = vmatpush2.msra.mxu0 0.0
        %396 = vmatprep.subr.mxu0 0.0
        %397 = vmatpush2.msra.mxu0 0.0
        %398 = vmatprep.subr.mxu0 0.0
        %399 = vmatpush2.msra.mxu0 0.0
        %400 = vmatprep.subr.mxu0 0.0
        %401 = vmatpush2.msra.mxu0 0.0
        %402 = vmatprep.subr.mxu0 0.0
        %403 = vmatpush2.msra.mxu0 0.0
        %404 = vmatprep.subr.mxu0 0.0
        %405 = vmatpush2.msra.mxu0 0.0
        %406 = vmatprep.subr.mxu0 0.0
        %407 = vmatpush2.msra.mxu0 0.0
        %408 = vmatprep.subr.mxu0 0.0
        %409 = vmatpush2.msra.mxu0 0.0
        %410 = vmatprep.subr.mxu0 0.0
        %411 = vmatpush2.msra.mxu0 0.0
        %412 = vmatprep.subr.mxu0 0.0
        %413 = vmatpush2.msra.mxu0 0.0
        %414 = vmatprep.subr.mxu0 0.0
        %415 = vmatpush2.msra.mxu0 0.0
        %416 = vmatprep.subr.mxu0 0.0
        %417 = vmatpush2.msra.mxu0 0.0
        %418 = vmatprep.subr.mxu0 0.0
        %419 = vmatpush2.msra.mxu0 0.0
        %420 = vmatprep.mubr.f32.mxu0 0.0
        %421 = vmatmul.mubr.f32.gmra.mxu0 %v270
        %v422 = vpop.f32.mrf.mxu0
        %v423 = vadd.f32 0.0, %v422
        %v424 = vpop.f32.mrf.mxu0
        %425 = vmatprep.mubr.f32.mxu0 0.0
        %426 = vmatmul.mubr.f32.gmra.mxu0 %v273
        %v427 = vpop.f32.mrf.mxu0
        %v428 = vadd.f32 0.0, %v427
        %v429 = vpop.f32.mrf.mxu0
        %430 = vdwg.mxu0
        %432 = vset.pattern.permute.xlu0 0
        %433 = vperm.xlu0 %432, %v353
        %v434 = vpop.permute.xlu0 %433
        %437 = vset.pattern.permute.xlu0 0
        %438 = vperm.xlu0 %437, %v355
        %v439 = vpop.permute.xlu0 %438
        %v441 = vmul.f32 %v423, %v434
        %v442 = vmul.f32 %v428, %v439
        %445 = vrot.lane.b32.xlu0 %v262, 8
        %v446 = vpop.permute.xlu0 %445
        %447 = vrot.lane.b32.xlu0 %v263, 8
        %v448 = vpop.permute.xlu0 %447
        %vm451 = vcmask 64512
        %v452 = vsel %vm451, %v441, %v446
        %v453 = vsel %vm451, %v442, %v448
        %v454 = vld [vmem:[%s3] sm:$0xff]
        %v455 = vld [vmem:[%s3 + $0x8] sm:$0xff]
        %v456 = vld [vmem:[%s4] sm:$0x1]
        %v457 = vlaneseq
        %v458 = vshrl.u32 %v457, 7
        %v459 = vsub.s32 0, %v458
        %v460 = vrot.slane %v456, %v459
        %v462 = vsel %vm268, %v452, 0
        %v465 = vsel %vm268, %v453, 0
        %467 = vmatprep.subr.mxu0 0.0
        %468 = vmatpush1.msra.mxu0 0.0
        %469 = vmatprep.subr.mxu0 0.0
        %470 = vmatpush1.msra.mxu0 0.0
        %471 = vmatprep.subr.mxu0 0.0
        %472 = vmatpush1.msra.mxu0 0.0
        %473 = vmatprep.subr.mxu0 0.0
        %474 = vmatpush1.msra.mxu0 0.0
        %475 = vmatprep.subr.mxu0 0.0
        %476 = vmatpush1.msra.mxu0 0.0
        %477 = vmatprep.subr.mxu0 0.0
        %478 = vmatpush1.msra.mxu0 0.0
        %479 = vmatprep.subr.mxu0 0.0
        %480 = vmatpush1.msra.mxu0 0.0
        %481 = vmatprep.subr.mxu0 0.0
        %482 = vmatpush1.msra.mxu0 0.0
        %483 = vmatprep.subr.mxu0 0.0
        %484 = vmatpush1.msra.mxu0 0.0
        %485 = vmatprep.subr.mxu0 0.0
        %486 = vmatpush1.msra.mxu0 0.0
        %487 = vmatprep.subr.mxu0 0.0
        %488 = vmatpush1.msra.mxu0 0.0
        %489 = vmatprep.subr.mxu0 0.0
        %490 = vmatpush1.msra.mxu0 0.0
        %491 = vmatprep.subr.mxu0 0.0
        %492 = vmatpush1.msra.mxu0 0.0
        %493 = vmatprep.subr.mxu0 0.0
        %494 = vmatpush1.msra.mxu0 0.0
        %495 = vmatprep.subr.mxu0 0.0
        %496 = vmatpush1.msra.mxu0 %v455
        %497 = vmatprep.subr.mxu0 0.0
        %498 = vmatpush1.msra.mxu0 %v454
        %499 = vmatprep.subr.mxu0 0.0
        %500 = vmatpush2.msra.mxu0 0.0
        %501 = vmatprep.subr.mxu0 0.0
        %502 = vmatpush2.msra.mxu0 0.0
        %503 = vmatprep.subr.mxu0 0.0
        %504 = vmatpush2.msra.mxu0 0.0
        %505 = vmatprep.subr.mxu0 0.0
        %506 = vmatpush2.msra.mxu0 0.0
        %507 = vmatprep.subr.mxu0 0.0
        %508 = vmatpush2.msra.mxu0 0.0
        %509 = vmatprep.subr.mxu0 0.0
        %510 = vmatpush2.msra.mxu0 0.0
        %511 = vmatprep.subr.mxu0 0.0
        %512 = vmatpush2.msra.mxu0 0.0
        %513 = vmatprep.subr.mxu0 0.0
        %514 = vmatpush2.msra.mxu0 0.0
        %515 = vmatprep.subr.mxu0 0.0
        %516 = vmatpush2.msra.mxu0 0.0
        %517 = vmatprep.subr.mxu0 0.0
        %518 = vmatpush2.msra.mxu0 0.0
        %519 = vmatprep.subr.mxu0 0.0
        %520 = vmatpush2.msra.mxu0 0.0
        %521 = vmatprep.subr.mxu0 0.0
        %522 = vmatpush2.msra.mxu0 0.0
        %523 = vmatprep.subr.mxu0 0.0
        %524 = vmatpush2.msra.mxu0 0.0
        %525 = vmatprep.subr.mxu0 0.0
        %526 = vmatpush2.msra.mxu0 0.0
        %527 = vmatprep.subr.mxu0 0.0
        %528 = vmatpush2.msra.mxu0 0.0
        %529 = vmatprep.subr.mxu0 0.0
        %530 = vmatpush2.msra.mxu0 0.0
        %531 = vmatprep.mubr.f32.mxu0 0.0
        %532 = vmatmul.mubr.f32.gmra.mxu0 %v462
        %v533 = vpop.f32.mrf.mxu0
        %v534 = vadd.f32 %v460, %v533
        %v535 = vpop.f32.mrf.mxu0
        %536 = vmatprep.mubr.f32.mxu0 0.0
        %537 = vmatmul.mubr.f32.gmra.mxu0 %v465
        %v538 = vpop.f32.mrf.mxu0
        %v539 = vadd.f32 %v460, %v538
        %v540 = vpop.f32.mrf.mxu0
        %541 = vdwg.mxu0
        %543 = vset.pattern.permute.xlu0 0
        %544 = vperm.xlu0 %543, %v266
        %v545 = vpop.permute.xlu0 %544
        %548 = vset.pattern.permute.xlu0 0
        %549 = vperm.xlu0 %548, %v267
        %v550 = vpop.permute.xlu0 %549
        %v552 = vmul.f32 %v534, %v545
        %v553 = vmul.f32 %v539, %v550
        %v554 = vmax.f32 %v552, 0.0
        %v555 = vmax.f32 %v553, 0.0
        %v556 = vld [vmem:[%s4 + $0x1] sm:$0x1]
        %v557 = vlaneseq
        %v558 = vshrl.u32 %v557, 7
        %v559 = vsub.s32 0, %v558
        %v560 = vrot.slane %v556, %v559
        %v561 = vmul.f32 %v554, %v560
        %v562 = vmul.f32 %v555, %v560
        %v563 = vld [vmem:[%s4 + $0x2] sm:$0x1]
        %v564 = vlaneseq
        %v565 = vshrl.u32 %v564, 7
        %v566 = vsub.s32 0, %v565
        %v567 = vrot.slane %v563, %v566
        %v568 = vadd.f32 %v561, %v567
        %v569 = vadd.f32 %v562, %v567
        %570 = vmatprep.subr.mxu0 0.0
        %571 = vmatpush1.msra.mxu0 0.0
        %572 = vmatprep.subr.mxu0 0.0
        %573 = vmatpush1.msra.mxu0 0.0
        %574 = vmatprep.subr.mxu0 0.0
        %575 = vmatpush1.msra.mxu0 0.0
        %576 = vmatprep.subr.mxu0 0.0
        %577 = vmatpush1.msra.mxu0 0.0
        %578 = vmatprep.subr.mxu0 0.0
        %579 = vmatpush1.msra.mxu0 0.0
        %580 = vmatprep.subr.mxu0 0.0
        %581 = vmatpush1.msra.mxu0 0.0
        %582 = vmatprep.subr.mxu0 0.0
        %583 = vmatpush1.msra.mxu0 0.0
        %584 = vmatprep.subr.mxu0 0.0
        %585 = vmatpush1.msra.mxu0 0.0
        %586 = vmatprep.subr.mxu0 0.0
        %587 = vmatpush1.msra.mxu0 0.0
        %588 = vmatprep.subr.mxu0 0.0
        %589 = vmatpush1.msra.mxu0 0.0
        %590 = vmatprep.subr.mxu0 0.0
        %591 = vmatpush1.msra.mxu0 0.0
        %592 = vmatprep.subr.mxu0 0.0
        %593 = vmatpush1.msra.mxu0 0.0
        %594 = vmatprep.subr.mxu0 0.0
        %595 = vmatpush1.msra.mxu0 0.0
        %596 = vmatprep.subr.mxu0 0.0
        %597 = vmatpush1.msra.mxu0 0.0
        %598 = vmatprep.subr.mxu0 0.0
        %599 = vmatpush1.msra.mxu0 %v569
        %600 = vmatprep.subr.mxu0 0.0
        %601 = vmatpush1.msra.mxu0 %v568
        %602 = vmatprep.subr.mxu0 0.0
        %603 = vmatpush2.msra.mxu0 0.0
        %604 = vmatprep.subr.mxu0 0.0
        %605 = vmatpush2.msra.mxu0 0.0
        %606 = vmatprep.subr.mxu0 0.0
        %607 = vmatpush2.msra.mxu0 0.0
        %608 = vmatprep.subr.mxu0 0.0
        %609 = vmatpush2.msra.mxu0 0.0
        %610 = vmatprep.subr.mxu0 0.0
        %611 = vmatpush2.msra.mxu0 0.0
        %612 = vmatprep.subr.mxu0 0.0
        %613 = vmatpush2.msra.mxu0 0.0
        %614 = vmatprep.subr.mxu0 0.0
        %615 = vmatpush2.msra.mxu0 0.0
        %616 = vmatprep.subr.mxu0 0.0
        %617 = vmatpush2.msra.mxu0 0.0
        %618 = vmatprep.subr.mxu0 0.0
        %619 = vmatpush2.msra.mxu0 0.0
        %620 = vmatprep.subr.mxu0 0.0
        %621 = vmatpush2.msra.mxu0 0.0
        %622 = vmatprep.subr.mxu0 0.0
        %623 = vmatpush2.msra.mxu0 0.0
        %624 = vmatprep.subr.mxu0 0.0
        %625 = vmatpush2.msra.mxu0 0.0
        %626 = vmatprep.subr.mxu0 0.0
        %627 = vmatpush2.msra.mxu0 0.0
        %628 = vmatprep.subr.mxu0 0.0
        %629 = vmatpush2.msra.mxu0 0.0
        %630 = vmatprep.subr.mxu0 0.0
        %631 = vmatpush2.msra.mxu0 0.0
        %632 = vmatprep.subr.mxu0 0.0
        %633 = vmatpush2.msra.mxu0 0.0
        %634 = vmatprep.mubr.f32.mxu0 0.0
        %635 = vmatmul.mubr.f32.gmra.mxu0 %v270
        %v636 = vpop.f32.mrf.mxu0
        %v637 = vadd.f32 0.0, %v636
        %v638 = vpop.f32.mrf.mxu0
        %639 = vmatprep.mubr.f32.mxu0 0.0
        %640 = vmatmul.mubr.f32.gmra.mxu0 %v273
        %v641 = vpop.f32.mrf.mxu0
        %v642 = vadd.f32 0.0, %v641
        %v643 = vpop.f32.mrf.mxu0
        %644 = vdwg.mxu0
        %v645 = vmul.f32 %v637, %v434
        %v646 = vmul.f32 %v642, %v439
        %649 = vrot.lane.b32.xlu0 %v568, 32
        %v650 = vpop.permute.xlu0 %649
        %651 = vrot.lane.b32.xlu0 %v569, 32
        %v652 = vpop.permute.xlu0 %651
        %vm655 = vcmask 261120
        %v656 = vsel %vm655, %v645, %v650
        %v657 = vsel %vm655, %v646, %v652
        %v658 = vld [vmem:[%s3 + $0x10] sm:$0xff]
        %v659 = vld [vmem:[%s3 + $0x18] sm:$0xff]
        %v660 = vld [vmem:[%s3 + $0x20] sm:$0xff]
        %v661 = vld [vmem:[%s3 + $0x28] sm:$0xff]
        %v662 = vld [vmem:[%s3 + $0x30] sm:$0xff]
        %v663 = vld [vmem:[%s3 + $0x38] sm:$0xff]
        %v664 = vld [vmem:[%s3 + $0x40] sm:$0xff]
        %v665 = vld [vmem:[%s3 + $0x48] sm:$0xff]
        %v666 = vld [vmem:[%s4 + $0x3] sm:$0x1]
        %v667 = vlaneseq
        %v668 = vshrl.u32 %v667, 7
        %v669 = vsub.s32 0, %v668
        %v670 = vrot.slane %v666, %v669
        %vm671 = vcmask 523264
        %v673 = vsel %vm671, %v656, 0
        %v676 = vsel %vm671, %v657, 0
        %678 = vmatprep.subr.mxu0 0.0
        %679 = vmatpush1.msra.mxu0 0.0
        %680 = vmatprep.subr.mxu0 0.0
        %681 = vmatpush1.msra.mxu0 0.0
        %682 = vmatprep.subr.mxu0 0.0
        %683 = vmatpush1.msra.mxu0 0.0
        %684 = vmatprep.subr.mxu0 0.0
        %685 = vmatpush1.msra.mxu0 0.0
        %686 = vmatprep.subr.mxu0 0.0
        %687 = vmatpush1.msra.mxu0 0.0
        %688 = vmatprep.subr.mxu0 0.0
        %689 = vmatpush1.msra.mxu0 0.0
        %690 = vmatprep.subr.mxu0 0.0
        %691 = vmatpush1.msra.mxu0 0.0
        %692 = vmatprep.subr.mxu0 0.0
        %693 = vmatpush1.msra.mxu0 0.0
        %694 = vmatprep.subr.mxu0 0.0
        %695 = vmatpush1.msra.mxu0 %v665
        %696 = vmatprep.subr.mxu0 0.0
        %697 = vmatpush1.msra.mxu0 %v664
        %698 = vmatprep.subr.mxu0 0.0
        %699 = vmatpush1.msra.mxu0 %v663
        %700 = vmatprep.subr.mxu0 0.0
        %701 = vmatpush1.msra.mxu0 %v662
        %702 = vmatprep.subr.mxu0 0.0
        %703 = vmatpush1.msra.mxu0 %v661
        %704 = vmatprep.subr.mxu0 0.0
        %705 = vmatpush1.msra.mxu0 %v660
        %706 = vmatprep.subr.mxu0 0.0
        %707 = vmatpush1.msra.mxu0 %v659
        %708 = vmatprep.subr.mxu0 0.0
        %709 = vmatpush1.msra.mxu0 %v658
        %710 = vmatprep.subr.mxu0 0.0
        %711 = vmatpush2.msra.mxu0 0.0
        %712 = vmatprep.subr.mxu0 0.0
        %713 = vmatpush2.msra.mxu0 0.0
        %714 = vmatprep.subr.mxu0 0.0
        %715 = vmatpush2.msra.mxu0 0.0
        %716 = vmatprep.subr.mxu0 0.0
        %717 = vmatpush2.msra.mxu0 0.0
        %718 = vmatprep.subr.mxu0 0.0
        %719 = vmatpush2.msra.mxu0 0.0
        %720 = vmatprep.subr.mxu0 0.0
        %721 = vmatpush2.msra.mxu0 0.0
        %722 = vmatprep.subr.mxu0 0.0
        %723 = vmatpush2.msra.mxu0 0.0
        %724 = vmatprep.subr.mxu0 0.0
        %725 = vmatpush2.msra.mxu0 0.0
        %726 = vmatprep.subr.mxu0 0.0
        %727 = vmatpush2.msra.mxu0 0.0
        %728 = vmatprep.subr.mxu0 0.0
        %729 = vmatpush2.msra.mxu0 0.0
        %730 = vmatprep.subr.mxu0 0.0
        %731 = vmatpush2.msra.mxu0 0.0
        %732 = vmatprep.subr.mxu0 0.0
        %733 = vmatpush2.msra.mxu0 0.0
        %734 = vmatprep.subr.mxu0 0.0
        %735 = vmatpush2.msra.mxu0 0.0
        %736 = vmatprep.subr.mxu0 0.0
        %737 = vmatpush2.msra.mxu0 0.0
        %738 = vmatprep.subr.mxu0 0.0
        %739 = vmatpush2.msra.mxu0 0.0
        %740 = vmatprep.subr.mxu0 0.0
        %741 = vmatpush2.msra.mxu0 0.0
        %742 = vmatprep.mubr.f32.mxu0 0.0
        %743 = vmatmul.mubr.f32.gmra.mxu0 %v673
        %v744 = vpop.f32.mrf.mxu0
        %v745 = vadd.f32 %v670, %v744
        %v746 = vpop.f32.mrf.mxu0
        %747 = vmatprep.mubr.f32.mxu0 0.0
        %748 = vmatmul.mubr.f32.gmra.mxu0 %v676
        %v749 = vpop.f32.mrf.mxu0
        %v750 = vadd.f32 %v670, %v749
        %v751 = vpop.f32.mrf.mxu0
        %752 = vdwg.mxu0
        %v753 = vmul.f32 %v745, %v545
        %v754 = vmul.f32 %v750, %v550
        %v755 = vmax.f32 %v753, 0.0
        %v756 = vmax.f32 %v754, 0.0
        %v757 = vld [vmem:[%s4 + $0x4] sm:$0x1]
        %v758 = vlaneseq
        %v759 = vshrl.u32 %v758, 7
        %v760 = vsub.s32 0, %v759
        %v761 = vrot.slane %v757, %v760
        %v762 = vmul.f32 %v755, %v761
        %v763 = vmul.f32 %v756, %v761
        %v764 = vld [vmem:[%s4 + $0x5] sm:$0x1]
        %v765 = vlaneseq
        %v766 = vshrl.u32 %v765, 7
        %v767 = vsub.s32 0, %v766
        %v768 = vrot.slane %v764, %v767
        %v769 = vadd.f32 %v762, %v768
        %v770 = vadd.f32 %v763, %v768
        %771 = vmatprep.subr.mxu0 0.0
        %772 = vmatpush1.msra.mxu0 0.0
        %773 = vmatprep.subr.mxu0 0.0
        %774 = vmatpush1.msra.mxu0 0.0
        %775 = vmatprep.subr.mxu0 0.0
        %776 = vmatpush1.msra.mxu0 0.0
        %777 = vmatprep.subr.mxu0 0.0
        %778 = vmatpush1.msra.mxu0 0.0
        %779 = vmatprep.subr.mxu0 0.0
        %780 = vmatpush1.msra.mxu0 0.0
        %781 = vmatprep.subr.mxu0 0.0
        %782 = vmatpush1.msra.mxu0 0.0
        %783 = vmatprep.subr.mxu0 0.0
        %784 = vmatpush1.msra.mxu0 0.0
        %785 = vmatprep.subr.mxu0 0.0
        %786 = vmatpush1.msra.mxu0 0.0
        %787 = vmatprep.subr.mxu0 0.0
        %788 = vmatpush1.msra.mxu0 0.0
        %789 = vmatprep.subr.mxu0 0.0
        %790 = vmatpush1.msra.mxu0 0.0
        %791 = vmatprep.subr.mxu0 0.0
        %792 = vmatpush1.msra.mxu0 0.0
        %793 = vmatprep.subr.mxu0 0.0
        %794 = vmatpush1.msra.mxu0 0.0
        %795 = vmatprep.subr.mxu0 0.0
        %796 = vmatpush1.msra.mxu0 0.0
        %797 = vmatprep.subr.mxu0 0.0
        %798 = vmatpush1.msra.mxu0 0.0
        %799 = vmatprep.subr.mxu0 0.0
        %800 = vmatpush1.msra.mxu0 %v770
        %801 = vmatprep.subr.mxu0 0.0
        %802 = vmatpush1.msra.mxu0 %v769
        %803 = vmatprep.subr.mxu0 0.0
        %804 = vmatpush2.msra.mxu0 0.0
        %805 = vmatprep.subr.mxu0 0.0
        %806 = vmatpush2.msra.mxu0 0.0
        %807 = vmatprep.subr.mxu0 0.0
        %808 = vmatpush2.msra.mxu0 0.0
        %809 = vmatprep.subr.mxu0 0.0
        %810 = vmatpush2.msra.mxu0 0.0
        %811 = vmatprep.subr.mxu0 0.0
        %812 = vmatpush2.msra.mxu0 0.0
        %813 = vmatprep.subr.mxu0 0.0
        %814 = vmatpush2.msra.mxu0 0.0
        %815 = vmatprep.subr.mxu0 0.0
        %816 = vmatpush2.msra.mxu0 0.0
        %817 = vmatprep.subr.mxu0 0.0
        %818 = vmatpush2.msra.mxu0 0.0
        %819 = vmatprep.subr.mxu0 0.0
        %820 = vmatpush2.msra.mxu0 0.0
        %821 = vmatprep.subr.mxu0 0.0
        %822 = vmatpush2.msra.mxu0 0.0
        %823 = vmatprep.subr.mxu0 0.0
        %824 = vmatpush2.msra.mxu0 0.0
        %825 = vmatprep.subr.mxu0 0.0
        %826 = vmatpush2.msra.mxu0 0.0
        %827 = vmatprep.subr.mxu0 0.0
        %828 = vmatpush2.msra.mxu0 0.0
        %829 = vmatprep.subr.mxu0 0.0
        %830 = vmatpush2.msra.mxu0 0.0
        %831 = vmatprep.subr.mxu0 0.0
        %832 = vmatpush2.msra.mxu0 0.0
        %833 = vmatprep.subr.mxu0 0.0
        %834 = vmatpush2.msra.mxu0 0.0
        %835 = vmatprep.mubr.f32.mxu0 0.0
        %836 = vmatmul.mubr.f32.gmra.mxu0 %v270
        %v837 = vpop.f32.mrf.mxu0
        %v838 = vadd.f32 0.0, %v837
        %v839 = vpop.f32.mrf.mxu0
        %840 = vmatprep.mubr.f32.mxu0 0.0
        %841 = vmatmul.mubr.f32.gmra.mxu0 %v273
        %v842 = vpop.f32.mrf.mxu0
        %v843 = vadd.f32 0.0, %v842
        %v844 = vpop.f32.mrf.mxu0
        %845 = vdwg.mxu0
        %v846 = vmul.f32 %v838, %v434
        %v847 = vmul.f32 %v843, %v439
        %850 = vrot.lane.b32.xlu0 %v769, 32
        %v851 = vpop.permute.xlu0 %850
        %852 = vrot.lane.b32.xlu0 %v770, 32
        %v853 = vpop.permute.xlu0 %852
        %v856 = vsel %vm655, %v846, %v851
        %v857 = vsel %vm655, %v847, %v853
        %v858 = vld [vmem:[%s3 + $0x50] sm:$0xff]
        %v859 = vld [vmem:[%s3 + $0x58] sm:$0xff]
        %v860 = vld [vmem:[%s3 + $0x60] sm:$0xff]
        %v861 = vld [vmem:[%s3 + $0x68] sm:$0xff]
        %v862 = vld [vmem:[%s3 + $0x70] sm:$0xff]
        %v863 = vld [vmem:[%s3 + $0x78] sm:$0xff]
        %v864 = vld [vmem:[%s3 + $0x80] sm:$0xff]
        %v865 = vld [vmem:[%s3 + $0x88] sm:$0xff]
        %v866 = vld [vmem:[%s4 + $0x6] sm:$0x1]
        %v867 = vlaneseq
        %v868 = vshrl.u32 %v867, 7
        %v869 = vsub.s32 0, %v868
        %v870 = vrot.slane %v866, %v869
        %v872 = vsel %vm671, %v856, 0
        %v875 = vsel %vm671, %v857, 0
        %877 = vmatprep.subr.mxu0 0.0
        %878 = vmatpush1.msra.mxu0 0.0
        %879 = vmatprep.subr.mxu0 0.0
        %880 = vmatpush1.msra.mxu0 0.0
        %881 = vmatprep.subr.mxu0 0.0
        %882 = vmatpush1.msra.mxu0 0.0
        %883 = vmatprep.subr.mxu0 0.0
        %884 = vmatpush1.msra.mxu0 0.0
        %885 = vmatprep.subr.mxu0 0.0
        %886 = vmatpush1.msra.mxu0 0.0
        %887 = vmatprep.subr.mxu0 0.0
        %888 = vmatpush1.msra.mxu0 0.0
        %889 = vmatprep.subr.mxu0 0.0
        %890 = vmatpush1.msra.mxu0 0.0
        %891 = vmatprep.subr.mxu0 0.0
        %892 = vmatpush1.msra.mxu0 0.0
        %893 = vmatprep.subr.mxu0 0.0
        %894 = vmatpush1.msra.mxu0 %v865
        %895 = vmatprep.subr.mxu0 0.0
        %896 = vmatpush1.msra.mxu0 %v864
        %897 = vmatprep.subr.mxu0 0.0
        %898 = vmatpush1.msra.mxu0 %v863
        %899 = vmatprep.subr.mxu0 0.0
        %900 = vmatpush1.msra.mxu0 %v862
        %901 = vmatprep.subr.mxu0 0.0
        %902 = vmatpush1.msra.mxu0 %v861
        %903 = vmatprep.subr.mxu0 0.0
        %904 = vmatpush1.msra.mxu0 %v860
        %905 = vmatprep.subr.mxu0 0.0
        %906 = vmatpush1.msra.mxu0 %v859
        %907 = vmatprep.subr.mxu0 0.0
        %908 = vmatpush1.msra.mxu0 %v858
        %909 = vmatprep.subr.mxu0 0.0
        %910 = vmatpush2.msra.mxu0 0.0
        %911 = vmatprep.subr.mxu0 0.0
        %912 = vmatpush2.msra.mxu0 0.0
        %913 = vmatprep.subr.mxu0 0.0
        %914 = vmatpush2.msra.mxu0 0.0
        %915 = vmatprep.subr.mxu0 0.0
        %916 = vmatpush2.msra.mxu0 0.0
        %917 = vmatprep.subr.mxu0 0.0
        %918 = vmatpush2.msra.mxu0 0.0
        %919 = vmatprep.subr.mxu0 0.0
        %920 = vmatpush2.msra.mxu0 0.0
        %921 = vmatprep.subr.mxu0 0.0
        %922 = vmatpush2.msra.mxu0 0.0
        %923 = vmatprep.subr.mxu0 0.0
        %924 = vmatpush2.msra.mxu0 0.0
        %925 = vmatprep.subr.mxu0 0.0
        %926 = vmatpush2.msra.mxu0 0.0
        %927 = vmatprep.subr.mxu0 0.0
        %928 = vmatpush2.msra.mxu0 0.0
        %929 = vmatprep.subr.mxu0 0.0
        %930 = vmatpush2.msra.mxu0 0.0
        %931 = vmatprep.subr.mxu0 0.0
        %932 = vmatpush2.msra.mxu0 0.0
        %933 = vmatprep.subr.mxu0 0.0
        %934 = vmatpush2.msra.mxu0 0.0
        %935 = vmatprep.subr.mxu0 0.0
        %936 = vmatpush2.msra.mxu0 0.0
        %937 = vmatprep.subr.mxu0 0.0
        %938 = vmatpush2.msra.mxu0 0.0
        %939 = vmatprep.subr.mxu0 0.0
        %940 = vmatpush2.msra.mxu0 0.0
        %941 = vmatprep.mubr.f32.mxu0 0.0
        %942 = vmatmul.mubr.f32.gmra.mxu0 %v872
        %v943 = vpop.f32.mrf.mxu0
        %v944 = vadd.f32 %v870, %v943
        %v945 = vpop.f32.mrf.mxu0
        %946 = vmatprep.mubr.f32.mxu0 0.0
        %947 = vmatmul.mubr.f32.gmra.mxu0 %v875
        %v948 = vpop.f32.mrf.mxu0
        %v949 = vadd.f32 %v870, %v948
        %v950 = vpop.f32.mrf.mxu0
        %951 = vdwg.mxu0
        %v952 = vmul.f32 %v944, %v545
        %v953 = vmul.f32 %v949, %v550
        %v954 = vld [vmem:[%s3 + $0x90] sm:$0xff]
        %v955 = vld [vmem:[%s3 + $0x98] sm:$0xff]
        %v956 = vld [vmem:[%s3 + $0xa0] sm:$0xff]
        %v957 = vld [vmem:[%s3 + $0xa8] sm:$0xff]
        %v958 = vld [vmem:[%s3 + $0xb0] sm:$0xff]
        %v959 = vld [vmem:[%s3 + $0xb8] sm:$0xff]
        %v960 = vld [vmem:[%s3 + $0xc0] sm:$0xff]
        %v961 = vld [vmem:[%s3 + $0xc8] sm:$0xff]
        %v962 = vsel %vm655, %v769, 0
        %v964 = vsel %vm655, %v770, 0
        %966 = vmatprep.subr.mxu0 0.0
        %967 = vmatpush1.msra.mxu0 0.0
        %968 = vmatprep.subr.mxu0 0.0
        %969 = vmatpush1.msra.mxu0 0.0
        %970 = vmatprep.subr.mxu0 0.0
        %971 = vmatpush1.msra.mxu0 0.0
        %972 = vmatprep.subr.mxu0 0.0
        %973 = vmatpush1.msra.mxu0 0.0
        %974 = vmatprep.subr.mxu0 0.0
        %975 = vmatpush1.msra.mxu0 0.0
        %976 = vmatprep.subr.mxu0 0.0
        %977 = vmatpush1.msra.mxu0 0.0
        %978 = vmatprep.subr.mxu0 0.0
        %979 = vmatpush1.msra.mxu0 0.0
        %980 = vmatprep.subr.mxu0 0.0
        %981 = vmatpush1.msra.mxu0 0.0
        %982 = vmatprep.subr.mxu0 0.0
        %983 = vmatpush1.msra.mxu0 0.0
        %984 = vmatprep.subr.mxu0 0.0
        %985 = vmatpush1.msra.mxu0 0.0
        %986 = vmatprep.subr.mxu0 0.0
        %987 = vmatpush1.msra.mxu0 0.0
        %988 = vmatprep.subr.mxu0 0.0
        %989 = vmatpush1.msra.mxu0 0.0
        %990 = vmatprep.subr.mxu0 0.0
        %991 = vmatpush1.msra.mxu0 %v961
        %992 = vmatprep.subr.mxu0 0.0
        %993 = vmatpush1.msra.mxu0 %v960
        %994 = vmatprep.subr.mxu0 0.0
        %995 = vmatpush1.msra.mxu0 %v959
        %996 = vmatprep.subr.mxu0 0.0
        %997 = vmatpush1.msra.mxu0 %v958
        %998 = vmatprep.subr.mxu0 0.0
        %999 = vmatpush2.msra.mxu0 0.0
        %1000 = vmatprep.subr.mxu0 0.0
        %1001 = vmatpush2.msra.mxu0 0.0
        %1002 = vmatprep.subr.mxu0 0.0
        %1003 = vmatpush2.msra.mxu0 0.0
        %1004 = vmatprep.subr.mxu0 0.0
        %1005 = vmatpush2.msra.mxu0 0.0
        %1006 = vmatprep.subr.mxu0 0.0
        %1007 = vmatpush2.msra.mxu0 0.0
        %1008 = vmatprep.subr.mxu0 0.0
        %1009 = vmatpush2.msra.mxu0 0.0
        %1010 = vmatprep.subr.mxu0 0.0
        %1011 = vmatpush2.msra.mxu0 0.0
        %1012 = vmatprep.subr.mxu0 0.0
        %1013 = vmatpush2.msra.mxu0 0.0
        %1014 = vmatprep.subr.mxu0 0.0
        %1015 = vmatpush2.msra.mxu0 0.0
        %1016 = vmatprep.subr.mxu0 0.0
        %1017 = vmatpush2.msra.mxu0 0.0
        %1018 = vmatprep.subr.mxu0 0.0
        %1019 = vmatpush2.msra.mxu0 0.0
        %1020 = vmatprep.subr.mxu0 0.0
        %1021 = vmatpush2.msra.mxu0 0.0
        %1022 = vmatprep.subr.mxu0 0.0
        %1023 = vmatpush2.msra.mxu0 0.0
        %1024 = vmatprep.subr.mxu0 0.0
        %1025 = vmatpush2.msra.mxu0 0.0
        %1026 = vmatprep.subr.mxu0 0.0
        %1027 = vmatpush2.msra.mxu0 0.0
        %1028 = vmatprep.subr.mxu0 0.0
        %1029 = vmatpush2.msra.mxu0 0.0
        %1030 = vmatprep.mubr.f32.mxu0 0.0
        %1031 = vmatmul.mubr.f32.gmra.mxu0 %v962
        %v1032 = vpop.f32.mrf.mxu0
        %v1033 = vadd.f32 0.0, %v1032
        %v1034 = vpop.f32.mrf.mxu0
        %1035 = vmatprep.mubr.f32.mxu0 0.0
        %1036 = vmatmul.mubr.f32.gmra.mxu0 %v964
        %v1037 = vpop.f32.mrf.mxu0
        %v1038 = vadd.f32 0.0, %v1037
        %v1039 = vpop.f32.mrf.mxu0
        %1040 = vdwg.mxu0
        %v1041 = vsel %vm655, %v568, 0
        %v1043 = vsel %vm655, %v569, 0
        %1045 = vmatprep.subr.mxu0 0.0
        %1046 = vmatpush1.msra.mxu0 0.0
        %1047 = vmatprep.subr.mxu0 0.0
        %1048 = vmatpush1.msra.mxu0 0.0
        %1049 = vmatprep.subr.mxu0 0.0
        %1050 = vmatpush1.msra.mxu0 0.0
        %1051 = vmatprep.subr.mxu0 0.0
        %1052 = vmatpush1.msra.mxu0 0.0
        %1053 = vmatprep.subr.mxu0 0.0
        %1054 = vmatpush1.msra.mxu0 0.0
        %1055 = vmatprep.subr.mxu0 0.0
        %1056 = vmatpush1.msra.mxu0 0.0
        %1057 = vmatprep.subr.mxu0 0.0
        %1058 = vmatpush1.msra.mxu0 0.0
        %1059 = vmatprep.subr.mxu0 0.0
        %1060 = vmatpush1.msra.mxu0 0.0
        %1061 = vmatprep.subr.mxu0 0.0
        %1062 = vmatpush1.msra.mxu0 0.0
        %1063 = vmatprep.subr.mxu0 0.0
        %1064 = vmatpush1.msra.mxu0 0.0
        %1065 = vmatprep.subr.mxu0 0.0
        %1066 = vmatpush1.msra.mxu0 0.0
        %1067 = vmatprep.subr.mxu0 0.0
        %1068 = vmatpush1.msra.mxu0 0.0
        %1069 = vmatprep.subr.mxu0 0.0
        %1070 = vmatpush1.msra.mxu0 %v957
        %1071 = vmatprep.subr.mxu0 0.0
        %1072 = vmatpush1.msra.mxu0 %v956
        %1073 = vmatprep.subr.mxu0 0.0
        %1074 = vmatpush1.msra.mxu0 %v955
        %1075 = vmatprep.subr.mxu0 0.0
        %1076 = vmatpush1.msra.mxu0 %v954
        %1077 = vmatprep.subr.mxu0 0.0
        %1078 = vmatpush2.msra.mxu0 0.0
        %1079 = vmatprep.subr.mxu0 0.0
        %1080 = vmatpush2.msra.mxu0 0.0
        %1081 = vmatprep.subr.mxu0 0.0
        %1082 = vmatpush2.msra.mxu0 0.0
        %1083 = vmatprep.subr.mxu0 0.0
        %1084 = vmatpush2.msra.mxu0 0.0
        %1085 = vmatprep.subr.mxu0 0.0
        %1086 = vmatpush2.msra.mxu0 0.0
        %1087 = vmatprep.subr.mxu0 0.0
        %1088 = vmatpush2.msra.mxu0 0.0
        %1089 = vmatprep.subr.mxu0 0.0
        %1090 = vmatpush2.msra.mxu0 0.0
        %1091 = vmatprep.subr.mxu0 0.0
        %1092 = vmatpush2.msra.mxu0 0.0
        %1093 = vmatprep.subr.mxu0 0.0
        %1094 = vmatpush2.msra.mxu0 0.0
        %1095 = vmatprep.subr.mxu0 0.0
        %1096 = vmatpush2.msra.mxu0 0.0
        %1097 = vmatprep.subr.mxu0 0.0
        %1098 = vmatpush2.msra.mxu0 0.0
        %1099 = vmatprep.subr.mxu0 0.0
        %1100 = vmatpush2.msra.mxu0 0.0
        %1101 = vmatprep.subr.mxu0 0.0
        %1102 = vmatpush2.msra.mxu0 0.0
        %1103 = vmatprep.subr.mxu0 0.0
        %1104 = vmatpush2.msra.mxu0 0.0
        %1105 = vmatprep.subr.mxu0 0.0
        %1106 = vmatpush2.msra.mxu0 0.0
        %1107 = vmatprep.subr.mxu0 0.0
        %1108 = vmatpush2.msra.mxu0 0.0
        %1109 = vmatprep.mubr.f32.mxu0 0.0
        %1110 = vmatmul.mubr.f32.gmra.mxu0 %v1041
        %v1111 = vpop.f32.mrf.mxu0
        %v1112 = vadd.f32 %v1033, %v1111
        %v1113 = vpop.f32.mrf.mxu0
        %1114 = vmatprep.mubr.f32.mxu0 0.0
        %1115 = vmatmul.mubr.f32.gmra.mxu0 %v1043
        %v1116 = vpop.f32.mrf.mxu0
        %v1117 = vadd.f32 %v1038, %v1116
        %v1118 = vpop.f32.mrf.mxu0
        %1119 = vdwg.mxu0
        %v1120 = vld [vmem:[%s3 + $0xd0] sm:$0xff]
        %v1121 = vld [vmem:[%s3 + $0xd8] sm:$0xff]
        %v1122 = vld [vmem:[%s3 + $0xe0] sm:$0xf]
        %vm1123 = vcmask 162816
        %v1125 = vsel %vm1123, %v952, 0
        %v1128 = vsel %vm1123, %v953, 0
        %vm1130 = vcmask 1043456
        %v1132 = vsel %vm1130, %v1122, 0
        %1134 = vmatprep.subr.mxu0 0.0
        %1135 = vmatpush1.msra.mxu0 0.0
        %1136 = vmatprep.subr.mxu0 0.0
        %1137 = vmatpush1.msra.mxu0 0.0
        %1138 = vmatprep.subr.mxu0 0.0
        %1139 = vmatpush1.msra.mxu0 0.0
        %1140 = vmatprep.subr.mxu0 0.0
        %1141 = vmatpush1.msra.mxu0 0.0
        %1142 = vmatprep.subr.mxu0 0.0
        %1143 = vmatpush1.msra.mxu0 0.0
        %1144 = vmatprep.subr.mxu0 0.0
        %1145 = vmatpush1.msra.mxu0 0.0
        %1146 = vmatprep.subr.mxu0 0.0
        %1147 = vmatpush1.msra.mxu0 0.0
        %1148 = vmatprep.subr.mxu0 0.0
        %1149 = vmatpush1.msra.mxu0 0.0
        %1150 = vmatprep.subr.mxu0 0.0
        %1151 = vmatpush1.msra.mxu0 0.0
        %1152 = vmatprep.subr.mxu0 0.0
        %1153 = vmatpush1.msra.mxu0 0.0
        %1154 = vmatprep.subr.mxu0 0.0
        %1155 = vmatpush1.msra.mxu0 0.0
        %1156 = vmatprep.subr.mxu0 0.0
        %1157 = vmatpush1.msra.mxu0 0.0
        %1158 = vmatprep.subr.mxu0 0.0
        %1159 = vmatpush1.msra.mxu0 0.0
        %1160 = vmatprep.subr.mxu0 0.0
        %1161 = vmatpush1.msra.mxu0 %v1132
        %1162 = vmatprep.subr.mxu0 0.0
        %1163 = vmatpush1.msra.mxu0 %v1121
        %1164 = vmatprep.subr.mxu0 0.0
        %1165 = vmatpush1.msra.mxu0 %v1120
        %1166 = vmatprep.subr.mxu0 0.0
        %1167 = vmatpush2.msra.mxu0 0.0
        %1168 = vmatprep.subr.mxu0 0.0
        %1169 = vmatpush2.msra.mxu0 0.0
        %1170 = vmatprep.subr.mxu0 0.0
        %1171 = vmatpush2.msra.mxu0 0.0
        %1172 = vmatprep.subr.mxu0 0.0
        %1173 = vmatpush2.msra.mxu0 0.0
        %1174 = vmatprep.subr.mxu0 0.0
        %1175 = vmatpush2.msra.mxu0 0.0
        %1176 = vmatprep.subr.mxu0 0.0
        %1177 = vmatpush2.msra.mxu0 0.0
        %1178 = vmatprep.subr.mxu0 0.0
        %1179 = vmatpush2.msra.mxu0 0.0
        %1180 = vmatprep.subr.mxu0 0.0
        %1181 = vmatpush2.msra.mxu0 0.0
        %1182 = vmatprep.subr.mxu0 0.0
        %1183 = vmatpush2.msra.mxu0 0.0
        %1184 = vmatprep.subr.mxu0 0.0
        %1185 = vmatpush2.msra.mxu0 0.0
        %1186 = vmatprep.subr.mxu0 0.0
        %1187 = vmatpush2.msra.mxu0 0.0
        %1188 = vmatprep.subr.mxu0 0.0
        %1189 = vmatpush2.msra.mxu0 0.0
        %1190 = vmatprep.subr.mxu0 0.0
        %1191 = vmatpush2.msra.mxu0 0.0
        %1192 = vmatprep.subr.mxu0 0.0
        %1193 = vmatpush2.msra.mxu0 0.0
        %1194 = vmatprep.subr.mxu0 0.0
        %1195 = vmatpush2.msra.mxu0 0.0
        %1196 = vmatprep.subr.mxu0 0.0
        %1197 = vmatpush2.msra.mxu0 0.0
        %1198 = vmatprep.mubr.f32.mxu0 0.0
        %1199 = vmatmul.mubr.f32.gmra.mxu0 %v1125
        %v1200 = vpop.f32.mrf.mxu0
        %v1201 = vadd.f32 0.0, %v1200
        %v1202 = vpop.f32.mrf.mxu0
        %1203 = vmatprep.mubr.f32.mxu0 0.0
        %1204 = vmatmul.mubr.f32.gmra.mxu0 %v1128
        %v1205 = vpop.f32.mrf.mxu0
        %v1206 = vadd.f32 0.0, %v1205
        %v1207 = vpop.f32.mrf.mxu0
        %1208 = vdwg.mxu0
        %v1209 = vadd.f32 %v1112, %v1201
        %v1210 = vadd.f32 %v1117, %v1206
        %v1211 = vld [vmem:[%s4 + $0x7] sm:$0x1]
        %v1212 = vlaneseq
        %v1213 = vshrl.u32 %v1212, 7
        %v1214 = vsub.s32 0, %v1213
        %v1215 = vrot.slane %v1211, %v1214
        %v1216 = vadd.f32 %v1209, %v1215
        %v1217 = vadd.f32 %v1210, %v1215
        %vm1218 = vcmask 31744
        %v1219 = vsel %vm1218, %v1216, -inf
        %1220 = vmax.xlane.f32.xlu0 %v1219
        %v1221 = vpop.xlane.xlu0 %1220
        %v1222 = vsel %vm1218, %v1217, -inf
        %1223 = vmax.xlane.f32.xlu0 %v1222
        %v1224 = vpop.xlane.xlu0 %1223
        %v1225 = vsub.f32 %v1216, %v1221
        %v1226 = vsub.f32 %v1217, %v1224
        %v1227 = vmul.f32 %v1225, 1.442695
        %v1228 = vpow.pop %v1227
        %v1229 = vmul.f32 %v1226, 1.442695
        %v1230 = vpow.pop %v1229
        %v1231 = vsel %vm1218, %v1228, 0.0
        %1232 = vadd.xlane.f32.xlu0 %v1231
        %v1233 = vpop.xlane.xlu0 %1232
        %v1234 = vsel %vm1218, %v1230, 0.0
        %1235 = vadd.xlane.f32.xlu0 %v1234
        %v1236 = vpop.xlane.xlu0 %1235
        %v1237 = vrcp.pop %v1233
        %v1238 = vmul.f32 %v1228, %v1237
        %v1239 = vrcp.pop %v1236
        %v1240 = vmul.f32 %v1230, %v1239
        %1241 = vrot.lane.b32.xlu0 %v769, 16
        %v1242 = vpop.permute.xlu0 %1241
        %1243 = vrot.lane.b32.xlu0 %v770, 16
        %v1244 = vpop.permute.xlu0 %1243
        %1247 = vrot.lane.b32.xlu0 %v952, 32
        %v1248 = vpop.permute.xlu0 %1247
        %1249 = vrot.lane.b32.xlu0 %v953, 32
        %v1250 = vpop.permute.xlu0 %1249
        %v1253 = vsel %vm268, %v568, %v1242
        %v1254 = vsel %vm268, %v569, %v1244
        %v1255 = vsel %vm655, %v1253, %v1248
        %v1256 = vsel %vm655, %v1254, %v1250
        %v1257 = vmul.f32 %v1238, %v545
        %v1258 = vmul.f32 %v1240, %v550
        %v1259 = vmul.f32 %v1255, %v545
        %v1260 = vmul.f32 %v1256, %v550
        %1261 = vxpose.xlu0.b32.start [1/16] %v1257, 128
        %1262 = vxpose.xlu0.b32.cont [2/16] %v1258, 128
        %1263 = vxpose.xlu0.b32.cont [3/16] 0.0, 128
        %1264 = vxpose.xlu0.b32.cont [4/16] 0.0, 128
        %1265 = vxpose.xlu0.b32.cont [5/16] 0.0, 128
        %1266 = vxpose.xlu0.b32.cont [6/16] 0.0, 128
        %1267 = vxpose.xlu0.b32.cont [7/16] 0.0, 128
        %1268 = vxpose.xlu0.b32.cont [8/16] 0.0, 128
        %1269 = vxpose.xlu0.b32.cont [9/16] 0.0, 128
        %1270 = vxpose.xlu0.b32.cont [10/16] 0.0, 128
        %1271 = vxpose.xlu0.b32.cont [11/16] 0.0, 128
        %1272 = vxpose.xlu0.b32.cont [12/16] 0.0, 128
        %1273 = vxpose.xlu0.b32.cont [13/16] 0.0, 128
        %1274 = vxpose.xlu0.b32.cont [14/16] 0.0, 128
        %1275 = vxpose.xlu0.b32.cont [15/16] 0.0, 128
        %1276 = vxpose.xlu0.b32.end [16/16] 0.0, 128
        %v1277 = vpop.trf.xlu0
        %v1278 = vpop.trf.xlu0
        %v1279 = vpop.trf.xlu0
        %v1280 = vpop.trf.xlu0
        %v1281 = vpop.trf.xlu0
        %v1282 = vpop.trf.xlu0
        %v1283 = vpop.trf.xlu0
        %v1284 = vpop.trf.xlu0
        %v1285 = vpop.trf.xlu0
        %v1286 = vpop.trf.xlu0
        %v1287 = vpop.trf.xlu0
        %v1288 = vpop.trf.xlu0
        %v1289 = vpop.trf.xlu0
        %v1290 = vpop.trf.xlu0
        %v1291 = vpop.trf.xlu0
        %v1292 = vpop.trf.xlu0
        %v1294 = vsel %vm268, %v1277, 0
        %1296 = vmatprep.subr.mxu0 0.0
        %1297 = vmatpush1.msra.mxu0 0.0
        %1298 = vmatprep.subr.mxu0 0.0
        %1299 = vmatpush1.msra.mxu0 0.0
        %1300 = vmatprep.subr.mxu0 0.0
        %1301 = vmatpush1.msra.mxu0 0.0
        %1302 = vmatprep.subr.mxu0 0.0
        %1303 = vmatpush1.msra.mxu0 0.0
        %1304 = vmatprep.subr.mxu0 0.0
        %1305 = vmatpush1.msra.mxu0 0.0
        %1306 = vmatprep.subr.mxu0 0.0
        %1307 = vmatpush1.msra.mxu0 0.0
        %1308 = vmatprep.subr.mxu0 0.0
        %1309 = vmatpush1.msra.mxu0 0.0
        %1310 = vmatprep.subr.mxu0 0.0
        %1311 = vmatpush1.msra.mxu0 0.0
        %1312 = vmatprep.subr.mxu0 0.0
        %1313 = vmatpush1.msra.mxu0 0.0
        %1314 = vmatprep.subr.mxu0 0.0
        %1315 = vmatpush1.msra.mxu0 0.0
        %1316 = vmatprep.subr.mxu0 0.0
        %1317 = vmatpush1.msra.mxu0 0.0
        %1318 = vmatprep.subr.mxu0 0.0
        %1319 = vmatpush1.msra.mxu0 0.0
        %1320 = vmatprep.subr.mxu0 0.0
        %1321 = vmatpush1.msra.mxu0 0.0
        %1322 = vmatprep.subr.mxu0 0.0
        %1323 = vmatpush1.msra.mxu0 0.0
        %1324 = vmatprep.subr.mxu0 0.0
        %1325 = vmatpush1.msra.mxu0 %v1260
        %1326 = vmatprep.subr.mxu0 0.0
        %1327 = vmatpush1.msra.mxu0 %v1259
        %1328 = vmatprep.subr.mxu0 0.0
        %1329 = vmatpush2.msra.mxu0 0.0
        %1330 = vmatprep.subr.mxu0 0.0
        %1331 = vmatpush2.msra.mxu0 0.0
        %1332 = vmatprep.subr.mxu0 0.0
        %1333 = vmatpush2.msra.mxu0 0.0
        %1334 = vmatprep.subr.mxu0 0.0
        %1335 = vmatpush2.msra.mxu0 0.0
        %1336 = vmatprep.subr.mxu0 0.0
        %1337 = vmatpush2.msra.mxu0 0.0
        %1338 = vmatprep.subr.mxu0 0.0
        %1339 = vmatpush2.msra.mxu0 0.0
        %1340 = vmatprep.subr.mxu0 0.0
        %1341 = vmatpush2.msra.mxu0 0.0
        %1342 = vmatprep.subr.mxu0 0.0
        %1343 = vmatpush2.msra.mxu0 0.0
        %1344 = vmatprep.subr.mxu0 0.0
        %1345 = vmatpush2.msra.mxu0 0.0
        %1346 = vmatprep.subr.mxu0 0.0
        %1347 = vmatpush2.msra.mxu0 0.0
        %1348 = vmatprep.subr.mxu0 0.0
        %1349 = vmatpush2.msra.mxu0 0.0
        %1350 = vmatprep.subr.mxu0 0.0
        %1351 = vmatpush2.msra.mxu0 0.0
        %1352 = vmatprep.subr.mxu0 0.0
        %1353 = vmatpush2.msra.mxu0 0.0
        %1354 = vmatprep.subr.mxu0 0.0
        %1355 = vmatpush2.msra.mxu0 0.0
        %1356 = vmatprep.subr.mxu0 0.0
        %1357 = vmatpush2.msra.mxu0 0.0
        %1358 = vmatprep.subr.mxu0 0.0
        %1359 = vmatpush2.msra.mxu0 0.0
        %1360 = vmatprep.mubr.f32.mxu0 0.0
        %1361 = vmatmul.mubr.f32.gmra.mxu0 %v1294
        %v1362 = vpop.f32.mrf.mxu0
        %v1363 = vadd.f32 0.0, %v1362
        %v1364 = vpop.f32.mrf.mxu0
        %1365 = vdwg.mxu0
        %1366 = vmatprep.subr.mxu0 0.0
        %1367 = vmatpush1.msra.mxu0 0.0
        %1368 = vmatprep.subr.mxu0 0.0
        %1369 = vmatpush1.msra.mxu0 0.0
        %1370 = vmatprep.subr.mxu0 0.0
        %1371 = vmatpush1.msra.mxu0 0.0
        %1372 = vmatprep.subr.mxu0 0.0
        %1373 = vmatpush1.msra.mxu0 0.0
        %1374 = vmatprep.subr.mxu0 0.0
        %1375 = vmatpush1.msra.mxu0 0.0
        %1376 = vmatprep.subr.mxu0 0.0
        %1377 = vmatpush1.msra.mxu0 0.0
        %1378 = vmatprep.subr.mxu0 0.0
        %1379 = vmatpush1.msra.mxu0 0.0
        %1380 = vmatprep.subr.mxu0 0.0
        %1381 = vmatpush1.msra.mxu0 0.0
        %1382 = vmatprep.subr.mxu0 0.0
        %1383 = vmatpush1.msra.mxu0 0.0
        %1384 = vmatprep.subr.mxu0 0.0
        %1385 = vmatpush1.msra.mxu0 0.0
        %1386 = vmatprep.subr.mxu0 0.0
        %1387 = vmatpush1.msra.mxu0 0.0
        %1388 = vmatprep.subr.mxu0 0.0
        %1389 = vmatpush1.msra.mxu0 0.0
        %1390 = vmatprep.subr.mxu0 0.0
        %1391 = vmatpush1.msra.mxu0 0.0
        %1392 = vmatprep.subr.mxu0 0.0
        %1393 = vmatpush1.msra.mxu0 0.0
        %1394 = vmatprep.subr.mxu0 0.0
        %1395 = vmatpush1.msra.mxu0 %v1258
        %1396 = vmatprep.subr.mxu0 0.0
        %1397 = vmatpush1.msra.mxu0 %v1257
        %1398 = vmatprep.subr.mxu0 0.0
        %1399 = vmatpush2.msra.mxu0 0.0
        %1400 = vmatprep.subr.mxu0 0.0
        %1401 = vmatpush2.msra.mxu0 0.0
        %1402 = vmatprep.subr.mxu0 0.0
        %1403 = vmatpush2.msra.mxu0 0.0
        %1404 = vmatprep.subr.mxu0 0.0
        %1405 = vmatpush2.msra.mxu0 0.0
        %1406 = vmatprep.subr.mxu0 0.0
        %1407 = vmatpush2.msra.mxu0 0.0
        %1408 = vmatprep.subr.mxu0 0.0
        %1409 = vmatpush2.msra.mxu0 0.0
        %1410 = vmatprep.subr.mxu0 0.0
        %1411 = vmatpush2.msra.mxu0 0.0
        %1412 = vmatprep.subr.mxu0 0.0
        %1413 = vmatpush2.msra.mxu0 0.0
        %1414 = vmatprep.subr.mxu0 0.0
        %1415 = vmatpush2.msra.mxu0 0.0
        %1416 = vmatprep.subr.mxu0 0.0
        %1417 = vmatpush2.msra.mxu0 0.0
        %1418 = vmatprep.subr.mxu0 0.0
        %1419 = vmatpush2.msra.mxu0 0.0
        %1420 = vmatprep.subr.mxu0 0.0
        %1421 = vmatpush2.msra.mxu0 0.0
        %1422 = vmatprep.subr.mxu0 0.0
        %1423 = vmatpush2.msra.mxu0 0.0
        %1424 = vmatprep.subr.mxu0 0.0
        %1425 = vmatpush2.msra.mxu0 0.0
        %1426 = vmatprep.subr.mxu0 0.0
        %1427 = vmatpush2.msra.mxu0 0.0
        %1428 = vmatprep.subr.mxu0 0.0
        %1429 = vmatpush2.msra.mxu0 0.0
        %1430 = vmatprep.mubr.f32.mxu0 0.0
        %1431 = vmatmul.mubr.f32.gmra.mxu0 %v270
        %v1432 = vpop.f32.mrf.mxu0
        %v1433 = vadd.f32 0.0, %v1432
        %v1434 = vpop.f32.mrf.mxu0
        %1435 = vmatprep.mubr.f32.mxu0 0.0
        %1436 = vmatmul.mubr.f32.gmra.mxu0 %v273
        %v1437 = vpop.f32.mrf.mxu0
        %v1438 = vadd.f32 0.0, %v1437
        %v1439 = vpop.f32.mrf.mxu0
        %1440 = vdwg.mxu0
        %1441 = vmatprep.subr.mxu0 0.0
        %1442 = vmatpush1.msra.mxu0 0.0
        %1443 = vmatprep.subr.mxu0 0.0
        %1444 = vmatpush1.msra.mxu0 0.0
        %1445 = vmatprep.subr.mxu0 0.0
        %1446 = vmatpush1.msra.mxu0 0.0
        %1447 = vmatprep.subr.mxu0 0.0
        %1448 = vmatpush1.msra.mxu0 0.0
        %1449 = vmatprep.subr.mxu0 0.0
        %1450 = vmatpush1.msra.mxu0 0.0
        %1451 = vmatprep.subr.mxu0 0.0
        %1452 = vmatpush1.msra.mxu0 0.0
        %1453 = vmatprep.subr.mxu0 0.0
        %1454 = vmatpush1.msra.mxu0 0.0
        %1455 = vmatprep.subr.mxu0 0.0
        %1456 = vmatpush1.msra.mxu0 0.0
        %1457 = vmatprep.subr.mxu0 0.0
        %1458 = vmatpush1.msra.mxu0 0.0
        %1459 = vmatprep.subr.mxu0 0.0
        %1460 = vmatpush1.msra.mxu0 0.0
        %1461 = vmatprep.subr.mxu0 0.0
        %1462 = vmatpush1.msra.mxu0 0.0
        %1463 = vmatprep.subr.mxu0 0.0
        %1464 = vmatpush1.msra.mxu0 0.0
        %1465 = vmatprep.subr.mxu0 0.0
        %1466 = vmatpush1.msra.mxu0 0.0
        %1467 = vmatprep.subr.mxu0 0.0
        %1468 = vmatpush1.msra.mxu0 0.0
        %1469 = vmatprep.subr.mxu0 0.0
        %1470 = vmatpush1.msra.mxu0 %v1438
        %1471 = vmatprep.subr.mxu0 0.0
        %1472 = vmatpush1.msra.mxu0 %v1433
        %1473 = vmatprep.subr.mxu0 0.0
        %1474 = vmatpush2.msra.mxu0 0.0
        %1475 = vmatprep.subr.mxu0 0.0
        %1476 = vmatpush2.msra.mxu0 0.0
        %1477 = vmatprep.subr.mxu0 0.0
        %1478 = vmatpush2.msra.mxu0 0.0
        %1479 = vmatprep.subr.mxu0 0.0
        %1480 = vmatpush2.msra.mxu0 0.0
        %1481 = vmatprep.subr.mxu0 0.0
        %1482 = vmatpush2.msra.mxu0 0.0
        %1483 = vmatprep.subr.mxu0 0.0
        %1484 = vmatpush2.msra.mxu0 0.0
        %1485 = vmatprep.subr.mxu0 0.0
        %1486 = vmatpush2.msra.mxu0 0.0
        %1487 = vmatprep.subr.mxu0 0.0
        %1488 = vmatpush2.msra.mxu0 0.0
        %1489 = vmatprep.subr.mxu0 0.0
        %1490 = vmatpush2.msra.mxu0 0.0
        %1491 = vmatprep.subr.mxu0 0.0
        %1492 = vmatpush2.msra.mxu0 0.0
        %1493 = vmatprep.subr.mxu0 0.0
        %1494 = vmatpush2.msra.mxu0 0.0
        %1495 = vmatprep.subr.mxu0 0.0
        %1496 = vmatpush2.msra.mxu0 0.0
        %1497 = vmatprep.subr.mxu0 0.0
        %1498 = vmatpush2.msra.mxu0 0.0
        %1499 = vmatprep.subr.mxu0 0.0
        %1500 = vmatpush2.msra.mxu0 0.0
        %1501 = vmatprep.subr.mxu0 0.0
        %1502 = vmatpush2.msra.mxu0 0.0
        %1503 = vmatprep.subr.mxu0 0.0
        %1504 = vmatpush2.msra.mxu0 0.0
        %1505 = vmatprep.mubr.f32.mxu0 0.0
        %1506 = vmatmul.mubr.f32.gmra.mxu0 %v1294
        %v1507 = vpop.f32.mrf.mxu0
        %v1508 = vadd.f32 0.0, %v1507
        %v1509 = vpop.f32.mrf.mxu0
        %1510 = vdwg.mxu0
        %v1512 = vsel %vm1218, %v1257, 0
        %v1515 = vsel %vm1218, %v1258, 0
        %1517 = vmatprep.subr.mxu0 0.0
        %1518 = vmatpush1.xpose.msra.mxu0 0.0
        %1519 = vmatprep.subr.mxu0 0.0
        %1520 = vmatpush1.xpose.msra.mxu0 0.0
        %1521 = vmatprep.subr.mxu0 0.0
        %1522 = vmatpush1.xpose.msra.mxu0 0.0
        %1523 = vmatprep.subr.mxu0 0.0
        %1524 = vmatpush1.xpose.msra.mxu0 0.0
        %1525 = vmatprep.subr.mxu0 0.0
        %1526 = vmatpush1.xpose.msra.mxu0 0.0
        %1527 = vmatprep.subr.mxu0 0.0
        %1528 = vmatpush1.xpose.msra.mxu0 0.0
        %1529 = vmatprep.subr.mxu0 0.0
        %1530 = vmatpush1.xpose.msra.mxu0 0.0
        %1531 = vmatprep.subr.mxu0 0.0
        %1532 = vmatpush1.xpose.msra.mxu0 0.0
        %1533 = vmatprep.subr.mxu0 0.0
        %1534 = vmatpush1.xpose.msra.mxu0 0.0
        %1535 = vmatprep.subr.mxu0 0.0
        %1536 = vmatpush1.xpose.msra.mxu0 0.0
        %1537 = vmatprep.subr.mxu0 0.0
        %1538 = vmatpush1.xpose.msra.mxu0 0.0
        %1539 = vmatprep.subr.mxu0 0.0
        %1540 = vmatpush1.xpose.msra.mxu0 0.0
        %1541 = vmatprep.subr.mxu0 0.0
        %1542 = vmatpush1.xpose.msra.mxu0 0.0
        %1543 = vmatprep.subr.mxu0 0.0
        %1544 = vmatpush1.xpose.msra.mxu0 0.0
        %1545 = vmatprep.subr.mxu0 0.0
        %1546 = vmatpush1.xpose.msra.mxu0 %v1515
        %1547 = vmatprep.subr.mxu0 0.0
        %1548 = vmatpush1.xpose.msra.mxu0 %v1512
        %1549 = vmatprep.subr.mxu0 0.0
        %1550 = vmatpush2.xpose.msra.mxu0 0.0
        %1551 = vmatprep.subr.mxu0 0.0
        %1552 = vmatpush2.xpose.msra.mxu0 0.0
        %1553 = vmatprep.subr.mxu0 0.0
        %1554 = vmatpush2.xpose.msra.mxu0 0.0
        %1555 = vmatprep.subr.mxu0 0.0
        %1556 = vmatpush2.xpose.msra.mxu0 0.0
        %1557 = vmatprep.subr.mxu0 0.0
        %1558 = vmatpush2.xpose.msra.mxu0 0.0
        %1559 = vmatprep.subr.mxu0 0.0
        %1560 = vmatpush2.xpose.msra.mxu0 0.0
        %1561 = vmatprep.subr.mxu0 0.0
        %1562 = vmatpush2.xpose.msra.mxu0 0.0
        %1563 = vmatprep.subr.mxu0 0.0
        %1564 = vmatpush2.xpose.msra.mxu0 0.0
        %1565 = vmatprep.subr.mxu0 0.0
        %1566 = vmatpush2.xpose.msra.mxu0 0.0
        %1567 = vmatprep.subr.mxu0 0.0
        %1568 = vmatpush2.xpose.msra.mxu0 0.0
        %1569 = vmatprep.subr.mxu0 0.0
        %1570 = vmatpush2.xpose.msra.mxu0 0.0
        %1571 = vmatprep.subr.mxu0 0.0
        %1572 = vmatpush2.xpose.msra.mxu0 0.0
        %1573 = vmatprep.subr.mxu0 0.0
        %1574 = vmatpush2.xpose.msra.mxu0 0.0
        %1575 = vmatprep.subr.mxu0 0.0
        %1576 = vmatpush2.xpose.msra.mxu0 0.0
        %1577 = vmatprep.subr.mxu0 0.0
        %1578 = vmatpush2.xpose.msra.mxu0 0.0
        %1579 = vmatprep.subr.mxu0 0.0
        %1580 = vmatpush2.xpose.msra.mxu0 0.0
        %1581 = vmatprep.mubr.f32.mxu0 0.0
        %1582 = vmatmul.mubr.f32.gmra.mxu0 %v1512
        %v1583 = vpop.f32.mrf.mxu0
        %v1584 = vadd.f32 0.0, %v1583
        %v1585 = vpop.f32.mrf.mxu0
        %1586 = vmatprep.mubr.f32.mxu0 0.0
        %1587 = vmatmul.mubr.f32.gmra.mxu0 %v1515
        %v1588 = vpop.f32.mrf.mxu0
        %v1589 = vadd.f32 0.0, %v1588
        %v1590 = vpop.f32.mrf.mxu0
        %1591 = vdwg.mxu0
        %v1592 = vsub.f32 %v264, %v1584
        %v1593 = vsub.f32 %v265, %v1589
        %v1594 = vmul.f32 %v1592, %v1592
        %v1595 = vmul.f32 %v1593, %v1593
        %v1596 = vsel %vm268, %v1594, 0.0
        %v1597 = vsel %vm268, %v1595, 0.0
        %v1598 = vadd.f32 %v1596, %v1597
        %1599 = vadd.xlane.f32.xlu0 %v1598
        %v1600 = vpop.xlane.xlu0 %1599
        %v1601 = vrot.slane %v1600, 4
        %v1602 = vadd.f32 %v1600, %v1601
        %v1603 = vrot.slane %v1602, 2
        %v1604 = vadd.f32 %v1602, %v1603
        %v1605 = vrot.slane %v1604, 1
        %v1606 = vadd.f32 %v1604, %v1605
        %s1607 = vtos %v1606
        %v1608 = vsub.f32 0.0, %v1257
        %v1609 = vsub.f32 0.0, %v1258
        %v1610 = vadd.f32 %v1257, 1e-15
        %v1611 = vadd.f32 %v1258, 1e-15
        %v1612 = vlog2.pop %v1610
        %v1613 = vmul.f32 %v1612, 0.6931472
        %v1614 = vlog2.pop %v1611
        %v1615 = vmul.f32 %v1614, 0.6931472
        %v1616 = vmul.f32 %v1608, %v1613
        %v1617 = vmul.f32 %v1609, %v1615
        %v1618 = vsel %vm1218, %v1616, 0.0
        %v1619 = vsel %vm1218, %v1617, 0.0
        %v1620 = vadd.f32 %v1618, %v1619
        %1621 = vadd.xlane.f32.xlu0 %v1620
        %v1622 = vpop.xlane.xlu0 %1621
        %v1623 = vrot.slane %v1622, 4
        %v1624 = vadd.f32 %v1622, %v1623
        %v1625 = vrot.slane %v1624, 2
        %v1626 = vadd.f32 %v1624, %v1625
        %v1627 = vrot.slane %v1626, 1
        %v1628 = vadd.f32 %v1626, %v1627
        %s1629 = vtos %v1628
        %vm1630 = vcmask 388096
        %v1631 = vsel %vm1630, %v1363, -inf
        %v1632 = vrot.slane %v1631, 4
        %v1633 = vmax.f32 %v1631, %v1632
        %v1634 = vrot.slane %v1633, 2
        %v1635 = vmax.f32 %v1633, %v1634
        %v1636 = vrot.slane %v1635, 1
        %v1637 = vmax.f32 %v1635, %v1636
        %v1639 = vsel %vm1218, %v1508, 0
        %v1642 = vsel %vm1130, 1.0, 0
        %1644 = vmatprep.subr.mxu0 0.0
        %1645 = vmatpush1.msra.mxu0 0.0
        %1646 = vmatprep.subr.mxu0 0.0
        %1647 = vmatpush1.msra.mxu0 0.0
        %1648 = vmatprep.subr.mxu0 0.0
        %1649 = vmatpush1.msra.mxu0 0.0
        %1650 = vmatprep.subr.mxu0 0.0
        %1651 = vmatpush1.msra.mxu0 0.0
        %1652 = vmatprep.subr.mxu0 0.0
        %1653 = vmatpush1.msra.mxu0 0.0
        %1654 = vmatprep.subr.mxu0 0.0
        %1655 = vmatpush1.msra.mxu0 0.0
        %1656 = vmatprep.subr.mxu0 0.0
        %1657 = vmatpush1.msra.mxu0 0.0
        %1658 = vmatprep.subr.mxu0 0.0
        %1659 = vmatpush1.msra.mxu0 0.0
        %1660 = vmatprep.subr.mxu0 0.0
        %1661 = vmatpush1.msra.mxu0 0.0
        %1662 = vmatprep.subr.mxu0 0.0
        %1663 = vmatpush1.msra.mxu0 0.0
        %1664 = vmatprep.subr.mxu0 0.0
        %1665 = vmatpush1.msra.mxu0 0.0
        %1666 = vmatprep.subr.mxu0 0.0
        %1667 = vmatpush1.msra.mxu0 0.0
        %1668 = vmatprep.subr.mxu0 0.0
        %1669 = vmatpush1.msra.mxu0 0.0
        %1670 = vmatprep.subr.mxu0 0.0
        %1671 = vmatpush1.msra.mxu0 0.0
        %1672 = vmatprep.subr.mxu0 0.0
        %1673 = vmatpush1.msra.mxu0 0.0
        %1674 = vmatprep.subr.mxu0 0.0
        %1675 = vmatpush1.msra.mxu0 %v1642
        %1676 = vmatprep.subr.mxu0 0.0
        %1677 = vmatpush2.msra.mxu0 0.0
        %1678 = vmatprep.subr.mxu0 0.0
        %1679 = vmatpush2.msra.mxu0 0.0
        %1680 = vmatprep.subr.mxu0 0.0
        %1681 = vmatpush2.msra.mxu0 0.0
        %1682 = vmatprep.subr.mxu0 0.0
        %1683 = vmatpush2.msra.mxu0 0.0
        %1684 = vmatprep.subr.mxu0 0.0
        %1685 = vmatpush2.msra.mxu0 0.0
        %1686 = vmatprep.subr.mxu0 0.0
        %1687 = vmatpush2.msra.mxu0 0.0
        %1688 = vmatprep.subr.mxu0 0.0
        %1689 = vmatpush2.msra.mxu0 0.0
        %1690 = vmatprep.subr.mxu0 0.0
        %1691 = vmatpush2.msra.mxu0 0.0
        %1692 = vmatprep.subr.mxu0 0.0
        %1693 = vmatpush2.msra.mxu0 0.0
        %1694 = vmatprep.subr.mxu0 0.0
        %1695 = vmatpush2.msra.mxu0 0.0
        %1696 = vmatprep.subr.mxu0 0.0
        %1697 = vmatpush2.msra.mxu0 0.0
        %1698 = vmatprep.subr.mxu0 0.0
        %1699 = vmatpush2.msra.mxu0 0.0
        %1700 = vmatprep.subr.mxu0 0.0
        %1701 = vmatpush2.msra.mxu0 0.0
        %1702 = vmatprep.subr.mxu0 0.0
        %1703 = vmatpush2.msra.mxu0 0.0
        %1704 = vmatprep.subr.mxu0 0.0
        %1705 = vmatpush2.msra.mxu0 0.0
        %1706 = vmatprep.subr.mxu0 0.0
        %1707 = vmatpush2.msra.mxu0 0.0
        %1708 = vmatprep.mubr.f32.mxu0 0.0
        %1709 = vmatmul.mubr.f32.gmra.mxu0 %v1639
        %v1710 = vpop.f32.mrf.mxu0
        %v1711 = vadd.f32 0.0, %v1710
        %v1712 = vpop.f32.mrf.mxu0
        %1713 = vdwg.mxu0
        %v1714 = vmax.f32 %v1711, 1.0
        %v1715 = vrcp.pop %v1714
        %v1716 = vmul.f32 1.0, %v1715
        %v1718 = vsel %vm1130, %v1363, 0
        %1720 = vmatprep.subr.mxu0 0.0
        %1721 = vmatpush1.msra.mxu0 0.0
        %1722 = vmatprep.subr.mxu0 0.0
        %1723 = vmatpush1.msra.mxu0 0.0
        %1724 = vmatprep.subr.mxu0 0.0
        %1725 = vmatpush1.msra.mxu0 0.0
        %1726 = vmatprep.subr.mxu0 0.0
        %1727 = vmatpush1.msra.mxu0 0.0
        %1728 = vmatprep.subr.mxu0 0.0
        %1729 = vmatpush1.msra.mxu0 0.0
        %1730 = vmatprep.subr.mxu0 0.0
        %1731 = vmatpush1.msra.mxu0 0.0
        %1732 = vmatprep.subr.mxu0 0.0
        %1733 = vmatpush1.msra.mxu0 0.0
        %1734 = vmatprep.subr.mxu0 0.0
        %1735 = vmatpush1.msra.mxu0 0.0
        %1736 = vmatprep.subr.mxu0 0.0
        %1737 = vmatpush1.msra.mxu0 0.0
        %1738 = vmatprep.subr.mxu0 0.0
        %1739 = vmatpush1.msra.mxu0 0.0
        %1740 = vmatprep.subr.mxu0 0.0
        %1741 = vmatpush1.msra.mxu0 0.0
        %1742 = vmatprep.subr.mxu0 0.0
        %1743 = vmatpush1.msra.mxu0 0.0
        %1744 = vmatprep.subr.mxu0 0.0
        %1745 = vmatpush1.msra.mxu0 0.0
        %1746 = vmatprep.subr.mxu0 0.0
        %1747 = vmatpush1.msra.mxu0 0.0
        %1748 = vmatprep.subr.mxu0 0.0
        %1749 = vmatpush1.msra.mxu0 0.0
        %1750 = vmatprep.subr.mxu0 0.0
        %1751 = vmatpush1.msra.mxu0 %v1718
        %1752 = vmatprep.subr.mxu0 0.0
        %1753 = vmatpush2.msra.mxu0 0.0
        %1754 = vmatprep.subr.mxu0 0.0
        %1755 = vmatpush2.msra.mxu0 0.0
        %1756 = vmatprep.subr.mxu0 0.0
        %1757 = vmatpush2.msra.mxu0 0.0
        %1758 = vmatprep.subr.mxu0 0.0
        %1759 = vmatpush2.msra.mxu0 0.0
        %1760 = vmatprep.subr.mxu0 0.0
        %1761 = vmatpush2.msra.mxu0 0.0
        %1762 = vmatprep.subr.mxu0 0.0
        %1763 = vmatpush2.msra.mxu0 0.0
        %1764 = vmatprep.subr.mxu0 0.0
        %1765 = vmatpush2.msra.mxu0 0.0
        %1766 = vmatprep.subr.mxu0 0.0
        %1767 = vmatpush2.msra.mxu0 0.0
        %1768 = vmatprep.subr.mxu0 0.0
        %1769 = vmatpush2.msra.mxu0 0.0
        %1770 = vmatprep.subr.mxu0 0.0
        %1771 = vmatpush2.msra.mxu0 0.0
        %1772 = vmatprep.subr.mxu0 0.0
        %1773 = vmatpush2.msra.mxu0 0.0
        %1774 = vmatprep.subr.mxu0 0.0
        %1775 = vmatpush2.msra.mxu0 0.0
        %1776 = vmatprep.subr.mxu0 0.0
        %1777 = vmatpush2.msra.mxu0 0.0
        %1778 = vmatprep.subr.mxu0 0.0
        %1779 = vmatpush2.msra.mxu0 0.0
        %1780 = vmatprep.subr.mxu0 0.0
        %1781 = vmatpush2.msra.mxu0 0.0
        %1782 = vmatprep.subr.mxu0 0.0
        %1783 = vmatpush2.msra.mxu0 0.0
        %1784 = vmatprep.mubr.f32.mxu0 0.0
        %1785 = vmatmul.mubr.f32.gmra.mxu0 %v1639
        %v1786 = vpop.f32.mrf.mxu0
        %v1787 = vadd.f32 0.0, %v1786
        %v1788 = vpop.f32.mrf.mxu0
        %1789 = vdwg.mxu0
        %1791 = vset.pattern.permute.xlu0 0
        %1792 = vperm.xlu0 %1791, %v1716
        %v1793 = vpop.permute.xlu0 %1792
        %v1795 = vmul.f32 %v1787, %v1793
        %1796 = vrot.lane.b32.xlu0 %v1363, 48
        %v1797 = vpop.permute.xlu0 %1796
        %vm1799 = vcmask 392192
        %v1800 = vsel %vm1799, %v1795, %v1797
        %v1801 = vld [vmem:[%s3 + $0xe8] sm:$0xff]
        %v1802 = vld [vmem:[%s3 + $0xf0] sm:$0xff]
        %v1803 = vld [vmem:[%s3 + $0xf8] sm:$0xff]
        %v1804 = vld [vmem:[%s3 + $0x100] sm:$0xff]
        %v1805 = vld [vmem:[%s3 + $0x108] sm:$0xff]
        %v1806 = vld [vmem:[%s3 + $0x110] sm:$0xff]
        %v1807 = vld [vmem:[%s3 + $0x118] sm:$0xff]
        %v1808 = vld [vmem:[%s3 + $0x120] sm:$0xff]
        %v1809 = vld [vmem:[%s3 + $0x128] sm:$0xff]
        %v1810 = vld [vmem:[%s3 + $0x130] sm:$0xff]
        %v1811 = vld [vmem:[%s3 + $0x138] sm:$0xff]
        %v1812 = vld [vmem:[%s3 + $0x140] sm:$0xff]
        %v1813 = vld [vmem:[%s4 + $0x8] sm:$0x1]
        %v1814 = vlaneseq
        %v1815 = vshrl.u32 %v1814, 7
        %v1816 = vsub.s32 0, %v1815
        %v1817 = vrot.slane %v1813, %v1816
        %vm1818 = vcmask 785408
        %v1820 = vsel %vm1818, %v1800, 0
        %1822 = vmatprep.subr.mxu0 0.0
        %1823 = vmatpush1.msra.mxu0 0.0
        %1824 = vmatprep.subr.mxu0 0.0
        %1825 = vmatpush1.msra.mxu0 0.0
        %1826 = vmatprep.subr.mxu0 0.0
        %1827 = vmatpush1.msra.mxu0 0.0
        %1828 = vmatprep.subr.mxu0 0.0
        %1829 = vmatpush1.msra.mxu0 0.0
        %1830 = vmatprep.subr.mxu0 0.0
        %1831 = vmatpush1.msra.mxu0 %v1812
        %1832 = vmatprep.subr.mxu0 0.0
        %1833 = vmatpush1.msra.mxu0 %v1811
        %1834 = vmatprep.subr.mxu0 0.0
        %1835 = vmatpush1.msra.mxu0 %v1810
        %1836 = vmatprep.subr.mxu0 0.0
        %1837 = vmatpush1.msra.mxu0 %v1809
        %1838 = vmatprep.subr.mxu0 0.0
        %1839 = vmatpush1.msra.mxu0 %v1808
        %1840 = vmatprep.subr.mxu0 0.0
        %1841 = vmatpush1.msra.mxu0 %v1807
        %1842 = vmatprep.subr.mxu0 0.0
        %1843 = vmatpush1.msra.mxu0 %v1806
        %1844 = vmatprep.subr.mxu0 0.0
        %1845 = vmatpush1.msra.mxu0 %v1805
        %1846 = vmatprep.subr.mxu0 0.0
        %1847 = vmatpush1.msra.mxu0 %v1804
        %1848 = vmatprep.subr.mxu0 0.0
        %1849 = vmatpush1.msra.mxu0 %v1803
        %1850 = vmatprep.subr.mxu0 0.0
        %1851 = vmatpush1.msra.mxu0 %v1802
        %1852 = vmatprep.subr.mxu0 0.0
        %1853 = vmatpush1.msra.mxu0 %v1801
        %1854 = vmatprep.subr.mxu0 0.0
        %1855 = vmatpush2.msra.mxu0 0.0
        %1856 = vmatprep.subr.mxu0 0.0
        %1857 = vmatpush2.msra.mxu0 0.0
        %1858 = vmatprep.subr.mxu0 0.0
        %1859 = vmatpush2.msra.mxu0 0.0
        %1860 = vmatprep.subr.mxu0 0.0
        %1861 = vmatpush2.msra.mxu0 0.0
        %1862 = vmatprep.subr.mxu0 0.0
        %1863 = vmatpush2.msra.mxu0 0.0
        %1864 = vmatprep.subr.mxu0 0.0
        %1865 = vmatpush2.msra.mxu0 0.0
        %1866 = vmatprep.subr.mxu0 0.0
        %1867 = vmatpush2.msra.mxu0 0.0
        %1868 = vmatprep.subr.mxu0 0.0
        %1869 = vmatpush2.msra.mxu0 0.0
        %1870 = vmatprep.subr.mxu0 0.0
        %1871 = vmatpush2.msra.mxu0 0.0
        %1872 = vmatprep.subr.mxu0 0.0
        %1873 = vmatpush2.msra.mxu0 0.0
        %1874 = vmatprep.subr.mxu0 0.0
        %1875 = vmatpush2.msra.mxu0 0.0
        %1876 = vmatprep.subr.mxu0 0.0
        %1877 = vmatpush2.msra.mxu0 0.0
        %1878 = vmatprep.subr.mxu0 0.0
        %1879 = vmatpush2.msra.mxu0 0.0
        %1880 = vmatprep.subr.mxu0 0.0
        %1881 = vmatpush2.msra.mxu0 0.0
        %1882 = vmatprep.subr.mxu0 0.0
        %1883 = vmatpush2.msra.mxu0 0.0
        %1884 = vmatprep.subr.mxu0 0.0
        %1885 = vmatpush2.msra.mxu0 0.0
        %1886 = vmatprep.mubr.f32.mxu0 0.0
        %1887 = vmatmul.mubr.f32.gmra.mxu0 %v1820
        %v1888 = vpop.f32.mrf.mxu0
        %v1889 = vadd.f32 %v1817, %v1888
        %v1890 = vpop.f32.mrf.mxu0
        %1891 = vdwg.mxu0
        %v1892 = vmax.f32 %v1889, 0.0
        %v1893 = vld [vmem:[%s4 + $0x9] sm:$0x1]
        %v1894 = vlaneseq
        %v1895 = vshrl.u32 %v1894, 7
        %v1896 = vsub.s32 0, %v1895
        %v1897 = vrot.slane %v1893, %v1896
        %v1898 = vmul.f32 %v1892, %v1897
        %v1899 = vld [vmem:[%s4 + $0xa] sm:$0x1]
        %v1900 = vlaneseq
        %v1901 = vshrl.u32 %v1900, 7
        %v1902 = vsub.s32 0, %v1901
        %v1903 = vrot.slane %v1899, %v1902
        %v1904 = vadd.f32 %v1898, %v1903
        %v1906 = vsel %vm1130, %v1904, 0
        %1908 = vmatprep.subr.mxu0 0.0
        %1909 = vmatpush1.msra.mxu0 0.0
        %1910 = vmatprep.subr.mxu0 0.0
        %1911 = vmatpush1.msra.mxu0 0.0
        %1912 = vmatprep.subr.mxu0 0.0
        %1913 = vmatpush1.msra.mxu0 0.0
        %1914 = vmatprep.subr.mxu0 0.0
        %1915 = vmatpush1.msra.mxu0 0.0
        %1916 = vmatprep.subr.mxu0 0.0
        %1917 = vmatpush1.msra.mxu0 0.0
        %1918 = vmatprep.subr.mxu0 0.0
        %1919 = vmatpush1.msra.mxu0 0.0
        %1920 = vmatprep.subr.mxu0 0.0
        %1921 = vmatpush1.msra.mxu0 0.0
        %1922 = vmatprep.subr.mxu0 0.0
        %1923 = vmatpush1.msra.mxu0 0.0
        %1924 = vmatprep.subr.mxu0 0.0
        %1925 = vmatpush1.msra.mxu0 0.0
        %1926 = vmatprep.subr.mxu0 0.0
        %1927 = vmatpush1.msra.mxu0 0.0
        %1928 = vmatprep.subr.mxu0 0.0
        %1929 = vmatpush1.msra.mxu0 0.0
        %1930 = vmatprep.subr.mxu0 0.0
        %1931 = vmatpush1.msra.mxu0 0.0
        %1932 = vmatprep.subr.mxu0 0.0
        %1933 = vmatpush1.msra.mxu0 0.0
        %1934 = vmatprep.subr.mxu0 0.0
        %1935 = vmatpush1.msra.mxu0 0.0
        %1936 = vmatprep.subr.mxu0 0.0
        %1937 = vmatpush1.msra.mxu0 0.0
        %1938 = vmatprep.subr.mxu0 0.0
        %1939 = vmatpush1.msra.mxu0 %v1906
        %1940 = vmatprep.subr.mxu0 0.0
        %1941 = vmatpush2.msra.mxu0 0.0
        %1942 = vmatprep.subr.mxu0 0.0
        %1943 = vmatpush2.msra.mxu0 0.0
        %1944 = vmatprep.subr.mxu0 0.0
        %1945 = vmatpush2.msra.mxu0 0.0
        %1946 = vmatprep.subr.mxu0 0.0
        %1947 = vmatpush2.msra.mxu0 0.0
        %1948 = vmatprep.subr.mxu0 0.0
        %1949 = vmatpush2.msra.mxu0 0.0
        %1950 = vmatprep.subr.mxu0 0.0
        %1951 = vmatpush2.msra.mxu0 0.0
        %1952 = vmatprep.subr.mxu0 0.0
        %1953 = vmatpush2.msra.mxu0 0.0
        %1954 = vmatprep.subr.mxu0 0.0
        %1955 = vmatpush2.msra.mxu0 0.0
        %1956 = vmatprep.subr.mxu0 0.0
        %1957 = vmatpush2.msra.mxu0 0.0
        %1958 = vmatprep.subr.mxu0 0.0
        %1959 = vmatpush2.msra.mxu0 0.0
        %1960 = vmatprep.subr.mxu0 0.0
        %1961 = vmatpush2.msra.mxu0 0.0
        %1962 = vmatprep.subr.mxu0 0.0
        %1963 = vmatpush2.msra.mxu0 0.0
        %1964 = vmatprep.subr.mxu0 0.0
        %1965 = vmatpush2.msra.mxu0 0.0
        %1966 = vmatprep.subr.mxu0 0.0
        %1967 = vmatpush2.msra.mxu0 0.0
        %1968 = vmatprep.subr.mxu0 0.0
        %1969 = vmatpush2.msra.mxu0 0.0
        %1970 = vmatprep.subr.mxu0 0.0
        %1971 = vmatpush2.msra.mxu0 0.0
        %1972 = vmatprep.mubr.f32.mxu0 0.0
        %1973 = vmatmul.mubr.f32.gmra.mxu0 %v1639
        %v1974 = vpop.f32.mrf.mxu0
        %v1975 = vadd.f32 0.0, %v1974
        %v1976 = vpop.f32.mrf.mxu0
        %1977 = vdwg.mxu0
        %v1978 = vmul.f32 %v1975, %v1793
        %1979 = vrot.lane.b32.xlu0 %v1904, 32
        %v1980 = vpop.permute.xlu0 %1979
        %v1982 = vsel %vm655, %v1978, %v1980
        %v1983 = vld [vmem:[%s3 + $0x148] sm:$0xff]
        %v1984 = vld [vmem:[%s3 + $0x150] sm:$0xff]
        %v1985 = vld [vmem:[%s3 + $0x158] sm:$0xff]
        %v1986 = vld [vmem:[%s3 + $0x160] sm:$0xff]
        %v1987 = vld [vmem:[%s3 + $0x168] sm:$0xff]
        %v1988 = vld [vmem:[%s3 + $0x170] sm:$0xff]
        %v1989 = vld [vmem:[%s3 + $0x178] sm:$0xff]
        %v1990 = vld [vmem:[%s3 + $0x180] sm:$0xff]
        %v1991 = vld [vmem:[%s4 + $0xb] sm:$0x1]
        %v1992 = vlaneseq
        %v1993 = vshrl.u32 %v1992, 7
        %v1994 = vsub.s32 0, %v1993
        %v1995 = vrot.slane %v1991, %v1994
        %v1997 = vsel %vm671, %v1982, 0
        %1999 = vmatprep.subr.mxu0 0.0
        %2000 = vmatpush1.msra.mxu0 0.0
        %2001 = vmatprep.subr.mxu0 0.0
        %2002 = vmatpush1.msra.mxu0 0.0
        %2003 = vmatprep.subr.mxu0 0.0
        %2004 = vmatpush1.msra.mxu0 0.0
        %2005 = vmatprep.subr.mxu0 0.0
        %2006 = vmatpush1.msra.mxu0 0.0
        %2007 = vmatprep.subr.mxu0 0.0
        %2008 = vmatpush1.msra.mxu0 0.0
        %2009 = vmatprep.subr.mxu0 0.0
        %2010 = vmatpush1.msra.mxu0 0.0
        %2011 = vmatprep.subr.mxu0 0.0
        %2012 = vmatpush1.msra.mxu0 0.0
        %2013 = vmatprep.subr.mxu0 0.0
        %2014 = vmatpush1.msra.mxu0 0.0
        %2015 = vmatprep.subr.mxu0 0.0
        %2016 = vmatpush1.msra.mxu0 %v1990
        %2017 = vmatprep.subr.mxu0 0.0
        %2018 = vmatpush1.msra.mxu0 %v1989
        %2019 = vmatprep.subr.mxu0 0.0
        %2020 = vmatpush1.msra.mxu0 %v1988
        %2021 = vmatprep.subr.mxu0 0.0
        %2022 = vmatpush1.msra.mxu0 %v1987
        %2023 = vmatprep.subr.mxu0 0.0
        %2024 = vmatpush1.msra.mxu0 %v1986
        %2025 = vmatprep.subr.mxu0 0.0
        %2026 = vmatpush1.msra.mxu0 %v1985
        %2027 = vmatprep.subr.mxu0 0.0
        %2028 = vmatpush1.msra.mxu0 %v1984
        %2029 = vmatprep.subr.mxu0 0.0
        %2030 = vmatpush1.msra.mxu0 %v1983
        %2031 = vmatprep.subr.mxu0 0.0
        %2032 = vmatpush2.msra.mxu0 0.0
        %2033 = vmatprep.subr.mxu0 0.0
        %2034 = vmatpush2.msra.mxu0 0.0
        %2035 = vmatprep.subr.mxu0 0.0
        %2036 = vmatpush2.msra.mxu0 0.0
        %2037 = vmatprep.subr.mxu0 0.0
        %2038 = vmatpush2.msra.mxu0 0.0
        %2039 = vmatprep.subr.mxu0 0.0
        %2040 = vmatpush2.msra.mxu0 0.0
        %2041 = vmatprep.subr.mxu0 0.0
        %2042 = vmatpush2.msra.mxu0 0.0
        %2043 = vmatprep.subr.mxu0 0.0
        %2044 = vmatpush2.msra.mxu0 0.0
        %2045 = vmatprep.subr.mxu0 0.0
        %2046 = vmatpush2.msra.mxu0 0.0
        %2047 = vmatprep.subr.mxu0 0.0
        %2048 = vmatpush2.msra.mxu0 0.0
        %2049 = vmatprep.subr.mxu0 0.0
        %2050 = vmatpush2.msra.mxu0 0.0
        %2051 = vmatprep.subr.mxu0 0.0
        %2052 = vmatpush2.msra.mxu0 0.0
        %2053 = vmatprep.subr.mxu0 0.0
        %2054 = vmatpush2.msra.mxu0 0.0
        %2055 = vmatprep.subr.mxu0 0.0
        %2056 = vmatpush2.msra.mxu0 0.0
        %2057 = vmatprep.subr.mxu0 0.0
        %2058 = vmatpush2.msra.mxu0 0.0
        %2059 = vmatprep.subr.mxu0 0.0
        %2060 = vmatpush2.msra.mxu0 0.0
        %2061 = vmatprep.subr.mxu0 0.0
        %2062 = vmatpush2.msra.mxu0 0.0
        %2063 = vmatprep.mubr.f32.mxu0 0.0
        %2064 = vmatmul.mubr.f32.gmra.mxu0 %v1997
        %v2065 = vpop.f32.mrf.mxu0
        %v2066 = vadd.f32 %v1995, %v2065
        %v2067 = vpop.f32.mrf.mxu0
        %2068 = vdwg.mxu0
        %v2069 = vmax.f32 %v2066, 0.0
        %v2070 = vld [vmem:[%s4 + $0xc] sm:$0x1]
        %v2071 = vlaneseq
        %v2072 = vshrl.u32 %v2071, 7
        %v2073 = vsub.s32 0, %v2072
        %v2074 = vrot.slane %v2070, %v2073
        %v2075 = vmul.f32 %v2069, %v2074
        %v2076 = vld [vmem:[%s4 + $0xd] sm:$0x1]
        %v2077 = vlaneseq
        %v2078 = vshrl.u32 %v2077, 7
        %v2079 = vsub.s32 0, %v2078
        %v2080 = vrot.slane %v2076, %v2079
        %v2081 = vadd.f32 %v2075, %v2080
        %v2083 = vsel %vm1130, %v2081, 0
        %2085 = vmatprep.subr.mxu0 0.0
        %2086 = vmatpush1.msra.mxu0 0.0
        %2087 = vmatprep.subr.mxu0 0.0
        %2088 = vmatpush1.msra.mxu0 0.0
        %2089 = vmatprep.subr.mxu0 0.0
        %2090 = vmatpush1.msra.mxu0 0.0
        %2091 = vmatprep.subr.mxu0 0.0
        %2092 = vmatpush1.msra.mxu0 0.0
        %2093 = vmatprep.subr.mxu0 0.0
        %2094 = vmatpush1.msra.mxu0 0.0
        %2095 = vmatprep.subr.mxu0 0.0
        %2096 = vmatpush1.msra.mxu0 0.0
        %2097 = vmatprep.subr.mxu0 0.0
        %2098 = vmatpush1.msra.mxu0 0.0
        %2099 = vmatprep.subr.mxu0 0.0
        %2100 = vmatpush1.msra.mxu0 0.0
        %2101 = vmatprep.subr.mxu0 0.0
        %2102 = vmatpush1.msra.mxu0 0.0
        %2103 = vmatprep.subr.mxu0 0.0
        %2104 = vmatpush1.msra.mxu0 0.0
        %2105 = vmatprep.subr.mxu0 0.0
        %2106 = vmatpush1.msra.mxu0 0.0
        %2107 = vmatprep.subr.mxu0 0.0
        %2108 = vmatpush1.msra.mxu0 0.0
        %2109 = vmatprep.subr.mxu0 0.0
        %2110 = vmatpush1.msra.mxu0 0.0
        %2111 = vmatprep.subr.mxu0 0.0
        %2112 = vmatpush1.msra.mxu0 0.0
        %2113 = vmatprep.subr.mxu0 0.0
        %2114 = vmatpush1.msra.mxu0 0.0
        %2115 = vmatprep.subr.mxu0 0.0
        %2116 = vmatpush1.msra.mxu0 %v2083
        %2117 = vmatprep.subr.mxu0 0.0
        %2118 = vmatpush2.msra.mxu0 0.0
        %2119 = vmatprep.subr.mxu0 0.0
        %2120 = vmatpush2.msra.mxu0 0.0
        %2121 = vmatprep.subr.mxu0 0.0
        %2122 = vmatpush2.msra.mxu0 0.0
        %2123 = vmatprep.subr.mxu0 0.0
        %2124 = vmatpush2.msra.mxu0 0.0
        %2125 = vmatprep.subr.mxu0 0.0
        %2126 = vmatpush2.msra.mxu0 0.0
        %2127 = vmatprep.subr.mxu0 0.0
        %2128 = vmatpush2.msra.mxu0 0.0
        %2129 = vmatprep.subr.mxu0 0.0
        %2130 = vmatpush2.msra.mxu0 0.0
        %2131 = vmatprep.subr.mxu0 0.0
        %2132 = vmatpush2.msra.mxu0 0.0
        %2133 = vmatprep.subr.mxu0 0.0
        %2134 = vmatpush2.msra.mxu0 0.0
        %2135 = vmatprep.subr.mxu0 0.0
        %2136 = vmatpush2.msra.mxu0 0.0
        %2137 = vmatprep.subr.mxu0 0.0
        %2138 = vmatpush2.msra.mxu0 0.0
        %2139 = vmatprep.subr.mxu0 0.0
        %2140 = vmatpush2.msra.mxu0 0.0
        %2141 = vmatprep.subr.mxu0 0.0
        %2142 = vmatpush2.msra.mxu0 0.0
        %2143 = vmatprep.subr.mxu0 0.0
        %2144 = vmatpush2.msra.mxu0 0.0
        %2145 = vmatprep.subr.mxu0 0.0
        %2146 = vmatpush2.msra.mxu0 0.0
        %2147 = vmatprep.subr.mxu0 0.0
        %2148 = vmatpush2.msra.mxu0 0.0
        %2149 = vmatprep.mubr.f32.mxu0 0.0
        %2150 = vmatmul.mubr.f32.gmra.mxu0 %v1639
        %v2151 = vpop.f32.mrf.mxu0
        %v2152 = vadd.f32 0.0, %v2151
        %v2153 = vpop.f32.mrf.mxu0
        %2154 = vdwg.mxu0
        %v2155 = vmul.f32 %v2152, %v1793
        %2156 = vrot.lane.b32.xlu0 %v2081, 32
        %v2157 = vpop.permute.xlu0 %2156
        %v2159 = vsel %vm655, %v2155, %v2157
        %v2160 = vld [vmem:[%s3 + $0x188] sm:$0xff]
        %v2161 = vld [vmem:[%s3 + $0x190] sm:$0xff]
        %v2162 = vld [vmem:[%s3 + $0x198] sm:$0xff]
        %v2163 = vld [vmem:[%s3 + $0x1a0] sm:$0xff]
        %v2164 = vld [vmem:[%s3 + $0x1a8] sm:$0xff]
        %v2165 = vld [vmem:[%s3 + $0x1b0] sm:$0xff]
        %v2166 = vld [vmem:[%s3 + $0x1b8] sm:$0xff]
        %v2167 = vld [vmem:[%s3 + $0x1c0] sm:$0xff]
        %v2168 = vld [vmem:[%s4 + $0xe] sm:$0x1]
        %v2169 = vlaneseq
        %v2170 = vshrl.u32 %v2169, 7
        %v2171 = vsub.s32 0, %v2170
        %v2172 = vrot.slane %v2168, %v2171
        %v2174 = vsel %vm671, %v2159, 0
        %2176 = vmatprep.subr.mxu0 0.0
        %2177 = vmatpush1.msra.mxu0 0.0
        %2178 = vmatprep.subr.mxu0 0.0
        %2179 = vmatpush1.msra.mxu0 0.0
        %2180 = vmatprep.subr.mxu0 0.0
        %2181 = vmatpush1.msra.mxu0 0.0
        %2182 = vmatprep.subr.mxu0 0.0
        %2183 = vmatpush1.msra.mxu0 0.0
        %2184 = vmatprep.subr.mxu0 0.0
        %2185 = vmatpush1.msra.mxu0 0.0
        %2186 = vmatprep.subr.mxu0 0.0
        %2187 = vmatpush1.msra.mxu0 0.0
        %2188 = vmatprep.subr.mxu0 0.0
        %2189 = vmatpush1.msra.mxu0 0.0
        %2190 = vmatprep.subr.mxu0 0.0
        %2191 = vmatpush1.msra.mxu0 0.0
        %2192 = vmatprep.subr.mxu0 0.0
        %2193 = vmatpush1.msra.mxu0 %v2167
        %2194 = vmatprep.subr.mxu0 0.0
        %2195 = vmatpush1.msra.mxu0 %v2166
        %2196 = vmatprep.subr.mxu0 0.0
        %2197 = vmatpush1.msra.mxu0 %v2165
        %2198 = vmatprep.subr.mxu0 0.0
        %2199 = vmatpush1.msra.mxu0 %v2164
        %2200 = vmatprep.subr.mxu0 0.0
        %2201 = vmatpush1.msra.mxu0 %v2163
        %2202 = vmatprep.subr.mxu0 0.0
        %2203 = vmatpush1.msra.mxu0 %v2162
        %2204 = vmatprep.subr.mxu0 0.0
        %2205 = vmatpush1.msra.mxu0 %v2161
        %2206 = vmatprep.subr.mxu0 0.0
        %2207 = vmatpush1.msra.mxu0 %v2160
        %2208 = vmatprep.subr.mxu0 0.0
        %2209 = vmatpush2.msra.mxu0 0.0
        %2210 = vmatprep.subr.mxu0 0.0
        %2211 = vmatpush2.msra.mxu0 0.0
        %2212 = vmatprep.subr.mxu0 0.0
        %2213 = vmatpush2.msra.mxu0 0.0
        %2214 = vmatprep.subr.mxu0 0.0
        %2215 = vmatpush2.msra.mxu0 0.0
        %2216 = vmatprep.subr.mxu0 0.0
        %2217 = vmatpush2.msra.mxu0 0.0
        %2218 = vmatprep.subr.mxu0 0.0
        %2219 = vmatpush2.msra.mxu0 0.0
        %2220 = vmatprep.subr.mxu0 0.0
        %2221 = vmatpush2.msra.mxu0 0.0
        %2222 = vmatprep.subr.mxu0 0.0
        %2223 = vmatpush2.msra.mxu0 0.0
        %2224 = vmatprep.subr.mxu0 0.0
        %2225 = vmatpush2.msra.mxu0 0.0
        %2226 = vmatprep.subr.mxu0 0.0
        %2227 = vmatpush2.msra.mxu0 0.0
        %2228 = vmatprep.subr.mxu0 0.0
        %2229 = vmatpush2.msra.mxu0 0.0
        %2230 = vmatprep.subr.mxu0 0.0
        %2231 = vmatpush2.msra.mxu0 0.0
        %2232 = vmatprep.subr.mxu0 0.0
        %2233 = vmatpush2.msra.mxu0 0.0
        %2234 = vmatprep.subr.mxu0 0.0
        %2235 = vmatpush2.msra.mxu0 0.0
        %2236 = vmatprep.subr.mxu0 0.0
        %2237 = vmatpush2.msra.mxu0 0.0
        %2238 = vmatprep.subr.mxu0 0.0
        %2239 = vmatpush2.msra.mxu0 0.0
        %2240 = vmatprep.mubr.f32.mxu0 0.0
        %2241 = vmatmul.mubr.f32.gmra.mxu0 %v2174
        %v2242 = vpop.f32.mrf.mxu0
        %v2243 = vadd.f32 %v2172, %v2242
        %v2244 = vpop.f32.mrf.mxu0
        %2245 = vdwg.mxu0
        %v2246 = vld [vmem:[%s3 + $0x1c8] sm:$0xff]
        %v2247 = vld [vmem:[%s3 + $0x1d0] sm:$0xff]
        %v2248 = vld [vmem:[%s3 + $0x1d8] sm:$0xff]
        %v2249 = vld [vmem:[%s3 + $0x1e0] sm:$0xff]
        %v2250 = vld [vmem:[%s3 + $0x1e8] sm:$0xff]
        %v2251 = vld [vmem:[%s3 + $0x1f0] sm:$0xff]
        %v2252 = vld [vmem:[%s3 + $0x1f8] sm:$0xff]
        %v2253 = vld [vmem:[%s3 + $0x200] sm:$0xff]
        %v2254 = vsel %vm655, %v2081, 0
        %2256 = vmatprep.subr.mxu0 0.0
        %2257 = vmatpush1.msra.mxu0 0.0
        %2258 = vmatprep.subr.mxu0 0.0
        %2259 = vmatpush1.msra.mxu0 0.0
        %2260 = vmatprep.subr.mxu0 0.0
        %2261 = vmatpush1.msra.mxu0 0.0
        %2262 = vmatprep.subr.mxu0 0.0
        %2263 = vmatpush1.msra.mxu0 0.0
        %2264 = vmatprep.subr.mxu0 0.0
        %2265 = vmatpush1.msra.mxu0 0.0
        %2266 = vmatprep.subr.mxu0 0.0
        %2267 = vmatpush1.msra.mxu0 0.0
        %2268 = vmatprep.subr.mxu0 0.0
        %2269 = vmatpush1.msra.mxu0 0.0
        %2270 = vmatprep.subr.mxu0 0.0
        %2271 = vmatpush1.msra.mxu0 0.0
        %2272 = vmatprep.subr.mxu0 0.0
        %2273 = vmatpush1.msra.mxu0 0.0
        %2274 = vmatprep.subr.mxu0 0.0
        %2275 = vmatpush1.msra.mxu0 0.0
        %2276 = vmatprep.subr.mxu0 0.0
        %2277 = vmatpush1.msra.mxu0 0.0
        %2278 = vmatprep.subr.mxu0 0.0
        %2279 = vmatpush1.msra.mxu0 0.0
        %2280 = vmatprep.subr.mxu0 0.0
        %2281 = vmatpush1.msra.mxu0 %v2253
        %2282 = vmatprep.subr.mxu0 0.0
        %2283 = vmatpush1.msra.mxu0 %v2252
        %2284 = vmatprep.subr.mxu0 0.0
        %2285 = vmatpush1.msra.mxu0 %v2251
        %2286 = vmatprep.subr.mxu0 0.0
        %2287 = vmatpush1.msra.mxu0 %v2250
        %2288 = vmatprep.subr.mxu0 0.0
        %2289 = vmatpush2.msra.mxu0 0.0
        %2290 = vmatprep.subr.mxu0 0.0
        %2291 = vmatpush2.msra.mxu0 0.0
        %2292 = vmatprep.subr.mxu0 0.0
        %2293 = vmatpush2.msra.mxu0 0.0
        %2294 = vmatprep.subr.mxu0 0.0
        %2295 = vmatpush2.msra.mxu0 0.0
        %2296 = vmatprep.subr.mxu0 0.0
        %2297 = vmatpush2.msra.mxu0 0.0
        %2298 = vmatprep.subr.mxu0 0.0
        %2299 = vmatpush2.msra.mxu0 0.0
        %2300 = vmatprep.subr.mxu0 0.0
        %2301 = vmatpush2.msra.mxu0 0.0
        %2302 = vmatprep.subr.mxu0 0.0
        %2303 = vmatpush2.msra.mxu0 0.0
        %2304 = vmatprep.subr.mxu0 0.0
        %2305 = vmatpush2.msra.mxu0 0.0
        %2306 = vmatprep.subr.mxu0 0.0
        %2307 = vmatpush2.msra.mxu0 0.0
        %2308 = vmatprep.subr.mxu0 0.0
        %2309 = vmatpush2.msra.mxu0 0.0
        %2310 = vmatprep.subr.mxu0 0.0
        %2311 = vmatpush2.msra.mxu0 0.0
        %2312 = vmatprep.subr.mxu0 0.0
        %2313 = vmatpush2.msra.mxu0 0.0
        %2314 = vmatprep.subr.mxu0 0.0
        %2315 = vmatpush2.msra.mxu0 0.0
        %2316 = vmatprep.subr.mxu0 0.0
        %2317 = vmatpush2.msra.mxu0 0.0
        %2318 = vmatprep.subr.mxu0 0.0
        %2319 = vmatpush2.msra.mxu0 0.0
        %2320 = vmatprep.mubr.f32.mxu0 0.0
        %2321 = vmatmul.mubr.f32.gmra.mxu0 %v2254
        %v2322 = vpop.f32.mrf.mxu0
        %v2323 = vadd.f32 0.0, %v2322
        %v2324 = vpop.f32.mrf.mxu0
        %2325 = vdwg.mxu0
        %v2326 = vsel %vm655, %v1904, 0
        %2328 = vmatprep.subr.mxu0 0.0
        %2329 = vmatpush1.msra.mxu0 0.0
        %2330 = vmatprep.subr.mxu0 0.0
        %2331 = vmatpush1.msra.mxu0 0.0
        %2332 = vmatprep.subr.mxu0 0.0
        %2333 = vmatpush1.msra.mxu0 0.0
        %2334 = vmatprep.subr.mxu0 0.0
        %2335 = vmatpush1.msra.mxu0 0.0
        %2336 = vmatprep.subr.mxu0 0.0
        %2337 = vmatpush1.msra.mxu0 0.0
        %2338 = vmatprep.subr.mxu0 0.0
        %2339 = vmatpush1.msra.mxu0 0.0
        %2340 = vmatprep.subr.mxu0 0.0
        %2341 = vmatpush1.msra.mxu0 0.0
        %2342 = vmatprep.subr.mxu0 0.0
        %2343 = vmatpush1.msra.mxu0 0.0
        %2344 = vmatprep.subr.mxu0 0.0
        %2345 = vmatpush1.msra.mxu0 0.0
        %2346 = vmatprep.subr.mxu0 0.0
        %2347 = vmatpush1.msra.mxu0 0.0
        %2348 = vmatprep.subr.mxu0 0.0
        %2349 = vmatpush1.msra.mxu0 0.0
        %2350 = vmatprep.subr.mxu0 0.0
        %2351 = vmatpush1.msra.mxu0 0.0
        %2352 = vmatprep.subr.mxu0 0.0
        %2353 = vmatpush1.msra.mxu0 %v2249
        %2354 = vmatprep.subr.mxu0 0.0
        %2355 = vmatpush1.msra.mxu0 %v2248
        %2356 = vmatprep.subr.mxu0 0.0
        %2357 = vmatpush1.msra.mxu0 %v2247
        %2358 = vmatprep.subr.mxu0 0.0
        %2359 = vmatpush1.msra.mxu0 %v2246
        %2360 = vmatprep.subr.mxu0 0.0
        %2361 = vmatpush2.msra.mxu0 0.0
        %2362 = vmatprep.subr.mxu0 0.0
        %2363 = vmatpush2.msra.mxu0 0.0
        %2364 = vmatprep.subr.mxu0 0.0
        %2365 = vmatpush2.msra.mxu0 0.0
        %2366 = vmatprep.subr.mxu0 0.0
        %2367 = vmatpush2.msra.mxu0 0.0
        %2368 = vmatprep.subr.mxu0 0.0
        %2369 = vmatpush2.msra.mxu0 0.0
        %2370 = vmatprep.subr.mxu0 0.0
        %2371 = vmatpush2.msra.mxu0 0.0
        %2372 = vmatprep.subr.mxu0 0.0
        %2373 = vmatpush2.msra.mxu0 0.0
        %2374 = vmatprep.subr.mxu0 0.0
        %2375 = vmatpush2.msra.mxu0 0.0
        %2376 = vmatprep.subr.mxu0 0.0
        %2377 = vmatpush2.msra.mxu0 0.0
        %2378 = vmatprep.subr.mxu0 0.0
        %2379 = vmatpush2.msra.mxu0 0.0
        %2380 = vmatprep.subr.mxu0 0.0
        %2381 = vmatpush2.msra.mxu0 0.0
        %2382 = vmatprep.subr.mxu0 0.0
        %2383 = vmatpush2.msra.mxu0 0.0
        %2384 = vmatprep.subr.mxu0 0.0
        %2385 = vmatpush2.msra.mxu0 0.0
        %2386 = vmatprep.subr.mxu0 0.0
        %2387 = vmatpush2.msra.mxu0 0.0
        %2388 = vmatprep.subr.mxu0 0.0
        %2389 = vmatpush2.msra.mxu0 0.0
        %2390 = vmatprep.subr.mxu0 0.0
        %2391 = vmatpush2.msra.mxu0 0.0
        %2392 = vmatprep.mubr.f32.mxu0 0.0
        %2393 = vmatmul.mubr.f32.gmra.mxu0 %v2326
        %v2394 = vpop.f32.mrf.mxu0
        %v2395 = vadd.f32 %v2323, %v2394
        %v2396 = vpop.f32.mrf.mxu0
        %2397 = vdwg.mxu0
        %v2398 = vld [vmem:[%s3 + $0x208] sm:$0xff]
        %v2399 = vld [vmem:[%s3 + $0x210] sm:$0xff]
        %v2400 = vld [vmem:[%s3 + $0x218] sm:$0x1]
        %vm2401 = vcmask 138240
        %v2403 = vsel %vm2401, %v2243, 0
        %vm2405 = vcmask 1040384
        %v2407 = vsel %vm2405, %v2400, 0
        %2409 = vmatprep.subr.mxu0 0.0
        %2410 = vmatpush1.msra.mxu0 0.0
        %2411 = vmatprep.subr.mxu0 0.0
        %2412 = vmatpush1.msra.mxu0 0.0
        %2413 = vmatprep.subr.mxu0 0.0
        %2414 = vmatpush1.msra.mxu0 0.0
        %2415 = vmatprep.subr.mxu0 0.0
        %2416 = vmatpush1.msra.mxu0 0.0
        %2417 = vmatprep.subr.mxu0 0.0
        %2418 = vmatpush1.msra.mxu0 0.0
        %2419 = vmatprep.subr.mxu0 0.0
        %2420 = vmatpush1.msra.mxu0 0.0
        %2421 = vmatprep.subr.mxu0 0.0
        %2422 = vmatpush1.msra.mxu0 0.0
        %2423 = vmatprep.subr.mxu0 0.0
        %2424 = vmatpush1.msra.mxu0 0.0
        %2425 = vmatprep.subr.mxu0 0.0
        %2426 = vmatpush1.msra.mxu0 0.0
        %2427 = vmatprep.subr.mxu0 0.0
        %2428 = vmatpush1.msra.mxu0 0.0
        %2429 = vmatprep.subr.mxu0 0.0
        %2430 = vmatpush1.msra.mxu0 0.0
        %2431 = vmatprep.subr.mxu0 0.0
        %2432 = vmatpush1.msra.mxu0 0.0
        %2433 = vmatprep.subr.mxu0 0.0
        %2434 = vmatpush1.msra.mxu0 0.0
        %2435 = vmatprep.subr.mxu0 0.0
        %2436 = vmatpush1.msra.mxu0 %v2407
        %2437 = vmatprep.subr.mxu0 0.0
        %2438 = vmatpush1.msra.mxu0 %v2399
        %2439 = vmatprep.subr.mxu0 0.0
        %2440 = vmatpush1.msra.mxu0 %v2398
        %2441 = vmatprep.subr.mxu0 0.0
        %2442 = vmatpush2.msra.mxu0 0.0
        %2443 = vmatprep.subr.mxu0 0.0
        %2444 = vmatpush2.msra.mxu0 0.0
        %2445 = vmatprep.subr.mxu0 0.0
        %2446 = vmatpush2.msra.mxu0 0.0
        %2447 = vmatprep.subr.mxu0 0.0
        %2448 = vmatpush2.msra.mxu0 0.0
        %2449 = vmatprep.subr.mxu0 0.0
        %2450 = vmatpush2.msra.mxu0 0.0
        %2451 = vmatprep.subr.mxu0 0.0
        %2452 = vmatpush2.msra.mxu0 0.0
        %2453 = vmatprep.subr.mxu0 0.0
        %2454 = vmatpush2.msra.mxu0 0.0
        %2455 = vmatprep.subr.mxu0 0.0
        %2456 = vmatpush2.msra.mxu0 0.0
        %2457 = vmatprep.subr.mxu0 0.0
        %2458 = vmatpush2.msra.mxu0 0.0
        %2459 = vmatprep.subr.mxu0 0.0
        %2460 = vmatpush2.msra.mxu0 0.0
        %2461 = vmatprep.subr.mxu0 0.0
        %2462 = vmatpush2.msra.mxu0 0.0
        %2463 = vmatprep.subr.mxu0 0.0
        %2464 = vmatpush2.msra.mxu0 0.0
        %2465 = vmatprep.subr.mxu0 0.0
        %2466 = vmatpush2.msra.mxu0 0.0
        %2467 = vmatprep.subr.mxu0 0.0
        %2468 = vmatpush2.msra.mxu0 0.0
        %2469 = vmatprep.subr.mxu0 0.0
        %2470 = vmatpush2.msra.mxu0 0.0
        %2471 = vmatprep.subr.mxu0 0.0
        %2472 = vmatpush2.msra.mxu0 0.0
        %2473 = vmatprep.mubr.f32.mxu0 0.0
        %2474 = vmatmul.mubr.f32.gmra.mxu0 %v2403
        %v2475 = vpop.f32.mrf.mxu0
        %v2476 = vadd.f32 0.0, %v2475
        %v2477 = vpop.f32.mrf.mxu0
        %2478 = vdwg.mxu0
        %v2479 = vadd.f32 %v2395, %v2476
        %v2480 = vld [vmem:[%s4 + $0xf] sm:$0x1]
        %v2481 = vlaneseq
        %v2482 = vshrl.u32 %v2481, 7
        %v2483 = vsub.s32 0, %v2482
        %v2484 = vrot.slane %v2480, %v2483
        %v2485 = vadd.f32 %v2479, %v2484
        %v2486 = vsub.f32 %v2485, %v2485
        %v2487 = vmul.f32 %v2486, 1.442695
        %v2488 = vpow.pop %v2487
        %v2489 = vadd.f32 %v2488, 0.0
        %v2490 = vrcp.pop %v2489
        %v2491 = vmul.f32 %v2488, %v2490
        %2492 = vrot.lane.b32.xlu0 %v2081, 16
        %v2493 = vpop.permute.xlu0 %2492
        %2495 = vrot.lane.b32.xlu0 %v2243, 32
        %v2496 = vpop.permute.xlu0 %2495
        %v2498 = vsel %vm268, %v1904, %v2493
        %v2499 = vsel %vm655, %v2498, %v2496
        %2500 = vxpose.xlu0.b32.start [1/16] %v2491, 128
        %2501 = vxpose.xlu0.b32.cont [2/16] 0.0, 128
        %2502 = vxpose.xlu0.b32.cont [3/16] 0.0, 128
        %2503 = vxpose.xlu0.b32.cont [4/16] 0.0, 128
        %2504 = vxpose.xlu0.b32.cont [5/16] 0.0, 128
        %2505 = vxpose.xlu0.b32.cont [6/16] 0.0, 128
        %2506 = vxpose.xlu0.b32.cont [7/16] 0.0, 128
        %2507 = vxpose.xlu0.b32.cont [8/16] 0.0, 128
        %2508 = vxpose.xlu0.b32.cont [9/16] 0.0, 128
        %2509 = vxpose.xlu0.b32.cont [10/16] 0.0, 128
        %2510 = vxpose.xlu0.b32.cont [11/16] 0.0, 128
        %2511 = vxpose.xlu0.b32.cont [12/16] 0.0, 128
        %2512 = vxpose.xlu0.b32.cont [13/16] 0.0, 128
        %2513 = vxpose.xlu0.b32.cont [14/16] 0.0, 128
        %2514 = vxpose.xlu0.b32.cont [15/16] 0.0, 128
        %2515 = vxpose.xlu0.b32.end [16/16] 0.0, 128
        %v2516 = vpop.trf.xlu0
        %v2517 = vpop.trf.xlu0
        %v2518 = vpop.trf.xlu0
        %v2519 = vpop.trf.xlu0
        %v2520 = vpop.trf.xlu0
        %v2521 = vpop.trf.xlu0
        %v2522 = vpop.trf.xlu0
        %v2523 = vpop.trf.xlu0
        %v2524 = vpop.trf.xlu0
        %v2525 = vpop.trf.xlu0
        %v2526 = vpop.trf.xlu0
        %v2527 = vpop.trf.xlu0
        %v2528 = vpop.trf.xlu0
        %v2529 = vpop.trf.xlu0
        %v2530 = vpop.trf.xlu0
        %v2531 = vpop.trf.xlu0
        %v2533 = vsel %vm1218, %v2516, 0
        %v2536 = vsel %vm1130, %v2499, 0
        %2538 = vmatprep.subr.mxu0 0.0
        %2539 = vmatpush1.msra.mxu0 0.0
        %2540 = vmatprep.subr.mxu0 0.0
        %2541 = vmatpush1.msra.mxu0 0.0
        %2542 = vmatprep.subr.mxu0 0.0
        %2543 = vmatpush1.msra.mxu0 0.0
        %2544 = vmatprep.subr.mxu0 0.0
        %2545 = vmatpush1.msra.mxu0 0.0
        %2546 = vmatprep.subr.mxu0 0.0
        %2547 = vmatpush1.msra.mxu0 0.0
        %2548 = vmatprep.subr.mxu0 0.0
        %2549 = vmatpush1.msra.mxu0 0.0
        %2550 = vmatprep.subr.mxu0 0.0
        %2551 = vmatpush1.msra.mxu0 0.0
        %2552 = vmatprep.subr.mxu0 0.0
        %2553 = vmatpush1.msra.mxu0 0.0
        %2554 = vmatprep.subr.mxu0 0.0
        %2555 = vmatpush1.msra.mxu0 0.0
        %2556 = vmatprep.subr.mxu0 0.0
        %2557 = vmatpush1.msra.mxu0 0.0
        %2558 = vmatprep.subr.mxu0 0.0
        %2559 = vmatpush1.msra.mxu0 0.0
        %2560 = vmatprep.subr.mxu0 0.0
        %2561 = vmatpush1.msra.mxu0 0.0
        %2562 = vmatprep.subr.mxu0 0.0
        %2563 = vmatpush1.msra.mxu0 0.0
        %2564 = vmatprep.subr.mxu0 0.0
        %2565 = vmatpush1.msra.mxu0 0.0
        %2566 = vmatprep.subr.mxu0 0.0
        %2567 = vmatpush1.msra.mxu0 0.0
        %2568 = vmatprep.subr.mxu0 0.0
        %2569 = vmatpush1.msra.mxu0 %v2536
        %2570 = vmatprep.subr.mxu0 0.0
        %2571 = vmatpush2.msra.mxu0 0.0
        %2572 = vmatprep.subr.mxu0 0.0
        %2573 = vmatpush2.msra.mxu0 0.0
        %2574 = vmatprep.subr.mxu0 0.0
        %2575 = vmatpush2.msra.mxu0 0.0
        %2576 = vmatprep.subr.mxu0 0.0
        %2577 = vmatpush2.msra.mxu0 0.0
        %2578 = vmatprep.subr.mxu0 0.0
        %2579 = vmatpush2.msra.mxu0 0.0
        %2580 = vmatprep.subr.mxu0 0.0
        %2581 = vmatpush2.msra.mxu0 0.0
        %2582 = vmatprep.subr.mxu0 0.0
        %2583 = vmatpush2.msra.mxu0 0.0
        %2584 = vmatprep.subr.mxu0 0.0
        %2585 = vmatpush2.msra.mxu0 0.0
        %2586 = vmatprep.subr.mxu0 0.0
        %2587 = vmatpush2.msra.mxu0 0.0
        %2588 = vmatprep.subr.mxu0 0.0
        %2589 = vmatpush2.msra.mxu0 0.0
        %2590 = vmatprep.subr.mxu0 0.0
        %2591 = vmatpush2.msra.mxu0 0.0
        %2592 = vmatprep.subr.mxu0 0.0
        %2593 = vmatpush2.msra.mxu0 0.0
        %2594 = vmatprep.subr.mxu0 0.0
        %2595 = vmatpush2.msra.mxu0 0.0
        %2596 = vmatprep.subr.mxu0 0.0
        %2597 = vmatpush2.msra.mxu0 0.0
        %2598 = vmatprep.subr.mxu0 0.0
        %2599 = vmatpush2.msra.mxu0 0.0
        %2600 = vmatprep.subr.mxu0 0.0
        %2601 = vmatpush2.msra.mxu0 0.0
        %2602 = vmatprep.mubr.f32.mxu0 0.0
        %2603 = vmatmul.mubr.f32.gmra.mxu0 %v2533
        %v2604 = vpop.f32.mrf.mxu0
        %v2605 = vadd.f32 0.0, %v2604
        %v2606 = vpop.f32.mrf.mxu0
        %2607 = vdwg.mxu0
        %v2609 = vsel %vm1130, %v2491, 0
        %2611 = vmatprep.subr.mxu0 0.0
        %2612 = vmatpush1.msra.mxu0 0.0
        %2613 = vmatprep.subr.mxu0 0.0
        %2614 = vmatpush1.msra.mxu0 0.0
        %2615 = vmatprep.subr.mxu0 0.0
        %2616 = vmatpush1.msra.mxu0 0.0
        %2617 = vmatprep.subr.mxu0 0.0
        %2618 = vmatpush1.msra.mxu0 0.0
        %2619 = vmatprep.subr.mxu0 0.0
        %2620 = vmatpush1.msra.mxu0 0.0
        %2621 = vmatprep.subr.mxu0 0.0
        %2622 = vmatpush1.msra.mxu0 0.0
        %2623 = vmatprep.subr.mxu0 0.0
        %2624 = vmatpush1.msra.mxu0 0.0
        %2625 = vmatprep.subr.mxu0 0.0
        %2626 = vmatpush1.msra.mxu0 0.0
        %2627 = vmatprep.subr.mxu0 0.0
        %2628 = vmatpush1.msra.mxu0 0.0
        %2629 = vmatprep.subr.mxu0 0.0
        %2630 = vmatpush1.msra.mxu0 0.0
        %2631 = vmatprep.subr.mxu0 0.0
        %2632 = vmatpush1.msra.mxu0 0.0
        %2633 = vmatprep.subr.mxu0 0.0
        %2634 = vmatpush1.msra.mxu0 0.0
        %2635 = vmatprep.subr.mxu0 0.0
        %2636 = vmatpush1.msra.mxu0 0.0
        %2637 = vmatprep.subr.mxu0 0.0
        %2638 = vmatpush1.msra.mxu0 0.0
        %2639 = vmatprep.subr.mxu0 0.0
        %2640 = vmatpush1.msra.mxu0 0.0
        %2641 = vmatprep.subr.mxu0 0.0
        %2642 = vmatpush1.msra.mxu0 %v2609
        %2643 = vmatprep.subr.mxu0 0.0
        %2644 = vmatpush2.msra.mxu0 0.0
        %2645 = vmatprep.subr.mxu0 0.0
        %2646 = vmatpush2.msra.mxu0 0.0
        %2647 = vmatprep.subr.mxu0 0.0
        %2648 = vmatpush2.msra.mxu0 0.0
        %2649 = vmatprep.subr.mxu0 0.0
        %2650 = vmatpush2.msra.mxu0 0.0
        %2651 = vmatprep.subr.mxu0 0.0
        %2652 = vmatpush2.msra.mxu0 0.0
        %2653 = vmatprep.subr.mxu0 0.0
        %2654 = vmatpush2.msra.mxu0 0.0
        %2655 = vmatprep.subr.mxu0 0.0
        %2656 = vmatpush2.msra.mxu0 0.0
        %2657 = vmatprep.subr.mxu0 0.0
        %2658 = vmatpush2.msra.mxu0 0.0
        %2659 = vmatprep.subr.mxu0 0.0
        %2660 = vmatpush2.msra.mxu0 0.0
        %2661 = vmatprep.subr.mxu0 0.0
        %2662 = vmatpush2.msra.mxu0 0.0
        %2663 = vmatprep.subr.mxu0 0.0
        %2664 = vmatpush2.msra.mxu0 0.0
        %2665 = vmatprep.subr.mxu0 0.0
        %2666 = vmatpush2.msra.mxu0 0.0
        %2667 = vmatprep.subr.mxu0 0.0
        %2668 = vmatpush2.msra.mxu0 0.0
        %2669 = vmatprep.subr.mxu0 0.0
        %2670 = vmatpush2.msra.mxu0 0.0
        %2671 = vmatprep.subr.mxu0 0.0
        %2672 = vmatpush2.msra.mxu0 0.0
        %2673 = vmatprep.subr.mxu0 0.0
        %2674 = vmatpush2.msra.mxu0 0.0
        %2675 = vmatprep.mubr.f32.mxu0 0.0
        %2676 = vmatmul.mubr.f32.gmra.mxu0 %v1639
        %v2677 = vpop.f32.mrf.mxu0
        %v2678 = vadd.f32 0.0, %v2677
        %v2679 = vpop.f32.mrf.mxu0
        %2680 = vdwg.mxu0
        %v2682 = vsel %vm1130, %v2678, 0
        %2684 = vmatprep.subr.mxu0 0.0
        %2685 = vmatpush1.msra.mxu0 0.0
        %2686 = vmatprep.subr.mxu0 0.0
        %2687 = vmatpush1.msra.mxu0 0.0
        %2688 = vmatprep.subr.mxu0 0.0
        %2689 = vmatpush1.msra.mxu0 0.0
        %2690 = vmatprep.subr.mxu0 0.0
        %2691 = vmatpush1.msra.mxu0 0.0
        %2692 = vmatprep.subr.mxu0 0.0
        %2693 = vmatpush1.msra.mxu0 0.0
        %2694 = vmatprep.subr.mxu0 0.0
        %2695 = vmatpush1.msra.mxu0 0.0
        %2696 = vmatprep.subr.mxu0 0.0
        %2697 = vmatpush1.msra.mxu0 0.0
        %2698 = vmatprep.subr.mxu0 0.0
        %2699 = vmatpush1.msra.mxu0 0.0
        %2700 = vmatprep.subr.mxu0 0.0
        %2701 = vmatpush1.msra.mxu0 0.0
        %2702 = vmatprep.subr.mxu0 0.0
        %2703 = vmatpush1.msra.mxu0 0.0
        %2704 = vmatprep.subr.mxu0 0.0
        %2705 = vmatpush1.msra.mxu0 0.0
        %2706 = vmatprep.subr.mxu0 0.0
        %2707 = vmatpush1.msra.mxu0 0.0
        %2708 = vmatprep.subr.mxu0 0.0
        %2709 = vmatpush1.msra.mxu0 0.0
        %2710 = vmatprep.subr.mxu0 0.0
        %2711 = vmatpush1.msra.mxu0 0.0
        %2712 = vmatprep.subr.mxu0 0.0
        %2713 = vmatpush1.msra.mxu0 0.0
        %2714 = vmatprep.subr.mxu0 0.0
        %2715 = vmatpush1.msra.mxu0 %v2682
        %2716 = vmatprep.subr.mxu0 0.0
        %2717 = vmatpush2.msra.mxu0 0.0
        %2718 = vmatprep.subr.mxu0 0.0
        %2719 = vmatpush2.msra.mxu0 0.0
        %2720 = vmatprep.subr.mxu0 0.0
        %2721 = vmatpush2.msra.mxu0 0.0
        %2722 = vmatprep.subr.mxu0 0.0
        %2723 = vmatpush2.msra.mxu0 0.0
        %2724 = vmatprep.subr.mxu0 0.0
        %2725 = vmatpush2.msra.mxu0 0.0
        %2726 = vmatprep.subr.mxu0 0.0
        %2727 = vmatpush2.msra.mxu0 0.0
        %2728 = vmatprep.subr.mxu0 0.0
        %2729 = vmatpush2.msra.mxu0 0.0
        %2730 = vmatprep.subr.mxu0 0.0
        %2731 = vmatpush2.msra.mxu0 0.0
        %2732 = vmatprep.subr.mxu0 0.0
        %2733 = vmatpush2.msra.mxu0 0.0
        %2734 = vmatprep.subr.mxu0 0.0
        %2735 = vmatpush2.msra.mxu0 0.0
        %2736 = vmatprep.subr.mxu0 0.0
        %2737 = vmatpush2.msra.mxu0 0.0
        %2738 = vmatprep.subr.mxu0 0.0
        %2739 = vmatpush2.msra.mxu0 0.0
        %2740 = vmatprep.subr.mxu0 0.0
        %2741 = vmatpush2.msra.mxu0 0.0
        %2742 = vmatprep.subr.mxu0 0.0
        %2743 = vmatpush2.msra.mxu0 0.0
        %2744 = vmatprep.subr.mxu0 0.0
        %2745 = vmatpush2.msra.mxu0 0.0
        %2746 = vmatprep.subr.mxu0 0.0
        %2747 = vmatpush2.msra.mxu0 0.0
        %2748 = vmatprep.mubr.f32.mxu0 0.0
        %2749 = vmatmul.mubr.f32.gmra.mxu0 %v2533
        %v2750 = vpop.f32.mrf.mxu0
        %v2751 = vadd.f32 0.0, %v2750
        %v2752 = vpop.f32.mrf.mxu0
        %2753 = vdwg.mxu0
        %vm2754 = vcmask 7168
        %v2755 = vsel %vm2754, %v2491, 0
        %2757 = vmatprep.subr.mxu0 0.0
        %2758 = vmatpush1.xpose.msra.mxu0 0.0
        %2759 = vmatprep.subr.mxu0 0.0
        %2760 = vmatpush1.xpose.msra.mxu0 0.0
        %2761 = vmatprep.subr.mxu0 0.0
        %2762 = vmatpush1.xpose.msra.mxu0 0.0
        %2763 = vmatprep.subr.mxu0 0.0
        %2764 = vmatpush1.xpose.msra.mxu0 0.0
        %2765 = vmatprep.subr.mxu0 0.0
        %2766 = vmatpush1.xpose.msra.mxu0 0.0
        %2767 = vmatprep.subr.mxu0 0.0
        %2768 = vmatpush1.xpose.msra.mxu0 0.0
        %2769 = vmatprep.subr.mxu0 0.0
        %2770 = vmatpush1.xpose.msra.mxu0 0.0
        %2771 = vmatprep.subr.mxu0 0.0
        %2772 = vmatpush1.xpose.msra.mxu0 0.0
        %2773 = vmatprep.subr.mxu0 0.0
        %2774 = vmatpush1.xpose.msra.mxu0 0.0
        %2775 = vmatprep.subr.mxu0 0.0
        %2776 = vmatpush1.xpose.msra.mxu0 0.0
        %2777 = vmatprep.subr.mxu0 0.0
        %2778 = vmatpush1.xpose.msra.mxu0 0.0
        %2779 = vmatprep.subr.mxu0 0.0
        %2780 = vmatpush1.xpose.msra.mxu0 0.0
        %2781 = vmatprep.subr.mxu0 0.0
        %2782 = vmatpush1.xpose.msra.mxu0 0.0
        %2783 = vmatprep.subr.mxu0 0.0
        %2784 = vmatpush1.xpose.msra.mxu0 0.0
        %2785 = vmatprep.subr.mxu0 0.0
        %2786 = vmatpush1.xpose.msra.mxu0 0.0
        %2787 = vmatprep.subr.mxu0 0.0
        %2788 = vmatpush1.xpose.msra.mxu0 %v2755
        %2789 = vmatprep.subr.mxu0 0.0
        %2790 = vmatpush2.xpose.msra.mxu0 0.0
        %2791 = vmatprep.subr.mxu0 0.0
        %2792 = vmatpush2.xpose.msra.mxu0 0.0
        %2793 = vmatprep.subr.mxu0 0.0
        %2794 = vmatpush2.xpose.msra.mxu0 0.0
        %2795 = vmatprep.subr.mxu0 0.0
        %2796 = vmatpush2.xpose.msra.mxu0 0.0
        %2797 = vmatprep.subr.mxu0 0.0
        %2798 = vmatpush2.xpose.msra.mxu0 0.0
        %2799 = vmatprep.subr.mxu0 0.0
        %2800 = vmatpush2.xpose.msra.mxu0 0.0
        %2801 = vmatprep.subr.mxu0 0.0
        %2802 = vmatpush2.xpose.msra.mxu0 0.0
        %2803 = vmatprep.subr.mxu0 0.0
        %2804 = vmatpush2.xpose.msra.mxu0 0.0
        %2805 = vmatprep.subr.mxu0 0.0
        %2806 = vmatpush2.xpose.msra.mxu0 0.0
        %2807 = vmatprep.subr.mxu0 0.0
        %2808 = vmatpush2.xpose.msra.mxu0 0.0
        %2809 = vmatprep.subr.mxu0 0.0
        %2810 = vmatpush2.xpose.msra.mxu0 0.0
        %2811 = vmatprep.subr.mxu0 0.0
        %2812 = vmatpush2.xpose.msra.mxu0 0.0
        %2813 = vmatprep.subr.mxu0 0.0
        %2814 = vmatpush2.xpose.msra.mxu0 0.0
        %2815 = vmatprep.subr.mxu0 0.0
        %2816 = vmatpush2.xpose.msra.mxu0 0.0
        %2817 = vmatprep.subr.mxu0 0.0
        %2818 = vmatpush2.xpose.msra.mxu0 0.0
        %2819 = vmatprep.subr.mxu0 0.0
        %2820 = vmatpush2.xpose.msra.mxu0 0.0
        %2821 = vmatprep.mubr.f32.mxu0 0.0
        %2822 = vmatmul.mubr.f32.gmra.mxu0 %v2755
        %v2823 = vpop.f32.mrf.mxu0
        %v2824 = vadd.f32 0.0, %v2823
        %v2825 = vpop.f32.mrf.mxu0
        %2826 = vdwg.mxu0
        %v2827 = vsub.f32 %v1508, %v2824
        %v2828 = vmul.f32 %v2827, %v2827
        %vm2829 = vcmask 27648
        %v2830 = vsel %vm2829, %v2828, 0.0
        %2831 = vadd.xlane.f32.xlu0 %v2830
        %v2832 = vpop.xlane.xlu0 %2831
        %v2833 = vrot.slane %v2832, 4
        %v2834 = vadd.f32 %v2832, %v2833
        %v2835 = vrot.slane %v2834, 2
        %v2836 = vadd.f32 %v2834, %v2835
        %v2837 = vrot.slane %v2836, 1
        %v2838 = vadd.f32 %v2836, %v2837
        %s2839 = vtos %v2838
        %v2840 = vsub.f32 0.0, %v2491
        %v2841 = vadd.f32 %v2491, 1e-15
        %v2842 = vlog2.pop %v2841
        %v2843 = vmul.f32 %v2842, 0.6931472
        %v2844 = vmul.f32 %v2840, %v2843
        %vm2845 = vcmask 3072
        %v2846 = vsel %vm2845, %v2844, 0.0
        %2847 = vadd.xlane.f32.xlu0 %v2846
        %v2848 = vpop.xlane.xlu0 %2847
        %v2849 = vrot.slane %v2848, 4
        %v2850 = vadd.f32 %v2848, %v2849
        %v2851 = vrot.slane %v2850, 2
        %v2852 = vadd.f32 %v2850, %v2851
        %v2853 = vrot.slane %v2852, 1
        %v2854 = vadd.f32 %v2852, %v2853
        %s2855 = vtos %v2854
        %v2857 = vsel %vm2754, %v2751, 0
        %v2859 = vsel %vm2405, 1.0, 0
        %2861 = vmatprep.subr.mxu0 0.0
        %2862 = vmatpush1.msra.mxu0 0.0
        %2863 = vmatprep.subr.mxu0 0.0
        %2864 = vmatpush1.msra.mxu0 0.0
        %2865 = vmatprep.subr.mxu0 0.0
        %2866 = vmatpush1.msra.mxu0 0.0
        %2867 = vmatprep.subr.mxu0 0.0
        %2868 = vmatpush1.msra.mxu0 0.0
        %2869 = vmatprep.subr.mxu0 0.0
        %2870 = vmatpush1.msra.mxu0 0.0
        %2871 = vmatprep.subr.mxu0 0.0
        %2872 = vmatpush1.msra.mxu0 0.0
        %2873 = vmatprep.subr.mxu0 0.0
        %2874 = vmatpush1.msra.mxu0 0.0
        %2875 = vmatprep.subr.mxu0 0.0
        %2876 = vmatpush1.msra.mxu0 0.0
        %2877 = vmatprep.subr.mxu0 0.0
        %2878 = vmatpush1.msra.mxu0 0.0
        %2879 = vmatprep.subr.mxu0 0.0
        %2880 = vmatpush1.msra.mxu0 0.0
        %2881 = vmatprep.subr.mxu0 0.0
        %2882 = vmatpush1.msra.mxu0 0.0
        %2883 = vmatprep.subr.mxu0 0.0
        %2884 = vmatpush1.msra.mxu0 0.0
        %2885 = vmatprep.subr.mxu0 0.0
        %2886 = vmatpush1.msra.mxu0 0.0
        %2887 = vmatprep.subr.mxu0 0.0
        %2888 = vmatpush1.msra.mxu0 0.0
        %2889 = vmatprep.subr.mxu0 0.0
        %2890 = vmatpush1.msra.mxu0 0.0
        %2891 = vmatprep.subr.mxu0 0.0
        %2892 = vmatpush1.msra.mxu0 %v2859
        %2893 = vmatprep.subr.mxu0 0.0
        %2894 = vmatpush2.msra.mxu0 0.0
        %2895 = vmatprep.subr.mxu0 0.0
        %2896 = vmatpush2.msra.mxu0 0.0
        %2897 = vmatprep.subr.mxu0 0.0
        %2898 = vmatpush2.msra.mxu0 0.0
        %2899 = vmatprep.subr.mxu0 0.0
        %2900 = vmatpush2.msra.mxu0 0.0
        %2901 = vmatprep.subr.mxu0 0.0
        %2902 = vmatpush2.msra.mxu0 0.0
        %2903 = vmatprep.subr.mxu0 0.0
        %2904 = vmatpush2.msra.mxu0 0.0
        %2905 = vmatprep.subr.mxu0 0.0
        %2906 = vmatpush2.msra.mxu0 0.0
        %2907 = vmatprep.subr.mxu0 0.0
        %2908 = vmatpush2.msra.mxu0 0.0
        %2909 = vmatprep.subr.mxu0 0.0
        %2910 = vmatpush2.msra.mxu0 0.0
        %2911 = vmatprep.subr.mxu0 0.0
        %2912 = vmatpush2.msra.mxu0 0.0
        %2913 = vmatprep.subr.mxu0 0.0
        %2914 = vmatpush2.msra.mxu0 0.0
        %2915 = vmatprep.subr.mxu0 0.0
        %2916 = vmatpush2.msra.mxu0 0.0
        %2917 = vmatprep.subr.mxu0 0.0
        %2918 = vmatpush2.msra.mxu0 0.0
        %2919 = vmatprep.subr.mxu0 0.0
        %2920 = vmatpush2.msra.mxu0 0.0
        %2921 = vmatprep.subr.mxu0 0.0
        %2922 = vmatpush2.msra.mxu0 0.0
        %2923 = vmatprep.subr.mxu0 0.0
        %2924 = vmatpush2.msra.mxu0 0.0
        %2925 = vmatprep.mubr.f32.mxu0 0.0
        %2926 = vmatmul.mubr.f32.gmra.mxu0 %v2857
        %v2927 = vpop.f32.mrf.mxu0
        %v2928 = vadd.f32 0.0, %v2927
        %v2929 = vpop.f32.mrf.mxu0
        %2930 = vdwg.mxu0
        %v2931 = vmax.f32 %v2928, 1.0
        %v2932 = vrcp.pop %v2931
        %v2933 = vmul.f32 1.0, %v2932
        %v2935 = vsel %vm2405, %v2605, 0
        %2937 = vmatprep.subr.mxu0 0.0
        %2938 = vmatpush1.msra.mxu0 0.0
        %2939 = vmatprep.subr.mxu0 0.0
        %2940 = vmatpush1.msra.mxu0 0.0
        %2941 = vmatprep.subr.mxu0 0.0
        %2942 = vmatpush1.msra.mxu0 0.0
        %2943 = vmatprep.subr.mxu0 0.0
        %2944 = vmatpush1.msra.mxu0 0.0
        %2945 = vmatprep.subr.mxu0 0.0
        %2946 = vmatpush1.msra.mxu0 0.0
        %2947 = vmatprep.subr.mxu0 0.0
        %2948 = vmatpush1.msra.mxu0 0.0
        %2949 = vmatprep.subr.mxu0 0.0
        %2950 = vmatpush1.msra.mxu0 0.0
        %2951 = vmatprep.subr.mxu0 0.0
        %2952 = vmatpush1.msra.mxu0 0.0
        %2953 = vmatprep.subr.mxu0 0.0
        %2954 = vmatpush1.msra.mxu0 0.0
        %2955 = vmatprep.subr.mxu0 0.0
        %2956 = vmatpush1.msra.mxu0 0.0
        %2957 = vmatprep.subr.mxu0 0.0
        %2958 = vmatpush1.msra.mxu0 0.0
        %2959 = vmatprep.subr.mxu0 0.0
        %2960 = vmatpush1.msra.mxu0 0.0
        %2961 = vmatprep.subr.mxu0 0.0
        %2962 = vmatpush1.msra.mxu0 0.0
        %2963 = vmatprep.subr.mxu0 0.0
        %2964 = vmatpush1.msra.mxu0 0.0
        %2965 = vmatprep.subr.mxu0 0.0
        %2966 = vmatpush1.msra.mxu0 0.0
        %2967 = vmatprep.subr.mxu0 0.0
        %2968 = vmatpush1.msra.mxu0 %v2935
        %2969 = vmatprep.subr.mxu0 0.0
        %2970 = vmatpush2.msra.mxu0 0.0
        %2971 = vmatprep.subr.mxu0 0.0
        %2972 = vmatpush2.msra.mxu0 0.0
        %2973 = vmatprep.subr.mxu0 0.0
        %2974 = vmatpush2.msra.mxu0 0.0
        %2975 = vmatprep.subr.mxu0 0.0
        %2976 = vmatpush2.msra.mxu0 0.0
        %2977 = vmatprep.subr.mxu0 0.0
        %2978 = vmatpush2.msra.mxu0 0.0
        %2979 = vmatprep.subr.mxu0 0.0
        %2980 = vmatpush2.msra.mxu0 0.0
        %2981 = vmatprep.subr.mxu0 0.0
        %2982 = vmatpush2.msra.mxu0 0.0
        %2983 = vmatprep.subr.mxu0 0.0
        %2984 = vmatpush2.msra.mxu0 0.0
        %2985 = vmatprep.subr.mxu0 0.0
        %2986 = vmatpush2.msra.mxu0 0.0
        %2987 = vmatprep.subr.mxu0 0.0
        %2988 = vmatpush2.msra.mxu0 0.0
        %2989 = vmatprep.subr.mxu0 0.0
        %2990 = vmatpush2.msra.mxu0 0.0
        %2991 = vmatprep.subr.mxu0 0.0
        %2992 = vmatpush2.msra.mxu0 0.0
        %2993 = vmatprep.subr.mxu0 0.0
        %2994 = vmatpush2.msra.mxu0 0.0
        %2995 = vmatprep.subr.mxu0 0.0
        %2996 = vmatpush2.msra.mxu0 0.0
        %2997 = vmatprep.subr.mxu0 0.0
        %2998 = vmatpush2.msra.mxu0 0.0
        %2999 = vmatprep.subr.mxu0 0.0
        %3000 = vmatpush2.msra.mxu0 0.0
        %3001 = vmatprep.mubr.f32.mxu0 0.0
        %3002 = vmatmul.mubr.f32.gmra.mxu0 %v2857
        %v3003 = vpop.f32.mrf.mxu0
        %v3004 = vadd.f32 0.0, %v3003
        %v3005 = vpop.f32.mrf.mxu0
        %3006 = vdwg.mxu0
        %3008 = vset.pattern.permute.xlu0 0
        %3009 = vperm.xlu0 %3008, %v2933
        %v3010 = vpop.permute.xlu0 %3009
        %v3012 = vmul.f32 %v3004, %v3010
        %3013 = vrot.lane.b32.xlu0 %v2605, 48
        %v3014 = vpop.permute.xlu0 %3013
        %v3016 = vsel %vm1799, %v3012, %v3014
        %v3017 = vld [vmem:[%s3 + $0x220] sm:$0xff]
        %v3018 = vld [vmem:[%s3 + $0x228] sm:$0xff]
        %v3019 = vld [vmem:[%s3 + $0x230] sm:$0xff]
        %v3020 = vld [vmem:[%s3 + $0x238] sm:$0xff]
        %v3021 = vld [vmem:[%s3 + $0x240] sm:$0xff]
        %v3022 = vld [vmem:[%s3 + $0x248] sm:$0xff]
        %v3023 = vld [vmem:[%s3 + $0x250] sm:$0xff]
        %v3024 = vld [vmem:[%s3 + $0x258] sm:$0xff]
        %v3025 = vld [vmem:[%s3 + $0x260] sm:$0xff]
        %v3026 = vld [vmem:[%s3 + $0x268] sm:$0xff]
        %v3027 = vld [vmem:[%s3 + $0x270] sm:$0xff]
        %v3028 = vld [vmem:[%s3 + $0x278] sm:$0xff]
        %v3029 = vld [vmem:[%s4 + $0x10] sm:$0x1]
        %v3031 = vsel %vm1818, %v3016, 0
        %3033 = vmatprep.subr.mxu0 0.0
        %3034 = vmatpush1.msra.mxu0 0.0
        %3035 = vmatprep.subr.mxu0 0.0
        %3036 = vmatpush1.msra.mxu0 0.0
        %3037 = vmatprep.subr.mxu0 0.0
        %3038 = vmatpush1.msra.mxu0 0.0
        %3039 = vmatprep.subr.mxu0 0.0
        %3040 = vmatpush1.msra.mxu0 0.0
        %3041 = vmatprep.subr.mxu0 0.0
        %3042 = vmatpush1.msra.mxu0 %v3028
        %3043 = vmatprep.subr.mxu0 0.0
        %3044 = vmatpush1.msra.mxu0 %v3027
        %3045 = vmatprep.subr.mxu0 0.0
        %3046 = vmatpush1.msra.mxu0 %v3026
        %3047 = vmatprep.subr.mxu0 0.0
        %3048 = vmatpush1.msra.mxu0 %v3025
        %3049 = vmatprep.subr.mxu0 0.0
        %3050 = vmatpush1.msra.mxu0 %v3024
        %3051 = vmatprep.subr.mxu0 0.0
        %3052 = vmatpush1.msra.mxu0 %v3023
        %3053 = vmatprep.subr.mxu0 0.0
        %3054 = vmatpush1.msra.mxu0 %v3022
        %3055 = vmatprep.subr.mxu0 0.0
        %3056 = vmatpush1.msra.mxu0 %v3021
        %3057 = vmatprep.subr.mxu0 0.0
        %3058 = vmatpush1.msra.mxu0 %v3020
        %3059 = vmatprep.subr.mxu0 0.0
        %3060 = vmatpush1.msra.mxu0 %v3019
        %3061 = vmatprep.subr.mxu0 0.0
        %3062 = vmatpush1.msra.mxu0 %v3018
        %3063 = vmatprep.subr.mxu0 0.0
        %3064 = vmatpush1.msra.mxu0 %v3017
        %3065 = vmatprep.subr.mxu0 0.0
        %3066 = vmatpush2.msra.mxu0 0.0
        %3067 = vmatprep.subr.mxu0 0.0
        %3068 = vmatpush2.msra.mxu0 0.0
        %3069 = vmatprep.subr.mxu0 0.0
        %3070 = vmatpush2.msra.mxu0 0.0
        %3071 = vmatprep.subr.mxu0 0.0
        %3072 = vmatpush2.msra.mxu0 0.0
        %3073 = vmatprep.subr.mxu0 0.0
        %3074 = vmatpush2.msra.mxu0 0.0
        %3075 = vmatprep.subr.mxu0 0.0
        %3076 = vmatpush2.msra.mxu0 0.0
        %3077 = vmatprep.subr.mxu0 0.0
        %3078 = vmatpush2.msra.mxu0 0.0
        %3079 = vmatprep.subr.mxu0 0.0
        %3080 = vmatpush2.msra.mxu0 0.0
        %3081 = vmatprep.subr.mxu0 0.0
        %3082 = vmatpush2.msra.mxu0 0.0
        %3083 = vmatprep.subr.mxu0 0.0
        %3084 = vmatpush2.msra.mxu0 0.0
        %3085 = vmatprep.subr.mxu0 0.0
        %3086 = vmatpush2.msra.mxu0 0.0
        %3087 = vmatprep.subr.mxu0 0.0
        %3088 = vmatpush2.msra.mxu0 0.0
        %3089 = vmatprep.subr.mxu0 0.0
        %3090 = vmatpush2.msra.mxu0 0.0
        %3091 = vmatprep.subr.mxu0 0.0
        %3092 = vmatpush2.msra.mxu0 0.0
        %3093 = vmatprep.subr.mxu0 0.0
        %3094 = vmatpush2.msra.mxu0 0.0
        %3095 = vmatprep.subr.mxu0 0.0
        %3096 = vmatpush2.msra.mxu0 0.0
        %3097 = vmatprep.mubr.f32.mxu0 0.0
        %3098 = vmatmul.mubr.f32.gmra.mxu0 %v3031
        %v3099 = vpop.f32.mrf.mxu0
        %v3100 = vadd.f32 %v3029, %v3099
        %v3101 = vpop.f32.mrf.mxu0
        %3102 = vdwg.mxu0
        %v3103 = vmax.f32 %v3100, 0.0
        %v3104 = vld [vmem:[%s4 + $0x11] sm:$0x1]
        %v3105 = vmul.f32 %v3103, %v3104
        %v3106 = vld [vmem:[%s4 + $0x12] sm:$0x1]
        %v3107 = vadd.f32 %v3105, %v3106
        %v3109 = vsel %vm2405, %v3107, 0
        %3111 = vmatprep.subr.mxu0 0.0
        %3112 = vmatpush1.msra.mxu0 0.0
        %3113 = vmatprep.subr.mxu0 0.0
        %3114 = vmatpush1.msra.mxu0 0.0
        %3115 = vmatprep.subr.mxu0 0.0
        %3116 = vmatpush1.msra.mxu0 0.0
        %3117 = vmatprep.subr.mxu0 0.0
        %3118 = vmatpush1.msra.mxu0 0.0
        %3119 = vmatprep.subr.mxu0 0.0
        %3120 = vmatpush1.msra.mxu0 0.0
        %3121 = vmatprep.subr.mxu0 0.0
        %3122 = vmatpush1.msra.mxu0 0.0
        %3123 = vmatprep.subr.mxu0 0.0
        %3124 = vmatpush1.msra.mxu0 0.0
        %3125 = vmatprep.subr.mxu0 0.0
        %3126 = vmatpush1.msra.mxu0 0.0
        %3127 = vmatprep.subr.mxu0 0.0
        %3128 = vmatpush1.msra.mxu0 0.0
        %3129 = vmatprep.subr.mxu0 0.0
        %3130 = vmatpush1.msra.mxu0 0.0
        %3131 = vmatprep.subr.mxu0 0.0
        %3132 = vmatpush1.msra.mxu0 0.0
        %3133 = vmatprep.subr.mxu0 0.0
        %3134 = vmatpush1.msra.mxu0 0.0
        %3135 = vmatprep.subr.mxu0 0.0
        %3136 = vmatpush1.msra.mxu0 0.0
        %3137 = vmatprep.subr.mxu0 0.0
        %3138 = vmatpush1.msra.mxu0 0.0
        %3139 = vmatprep.subr.mxu0 0.0
        %3140 = vmatpush1.msra.mxu0 0.0
        %3141 = vmatprep.subr.mxu0 0.0
        %3142 = vmatpush1.msra.mxu0 %v3109
        %3143 = vmatprep.subr.mxu0 0.0
        %3144 = vmatpush2.msra.mxu0 0.0
        %3145 = vmatprep.subr.mxu0 0.0
        %3146 = vmatpush2.msra.mxu0 0.0
        %3147 = vmatprep.subr.mxu0 0.0
        %3148 = vmatpush2.msra.mxu0 0.0
        %3149 = vmatprep.subr.mxu0 0.0
        %3150 = vmatpush2.msra.mxu0 0.0
        %3151 = vmatprep.subr.mxu0 0.0
        %3152 = vmatpush2.msra.mxu0 0.0
        %3153 = vmatprep.subr.mxu0 0.0
        %3154 = vmatpush2.msra.mxu0 0.0
        %3155 = vmatprep.subr.mxu0 0.0
        %3156 = vmatpush2.msra.mxu0 0.0
        %3157 = vmatprep.subr.mxu0 0.0
        %3158 = vmatpush2.msra.mxu0 0.0
        %3159 = vmatprep.subr.mxu0 0.0
        %3160 = vmatpush2.msra.mxu0 0.0
        %3161 = vmatprep.subr.mxu0 0.0
        %3162 = vmatpush2.msra.mxu0 0.0
        %3163 = vmatprep.subr.mxu0 0.0
        %3164 = vmatpush2.msra.mxu0 0.0
        %3165 = vmatprep.subr.mxu0 0.0
        %3166 = vmatpush2.msra.mxu0 0.0
        %3167 = vmatprep.subr.mxu0 0.0
        %3168 = vmatpush2.msra.mxu0 0.0
        %3169 = vmatprep.subr.mxu0 0.0
        %3170 = vmatpush2.msra.mxu0 0.0
        %3171 = vmatprep.subr.mxu0 0.0
        %3172 = vmatpush2.msra.mxu0 0.0
        %3173 = vmatprep.subr.mxu0 0.0
        %3174 = vmatpush2.msra.mxu0 0.0
        %3175 = vmatprep.mubr.f32.mxu0 0.0
        %3176 = vmatmul.mubr.f32.gmra.mxu0 %v2857
        %v3177 = vpop.f32.mrf.mxu0
        %v3178 = vadd.f32 0.0, %v3177
        %v3179 = vpop.f32.mrf.mxu0
        %3180 = vdwg.mxu0
        %v3181 = vmul.f32 %v3178, %v3010
        %3182 = vrot.lane.b32.xlu0 %v3107, 16
        %v3183 = vpop.permute.xlu0 %3182
        %v3185 = vsel %vm268, %v3181, %v3183
        %v3186 = vld [vmem:[%s3 + $0x280] sm:$0xff]
        %v3187 = vld [vmem:[%s3 + $0x288] sm:$0xff]
        %v3188 = vld [vmem:[%s3 + $0x290] sm:$0xff]
        %v3189 = vld [vmem:[%s3 + $0x298] sm:$0xff]
        %v3190 = vld [vmem:[%s4 + $0x13] sm:$0x1]
        %v3192 = vsel %vm655, %v3185, 0
        %3194 = vmatprep.subr.mxu0 0.0
        %3195 = vmatpush1.msra.mxu0 0.0
        %3196 = vmatprep.subr.mxu0 0.0
        %3197 = vmatpush1.msra.mxu0 0.0
        %3198 = vmatprep.subr.mxu0 0.0
        %3199 = vmatpush1.msra.mxu0 0.0
        %3200 = vmatprep.subr.mxu0 0.0
        %3201 = vmatpush1.msra.mxu0 0.0
        %3202 = vmatprep.subr.mxu0 0.0
        %3203 = vmatpush1.msra.mxu0 0.0
        %3204 = vmatprep.subr.mxu0 0.0
        %3205 = vmatpush1.msra.mxu0 0.0
        %3206 = vmatprep.subr.mxu0 0.0
        %3207 = vmatpush1.msra.mxu0 0.0
        %3208 = vmatprep.subr.mxu0 0.0
        %3209 = vmatpush1.msra.mxu0 0.0
        %3210 = vmatprep.subr.mxu0 0.0
        %3211 = vmatpush1.msra.mxu0 0.0
        %3212 = vmatprep.subr.mxu0 0.0
        %3213 = vmatpush1.msra.mxu0 0.0
        %3214 = vmatprep.subr.mxu0 0.0
        %3215 = vmatpush1.msra.mxu0 0.0
        %3216 = vmatprep.subr.mxu0 0.0
        %3217 = vmatpush1.msra.mxu0 0.0
        %3218 = vmatprep.subr.mxu0 0.0
        %3219 = vmatpush1.msra.mxu0 %v3189
        %3220 = vmatprep.subr.mxu0 0.0
        %3221 = vmatpush1.msra.mxu0 %v3188
        %3222 = vmatprep.subr.mxu0 0.0
        %3223 = vmatpush1.msra.mxu0 %v3187
        %3224 = vmatprep.subr.mxu0 0.0
        %3225 = vmatpush1.msra.mxu0 %v3186
        %3226 = vmatprep.subr.mxu0 0.0
        %3227 = vmatpush2.msra.mxu0 0.0
        %3228 = vmatprep.subr.mxu0 0.0
        %3229 = vmatpush2.msra.mxu0 0.0
        %3230 = vmatprep.subr.mxu0 0.0
        %3231 = vmatpush2.msra.mxu0 0.0
        %3232 = vmatprep.subr.mxu0 0.0
        %3233 = vmatpush2.msra.mxu0 0.0
        %3234 = vmatprep.subr.mxu0 0.0
        %3235 = vmatpush2.msra.mxu0 0.0
        %3236 = vmatprep.subr.mxu0 0.0
        %3237 = vmatpush2.msra.mxu0 0.0
        %3238 = vmatprep.subr.mxu0 0.0
        %3239 = vmatpush2.msra.mxu0 0.0
        %3240 = vmatprep.subr.mxu0 0.0
        %3241 = vmatpush2.msra.mxu0 0.0
        %3242 = vmatprep.subr.mxu0 0.0
        %3243 = vmatpush2.msra.mxu0 0.0
        %3244 = vmatprep.subr.mxu0 0.0
        %3245 = vmatpush2.msra.mxu0 0.0
        %3246 = vmatprep.subr.mxu0 0.0
        %3247 = vmatpush2.msra.mxu0 0.0
        %3248 = vmatprep.subr.mxu0 0.0
        %3249 = vmatpush2.msra.mxu0 0.0
        %3250 = vmatprep.subr.mxu0 0.0
        %3251 = vmatpush2.msra.mxu0 0.0
        %3252 = vmatprep.subr.mxu0 0.0
        %3253 = vmatpush2.msra.mxu0 0.0
        %3254 = vmatprep.subr.mxu0 0.0
        %3255 = vmatpush2.msra.mxu0 0.0
        %3256 = vmatprep.subr.mxu0 0.0
        %3257 = vmatpush2.msra.mxu0 0.0
        %3258 = vmatprep.mubr.f32.mxu0 0.0
        %3259 = vmatmul.mubr.f32.gmra.mxu0 %v3192
        %v3260 = vpop.f32.mrf.mxu0
        %v3261 = vadd.f32 %v3190, %v3260
        %v3262 = vpop.f32.mrf.mxu0
        %3263 = vdwg.mxu0
        %v3264 = vmax.f32 %v3261, 0.0
        %v3265 = vld [vmem:[%s4 + $0x14] sm:$0x1]
        %v3266 = vmul.f32 %v3264, %v3265
        %v3267 = vld [vmem:[%s4 + $0x15] sm:$0x1]
        %v3268 = vadd.f32 %v3266, %v3267
        %v3270 = vsel %vm2405, %v3268, 0
        %3272 = vmatprep.subr.mxu0 0.0
        %3273 = vmatpush1.msra.mxu0 0.0
        %3274 = vmatprep.subr.mxu0 0.0
        %3275 = vmatpush1.msra.mxu0 0.0
        %3276 = vmatprep.subr.mxu0 0.0
        %3277 = vmatpush1.msra.mxu0 0.0
        %3278 = vmatprep.subr.mxu0 0.0
        %3279 = vmatpush1.msra.mxu0 0.0
        %3280 = vmatprep.subr.mxu0 0.0
        %3281 = vmatpush1.msra.mxu0 0.0
        %3282 = vmatprep.subr.mxu0 0.0
        %3283 = vmatpush1.msra.mxu0 0.0
        %3284 = vmatprep.subr.mxu0 0.0
        %3285 = vmatpush1.msra.mxu0 0.0
        %3286 = vmatprep.subr.mxu0 0.0
        %3287 = vmatpush1.msra.mxu0 0.0
        %3288 = vmatprep.subr.mxu0 0.0
        %3289 = vmatpush1.msra.mxu0 0.0
        %3290 = vmatprep.subr.mxu0 0.0
        %3291 = vmatpush1.msra.mxu0 0.0
        %3292 = vmatprep.subr.mxu0 0.0
        %3293 = vmatpush1.msra.mxu0 0.0
        %3294 = vmatprep.subr.mxu0 0.0
        %3295 = vmatpush1.msra.mxu0 0.0
        %3296 = vmatprep.subr.mxu0 0.0
        %3297 = vmatpush1.msra.mxu0 0.0
        %3298 = vmatprep.subr.mxu0 0.0
        %3299 = vmatpush1.msra.mxu0 0.0
        %3300 = vmatprep.subr.mxu0 0.0
        %3301 = vmatpush1.msra.mxu0 0.0
        %3302 = vmatprep.subr.mxu0 0.0
        %3303 = vmatpush1.msra.mxu0 %v3270
        %3304 = vmatprep.subr.mxu0 0.0
        %3305 = vmatpush2.msra.mxu0 0.0
        %3306 = vmatprep.subr.mxu0 0.0
        %3307 = vmatpush2.msra.mxu0 0.0
        %3308 = vmatprep.subr.mxu0 0.0
        %3309 = vmatpush2.msra.mxu0 0.0
        %3310 = vmatprep.subr.mxu0 0.0
        %3311 = vmatpush2.msra.mxu0 0.0
        %3312 = vmatprep.subr.mxu0 0.0
        %3313 = vmatpush2.msra.mxu0 0.0
        %3314 = vmatprep.subr.mxu0 0.0
        %3315 = vmatpush2.msra.mxu0 0.0
        %3316 = vmatprep.subr.mxu0 0.0
        %3317 = vmatpush2.msra.mxu0 0.0
        %3318 = vmatprep.subr.mxu0 0.0
        %3319 = vmatpush2.msra.mxu0 0.0
        %3320 = vmatprep.subr.mxu0 0.0
        %3321 = vmatpush2.msra.mxu0 0.0
        %3322 = vmatprep.subr.mxu0 0.0
        %3323 = vmatpush2.msra.mxu0 0.0
        %3324 = vmatprep.subr.mxu0 0.0
        %3325 = vmatpush2.msra.mxu0 0.0
        %3326 = vmatprep.subr.mxu0 0.0
        %3327 = vmatpush2.msra.mxu0 0.0
        %3328 = vmatprep.subr.mxu0 0.0
        %3329 = vmatpush2.msra.mxu0 0.0
        %3330 = vmatprep.subr.mxu0 0.0
        %3331 = vmatpush2.msra.mxu0 0.0
        %3332 = vmatprep.subr.mxu0 0.0
        %3333 = vmatpush2.msra.mxu0 0.0
        %3334 = vmatprep.subr.mxu0 0.0
        %3335 = vmatpush2.msra.mxu0 0.0
        %3336 = vmatprep.mubr.f32.mxu0 0.0
        %3337 = vmatmul.mubr.f32.gmra.mxu0 %v2857
        %v3338 = vpop.f32.mrf.mxu0
        %v3339 = vadd.f32 0.0, %v3338
        %v3340 = vpop.f32.mrf.mxu0
        %3341 = vdwg.mxu0
        %v3342 = vmul.f32 %v3339, %v3010
        %3343 = vrot.lane.b32.xlu0 %v3268, 16
        %v3344 = vpop.permute.xlu0 %3343
        %v3346 = vsel %vm268, %v3342, %v3344
        %v3347 = vld [vmem:[%s3 + $0x2a0] sm:$0xff]
        %v3348 = vld [vmem:[%s3 + $0x2a8] sm:$0xff]
        %v3349 = vld [vmem:[%s3 + $0x2b0] sm:$0xff]
        %v3350 = vld [vmem:[%s3 + $0x2b8] sm:$0xff]
        %v3351 = vld [vmem:[%s4 + $0x16] sm:$0x1]
        %v3353 = vsel %vm655, %v3346, 0
        %3355 = vmatprep.subr.mxu0 0.0
        %3356 = vmatpush1.msra.mxu0 0.0
        %3357 = vmatprep.subr.mxu0 0.0
        %3358 = vmatpush1.msra.mxu0 0.0
        %3359 = vmatprep.subr.mxu0 0.0
        %3360 = vmatpush1.msra.mxu0 0.0
        %3361 = vmatprep.subr.mxu0 0.0
        %3362 = vmatpush1.msra.mxu0 0.0
        %3363 = vmatprep.subr.mxu0 0.0
        %3364 = vmatpush1.msra.mxu0 0.0
        %3365 = vmatprep.subr.mxu0 0.0
        %3366 = vmatpush1.msra.mxu0 0.0
        %3367 = vmatprep.subr.mxu0 0.0
        %3368 = vmatpush1.msra.mxu0 0.0
        %3369 = vmatprep.subr.mxu0 0.0
        %3370 = vmatpush1.msra.mxu0 0.0
        %3371 = vmatprep.subr.mxu0 0.0
        %3372 = vmatpush1.msra.mxu0 0.0
        %3373 = vmatprep.subr.mxu0 0.0
        %3374 = vmatpush1.msra.mxu0 0.0
        %3375 = vmatprep.subr.mxu0 0.0
        %3376 = vmatpush1.msra.mxu0 0.0
        %3377 = vmatprep.subr.mxu0 0.0
        %3378 = vmatpush1.msra.mxu0 0.0
        %3379 = vmatprep.subr.mxu0 0.0
        %3380 = vmatpush1.msra.mxu0 %v3350
        %3381 = vmatprep.subr.mxu0 0.0
        %3382 = vmatpush1.msra.mxu0 %v3349
        %3383 = vmatprep.subr.mxu0 0.0
        %3384 = vmatpush1.msra.mxu0 %v3348
        %3385 = vmatprep.subr.mxu0 0.0
        %3386 = vmatpush1.msra.mxu0 %v3347
        %3387 = vmatprep.subr.mxu0 0.0
        %3388 = vmatpush2.msra.mxu0 0.0
        %3389 = vmatprep.subr.mxu0 0.0
        %3390 = vmatpush2.msra.mxu0 0.0
        %3391 = vmatprep.subr.mxu0 0.0
        %3392 = vmatpush2.msra.mxu0 0.0
        %3393 = vmatprep.subr.mxu0 0.0
        %3394 = vmatpush2.msra.mxu0 0.0
        %3395 = vmatprep.subr.mxu0 0.0
        %3396 = vmatpush2.msra.mxu0 0.0
        %3397 = vmatprep.subr.mxu0 0.0
        %3398 = vmatpush2.msra.mxu0 0.0
        %3399 = vmatprep.subr.mxu0 0.0
        %3400 = vmatpush2.msra.mxu0 0.0
        %3401 = vmatprep.subr.mxu0 0.0
        %3402 = vmatpush2.msra.mxu0 0.0
        %3403 = vmatprep.subr.mxu0 0.0
        %3404 = vmatpush2.msra.mxu0 0.0
        %3405 = vmatprep.subr.mxu0 0.0
        %3406 = vmatpush2.msra.mxu0 0.0
        %3407 = vmatprep.subr.mxu0 0.0
        %3408 = vmatpush2.msra.mxu0 0.0
        %3409 = vmatprep.subr.mxu0 0.0
        %3410 = vmatpush2.msra.mxu0 0.0
        %3411 = vmatprep.subr.mxu0 0.0
        %3412 = vmatpush2.msra.mxu0 0.0
        %3413 = vmatprep.subr.mxu0 0.0
        %3414 = vmatpush2.msra.mxu0 0.0
        %3415 = vmatprep.subr.mxu0 0.0
        %3416 = vmatpush2.msra.mxu0 0.0
        %3417 = vmatprep.subr.mxu0 0.0
        %3418 = vmatpush2.msra.mxu0 0.0
        %3419 = vmatprep.mubr.f32.mxu0 0.0
        %3420 = vmatmul.mubr.f32.gmra.mxu0 %v3353
        %v3421 = vpop.f32.mrf.mxu0
        %v3422 = vadd.f32 %v3351, %v3421
        %v3423 = vpop.f32.mrf.mxu0
        %3424 = vdwg.mxu0
        %v3425 = vld [vmem:[%s4 + $0x17] sm:$0x1]
        %v3426 = vld [vmem:[%s3 + $0x2c0] sm:$0xff]
        %v3427 = vld [vmem:[%s3 + $0x2c8] sm:$0xff]
        %v3428 = vld [vmem:[%s3 + $0x2d0] sm:$0xff]
        %v3429 = vld [vmem:[%s3 + $0x2d8] sm:$0xff]
        %v3430 = vld [vmem:[%s3 + $0x2e0] sm:$0xff]
        %v3431 = vld [vmem:[%s3 + $0x2e8] sm:$0xff]
        %v3433 = vsel %vm1799, %v1637, 0
        %3435 = vmatprep.subr.mxu0 0.0
        %3436 = vmatpush1.msra.mxu0 0.0
        %3437 = vmatprep.subr.mxu0 0.0
        %3438 = vmatpush1.msra.mxu0 0.0
        %3439 = vmatprep.subr.mxu0 0.0
        %3440 = vmatpush1.msra.mxu0 0.0
        %3441 = vmatprep.subr.mxu0 0.0
        %3442 = vmatpush1.msra.mxu0 0.0
        %3443 = vmatprep.subr.mxu0 0.0
        %3444 = vmatpush1.msra.mxu0 0.0
        %3445 = vmatprep.subr.mxu0 0.0
        %3446 = vmatpush1.msra.mxu0 0.0
        %3447 = vmatprep.subr.mxu0 0.0
        %3448 = vmatpush1.msra.mxu0 0.0
        %3449 = vmatprep.subr.mxu0 0.0
        %3450 = vmatpush1.msra.mxu0 0.0
        %3451 = vmatprep.subr.mxu0 0.0
        %3452 = vmatpush1.msra.mxu0 0.0
        %3453 = vmatprep.subr.mxu0 0.0
        %3454 = vmatpush1.msra.mxu0 0.0
        %3455 = vmatprep.subr.mxu0 0.0
        %3456 = vmatpush1.msra.mxu0 %v3431
        %3457 = vmatprep.subr.mxu0 0.0
        %3458 = vmatpush1.msra.mxu0 %v3430
        %3459 = vmatprep.subr.mxu0 0.0
        %3460 = vmatpush1.msra.mxu0 %v3429
        %3461 = vmatprep.subr.mxu0 0.0
        %3462 = vmatpush1.msra.mxu0 %v3428
        %3463 = vmatprep.subr.mxu0 0.0
        %3464 = vmatpush1.msra.mxu0 %v3427
        %3465 = vmatprep.subr.mxu0 0.0
        %3466 = vmatpush1.msra.mxu0 %v3426
        %3467 = vmatprep.subr.mxu0 0.0
        %3468 = vmatpush2.msra.mxu0 0.0
        %3469 = vmatprep.subr.mxu0 0.0
        %3470 = vmatpush2.msra.mxu0 0.0
        %3471 = vmatprep.subr.mxu0 0.0
        %3472 = vmatpush2.msra.mxu0 0.0
        %3473 = vmatprep.subr.mxu0 0.0
        %3474 = vmatpush2.msra.mxu0 0.0
        %3475 = vmatprep.subr.mxu0 0.0
        %3476 = vmatpush2.msra.mxu0 0.0
        %3477 = vmatprep.subr.mxu0 0.0
        %3478 = vmatpush2.msra.mxu0 0.0
        %3479 = vmatprep.subr.mxu0 0.0
        %3480 = vmatpush2.msra.mxu0 0.0
        %3481 = vmatprep.subr.mxu0 0.0
        %3482 = vmatpush2.msra.mxu0 0.0
        %3483 = vmatprep.subr.mxu0 0.0
        %3484 = vmatpush2.msra.mxu0 0.0
        %3485 = vmatprep.subr.mxu0 0.0
        %3486 = vmatpush2.msra.mxu0 0.0
        %3487 = vmatprep.subr.mxu0 0.0
        %3488 = vmatpush2.msra.mxu0 0.0
        %3489 = vmatprep.subr.mxu0 0.0
        %3490 = vmatpush2.msra.mxu0 0.0
        %3491 = vmatprep.subr.mxu0 0.0
        %3492 = vmatpush2.msra.mxu0 0.0
        %3493 = vmatprep.subr.mxu0 0.0
        %3494 = vmatpush2.msra.mxu0 0.0
        %3495 = vmatprep.subr.mxu0 0.0
        %3496 = vmatpush2.msra.mxu0 0.0
        %3497 = vmatprep.subr.mxu0 0.0
        %3498 = vmatpush2.msra.mxu0 0.0
        %3499 = vmatprep.mubr.f32.mxu0 0.0
        %3500 = vmatmul.mubr.f32.gmra.mxu0 %v3433
        %v3501 = vpop.f32.mrf.mxu0
        %v3502 = vadd.f32 0.0, %v3501
        %v3503 = vpop.f32.mrf.mxu0
        %3504 = vdwg.mxu0
        %v3505 = vadd.f32 %v3425, %v3502
        %v3506 = vld [vmem:[%s3 + $0x2f0] sm:$0xff]
        %v3507 = vld [vmem:[%s3 + $0x2f8] sm:$0xff]
        %v3508 = vld [vmem:[%s3 + $0x300] sm:$0xff]
        %v3509 = vld [vmem:[%s3 + $0x308] sm:$0xff]
        %v3510 = vld [vmem:[%s3 + $0x310] sm:$0xff]
        %v3511 = vld [vmem:[%s3 + $0x318] sm:$0xff]
        %v3512 = vsel %vm1799, %v2605, 0
        %3514 = vmatprep.subr.mxu0 0.0
        %3515 = vmatpush1.msra.mxu0 0.0
        %3516 = vmatprep.subr.mxu0 0.0
        %3517 = vmatpush1.msra.mxu0 0.0
        %3518 = vmatprep.subr.mxu0 0.0
        %3519 = vmatpush1.msra.mxu0 0.0
        %3520 = vmatprep.subr.mxu0 0.0
        %3521 = vmatpush1.msra.mxu0 0.0
        %3522 = vmatprep.subr.mxu0 0.0
        %3523 = vmatpush1.msra.mxu0 0.0
        %3524 = vmatprep.subr.mxu0 0.0
        %3525 = vmatpush1.msra.mxu0 0.0
        %3526 = vmatprep.subr.mxu0 0.0
        %3527 = vmatpush1.msra.mxu0 0.0
        %3528 = vmatprep.subr.mxu0 0.0
        %3529 = vmatpush1.msra.mxu0 0.0
        %3530 = vmatprep.subr.mxu0 0.0
        %3531 = vmatpush1.msra.mxu0 0.0
        %3532 = vmatprep.subr.mxu0 0.0
        %3533 = vmatpush1.msra.mxu0 0.0
        %3534 = vmatprep.subr.mxu0 0.0
        %3535 = vmatpush1.msra.mxu0 %v3511
        %3536 = vmatprep.subr.mxu0 0.0
        %3537 = vmatpush1.msra.mxu0 %v3510
        %3538 = vmatprep.subr.mxu0 0.0
        %3539 = vmatpush1.msra.mxu0 %v3509
        %3540 = vmatprep.subr.mxu0 0.0
        %3541 = vmatpush1.msra.mxu0 %v3508
        %3542 = vmatprep.subr.mxu0 0.0
        %3543 = vmatpush1.msra.mxu0 %v3507
        %3544 = vmatprep.subr.mxu0 0.0
        %3545 = vmatpush1.msra.mxu0 %v3506
        %3546 = vmatprep.subr.mxu0 0.0
        %3547 = vmatpush2.msra.mxu0 0.0
        %3548 = vmatprep.subr.mxu0 0.0
        %3549 = vmatpush2.msra.mxu0 0.0
        %3550 = vmatprep.subr.mxu0 0.0
        %3551 = vmatpush2.msra.mxu0 0.0
        %3552 = vmatprep.subr.mxu0 0.0
        %3553 = vmatpush2.msra.mxu0 0.0
        %3554 = vmatprep.subr.mxu0 0.0
        %3555 = vmatpush2.msra.mxu0 0.0
        %3556 = vmatprep.subr.mxu0 0.0
        %3557 = vmatpush2.msra.mxu0 0.0
        %3558 = vmatprep.subr.mxu0 0.0
        %3559 = vmatpush2.msra.mxu0 0.0
        %3560 = vmatprep.subr.mxu0 0.0
        %3561 = vmatpush2.msra.mxu0 0.0
        %3562 = vmatprep.subr.mxu0 0.0
        %3563 = vmatpush2.msra.mxu0 0.0
        %3564 = vmatprep.subr.mxu0 0.0
        %3565 = vmatpush2.msra.mxu0 0.0
        %3566 = vmatprep.subr.mxu0 0.0
        %3567 = vmatpush2.msra.mxu0 0.0
        %3568 = vmatprep.subr.mxu0 0.0
        %3569 = vmatpush2.msra.mxu0 0.0
        %3570 = vmatprep.subr.mxu0 0.0
        %3571 = vmatpush2.msra.mxu0 0.0
        %3572 = vmatprep.subr.mxu0 0.0
        %3573 = vmatpush2.msra.mxu0 0.0
        %3574 = vmatprep.subr.mxu0 0.0
        %3575 = vmatpush2.msra.mxu0 0.0
        %3576 = vmatprep.subr.mxu0 0.0
        %3577 = vmatpush2.msra.mxu0 0.0
        %3578 = vmatprep.mubr.f32.mxu0 0.0
        %3579 = vmatmul.mubr.f32.gmra.mxu0 %v3512
        %v3580 = vpop.f32.mrf.mxu0
        %v3581 = vadd.f32 0.0, %v3580
        %v3582 = vpop.f32.mrf.mxu0
        %3583 = vdwg.mxu0
        %v3584 = vadd.f32 %v3505, %v3581
        %v3585 = vld [vmem:[%s3 + $0x320] sm:$0xff]
        %v3586 = vld [vmem:[%s3 + $0x328] sm:$0xff]
        %v3587 = vsel %vm268, %v3107, 0
        %3589 = vmatprep.subr.mxu0 0.0
        %3590 = vmatpush1.msra.mxu0 0.0
        %3591 = vmatprep.subr.mxu0 0.0
        %3592 = vmatpush1.msra.mxu0 0.0
        %3593 = vmatprep.subr.mxu0 0.0
        %3594 = vmatpush1.msra.mxu0 0.0
        %3595 = vmatprep.subr.mxu0 0.0
        %3596 = vmatpush1.msra.mxu0 0.0
        %3597 = vmatprep.subr.mxu0 0.0
        %3598 = vmatpush1.msra.mxu0 0.0
        %3599 = vmatprep.subr.mxu0 0.0
        %3600 = vmatpush1.msra.mxu0 0.0
        %3601 = vmatprep.subr.mxu0 0.0
        %3602 = vmatpush1.msra.mxu0 0.0
        %3603 = vmatprep.subr.mxu0 0.0
        %3604 = vmatpush1.msra.mxu0 0.0
        %3605 = vmatprep.subr.mxu0 0.0
        %3606 = vmatpush1.msra.mxu0 0.0
        %3607 = vmatprep.subr.mxu0 0.0
        %3608 = vmatpush1.msra.mxu0 0.0
        %3609 = vmatprep.subr.mxu0 0.0
        %3610 = vmatpush1.msra.mxu0 0.0
        %3611 = vmatprep.subr.mxu0 0.0
        %3612 = vmatpush1.msra.mxu0 0.0
        %3613 = vmatprep.subr.mxu0 0.0
        %3614 = vmatpush1.msra.mxu0 0.0
        %3615 = vmatprep.subr.mxu0 0.0
        %3616 = vmatpush1.msra.mxu0 0.0
        %3617 = vmatprep.subr.mxu0 0.0
        %3618 = vmatpush1.msra.mxu0 %v3586
        %3619 = vmatprep.subr.mxu0 0.0
        %3620 = vmatpush1.msra.mxu0 %v3585
        %3621 = vmatprep.subr.mxu0 0.0
        %3622 = vmatpush2.msra.mxu0 0.0
        %3623 = vmatprep.subr.mxu0 0.0
        %3624 = vmatpush2.msra.mxu0 0.0
        %3625 = vmatprep.subr.mxu0 0.0
        %3626 = vmatpush2.msra.mxu0 0.0
        %3627 = vmatprep.subr.mxu0 0.0
        %3628 = vmatpush2.msra.mxu0 0.0
        %3629 = vmatprep.subr.mxu0 0.0
        %3630 = vmatpush2.msra.mxu0 0.0
        %3631 = vmatprep.subr.mxu0 0.0
        %3632 = vmatpush2.msra.mxu0 0.0
        %3633 = vmatprep.subr.mxu0 0.0
        %3634 = vmatpush2.msra.mxu0 0.0
        %3635 = vmatprep.subr.mxu0 0.0
        %3636 = vmatpush2.msra.mxu0 0.0
        %3637 = vmatprep.subr.mxu0 0.0
        %3638 = vmatpush2.msra.mxu0 0.0
        %3639 = vmatprep.subr.mxu0 0.0
        %3640 = vmatpush2.msra.mxu0 0.0
        %3641 = vmatprep.subr.mxu0 0.0
        %3642 = vmatpush2.msra.mxu0 0.0
        %3643 = vmatprep.subr.mxu0 0.0
        %3644 = vmatpush2.msra.mxu0 0.0
        %3645 = vmatprep.subr.mxu0 0.0
        %3646 = vmatpush2.msra.mxu0 0.0
        %3647 = vmatprep.subr.mxu0 0.0
        %3648 = vmatpush2.msra.mxu0 0.0
        %3649 = vmatprep.subr.mxu0 0.0
        %3650 = vmatpush2.msra.mxu0 0.0
        %3651 = vmatprep.subr.mxu0 0.0
        %3652 = vmatpush2.msra.mxu0 0.0
        %3653 = vmatprep.mubr.f32.mxu0 0.0
        %3654 = vmatmul.mubr.f32.gmra.mxu0 %v3587
        %v3655 = vpop.f32.mrf.mxu0
        %v3656 = vadd.f32 0.0, %v3655
        %v3657 = vpop.f32.mrf.mxu0
        %3658 = vdwg.mxu0
        %v3659 = vadd.f32 %v3584, %v3656
        %v3660 = vld [vmem:[%s3 + $0x330] sm:$0xff]
        %v3661 = vld [vmem:[%s3 + $0x338] sm:$0xff]
        %v3662 = vsel %vm268, %v3268, 0
        %3664 = vmatprep.subr.mxu0 0.0
        %3665 = vmatpush1.msra.mxu0 0.0
        %3666 = vmatprep.subr.mxu0 0.0
        %3667 = vmatpush1.msra.mxu0 0.0
        %3668 = vmatprep.subr.mxu0 0.0
        %3669 = vmatpush1.msra.mxu0 0.0
        %3670 = vmatprep.subr.mxu0 0.0
        %3671 = vmatpush1.msra.mxu0 0.0
        %3672 = vmatprep.subr.mxu0 0.0
        %3673 = vmatpush1.msra.mxu0 0.0
        %3674 = vmatprep.subr.mxu0 0.0
        %3675 = vmatpush1.msra.mxu0 0.0
        %3676 = vmatprep.subr.mxu0 0.0
        %3677 = vmatpush1.msra.mxu0 0.0
        %3678 = vmatprep.subr.mxu0 0.0
        %3679 = vmatpush1.msra.mxu0 0.0
        %3680 = vmatprep.subr.mxu0 0.0
        %3681 = vmatpush1.msra.mxu0 0.0
        %3682 = vmatprep.subr.mxu0 0.0
        %3683 = vmatpush1.msra.mxu0 0.0
        %3684 = vmatprep.subr.mxu0 0.0
        %3685 = vmatpush1.msra.mxu0 0.0
        %3686 = vmatprep.subr.mxu0 0.0
        %3687 = vmatpush1.msra.mxu0 0.0
        %3688 = vmatprep.subr.mxu0 0.0
        %3689 = vmatpush1.msra.mxu0 0.0
        %3690 = vmatprep.subr.mxu0 0.0
        %3691 = vmatpush1.msra.mxu0 0.0
        %3692 = vmatprep.subr.mxu0 0.0
        %3693 = vmatpush1.msra.mxu0 %v3661
        %3694 = vmatprep.subr.mxu0 0.0
        %3695 = vmatpush1.msra.mxu0 %v3660
        %3696 = vmatprep.subr.mxu0 0.0
        %3697 = vmatpush2.msra.mxu0 0.0
        %3698 = vmatprep.subr.mxu0 0.0
        %3699 = vmatpush2.msra.mxu0 0.0
        %3700 = vmatprep.subr.mxu0 0.0
        %3701 = vmatpush2.msra.mxu0 0.0
        %3702 = vmatprep.subr.mxu0 0.0
        %3703 = vmatpush2.msra.mxu0 0.0
        %3704 = vmatprep.subr.mxu0 0.0
        %3705 = vmatpush2.msra.mxu0 0.0
        %3706 = vmatprep.subr.mxu0 0.0
        %3707 = vmatpush2.msra.mxu0 0.0
        %3708 = vmatprep.subr.mxu0 0.0
        %3709 = vmatpush2.msra.mxu0 0.0
        %3710 = vmatprep.subr.mxu0 0.0
        %3711 = vmatpush2.msra.mxu0 0.0
        %3712 = vmatprep.subr.mxu0 0.0
        %3713 = vmatpush2.msra.mxu0 0.0
        %3714 = vmatprep.subr.mxu0 0.0
        %3715 = vmatpush2.msra.mxu0 0.0
        %3716 = vmatprep.subr.mxu0 0.0
        %3717 = vmatpush2.msra.mxu0 0.0
        %3718 = vmatprep.subr.mxu0 0.0
        %3719 = vmatpush2.msra.mxu0 0.0
        %3720 = vmatprep.subr.mxu0 0.0
        %3721 = vmatpush2.msra.mxu0 0.0
        %3722 = vmatprep.subr.mxu0 0.0
        %3723 = vmatpush2.msra.mxu0 0.0
        %3724 = vmatprep.subr.mxu0 0.0
        %3725 = vmatpush2.msra.mxu0 0.0
        %3726 = vmatprep.subr.mxu0 0.0
        %3727 = vmatpush2.msra.mxu0 0.0
        %3728 = vmatprep.mubr.f32.mxu0 0.0
        %3729 = vmatmul.mubr.f32.gmra.mxu0 %v3662
        %v3730 = vpop.f32.mrf.mxu0
        %v3731 = vadd.f32 0.0, %v3730
        %v3732 = vpop.f32.mrf.mxu0
        %3733 = vdwg.mxu0
        %v3734 = vadd.f32 %v3659, %v3731
        %v3735 = vld [vmem:[%s3 + $0x340] sm:$0xff]
        %v3736 = vld [vmem:[%s3 + $0x348] sm:$0xff]
        %v3738 = vsel %vm268, %v3422, 0
        %3740 = vmatprep.subr.mxu0 0.0
        %3741 = vmatpush1.msra.mxu0 0.0
        %3742 = vmatprep.subr.mxu0 0.0
        %3743 = vmatpush1.msra.mxu0 0.0
        %3744 = vmatprep.subr.mxu0 0.0
        %3745 = vmatpush1.msra.mxu0 0.0
        %3746 = vmatprep.subr.mxu0 0.0
        %3747 = vmatpush1.msra.mxu0 0.0
        %3748 = vmatprep.subr.mxu0 0.0
        %3749 = vmatpush1.msra.mxu0 0.0
        %3750 = vmatprep.subr.mxu0 0.0
        %3751 = vmatpush1.msra.mxu0 0.0
        %3752 = vmatprep.subr.mxu0 0.0
        %3753 = vmatpush1.msra.mxu0 0.0
        %3754 = vmatprep.subr.mxu0 0.0
        %3755 = vmatpush1.msra.mxu0 0.0
        %3756 = vmatprep.subr.mxu0 0.0
        %3757 = vmatpush1.msra.mxu0 0.0
        %3758 = vmatprep.subr.mxu0 0.0
        %3759 = vmatpush1.msra.mxu0 0.0
        %3760 = vmatprep.subr.mxu0 0.0
        %3761 = vmatpush1.msra.mxu0 0.0
        %3762 = vmatprep.subr.mxu0 0.0
        %3763 = vmatpush1.msra.mxu0 0.0
        %3764 = vmatprep.subr.mxu0 0.0
        %3765 = vmatpush1.msra.mxu0 0.0
        %3766 = vmatprep.subr.mxu0 0.0
        %3767 = vmatpush1.msra.mxu0 0.0
        %3768 = vmatprep.subr.mxu0 0.0
        %3769 = vmatpush1.msra.mxu0 %v3736
        %3770 = vmatprep.subr.mxu0 0.0
        %3771 = vmatpush1.msra.mxu0 %v3735
        %3772 = vmatprep.subr.mxu0 0.0
        %3773 = vmatpush2.msra.mxu0 0.0
        %3774 = vmatprep.subr.mxu0 0.0
        %3775 = vmatpush2.msra.mxu0 0.0
        %3776 = vmatprep.subr.mxu0 0.0
        %3777 = vmatpush2.msra.mxu0 0.0
        %3778 = vmatprep.subr.mxu0 0.0
        %3779 = vmatpush2.msra.mxu0 0.0
        %3780 = vmatprep.subr.mxu0 0.0
        %3781 = vmatpush2.msra.mxu0 0.0
        %3782 = vmatprep.subr.mxu0 0.0
        %3783 = vmatpush2.msra.mxu0 0.0
        %3784 = vmatprep.subr.mxu0 0.0
        %3785 = vmatpush2.msra.mxu0 0.0
        %3786 = vmatprep.subr.mxu0 0.0
        %3787 = vmatpush2.msra.mxu0 0.0
        %3788 = vmatprep.subr.mxu0 0.0
        %3789 = vmatpush2.msra.mxu0 0.0
        %3790 = vmatprep.subr.mxu0 0.0
        %3791 = vmatpush2.msra.mxu0 0.0
        %3792 = vmatprep.subr.mxu0 0.0
        %3793 = vmatpush2.msra.mxu0 0.0
        %3794 = vmatprep.subr.mxu0 0.0
        %3795 = vmatpush2.msra.mxu0 0.0
        %3796 = vmatprep.subr.mxu0 0.0
        %3797 = vmatpush2.msra.mxu0 0.0
        %3798 = vmatprep.subr.mxu0 0.0
        %3799 = vmatpush2.msra.mxu0 0.0
        %3800 = vmatprep.subr.mxu0 0.0
        %3801 = vmatpush2.msra.mxu0 0.0
        %3802 = vmatprep.subr.mxu0 0.0
        %3803 = vmatpush2.msra.mxu0 0.0
        %3804 = vmatprep.mubr.f32.mxu0 0.0
        %3805 = vmatmul.mubr.f32.gmra.mxu0 %v3738
        %v3806 = vpop.f32.mrf.mxu0
        %v3807 = vadd.f32 0.0, %v3806
        %v3808 = vpop.f32.mrf.mxu0
        %3809 = vdwg.mxu0
        %v3810 = vadd.f32 %v3734, %v3807
        %v3811 = vmax.f32 %v3810, 0.0
        %v3812 = vld [vmem:[%s3 + $0x350] sm:$0xff]
        %v3813 = vld [vmem:[%s3 + $0x358] sm:$0xff]
        %v3814 = vld [vmem:[%s3 + $0x360] sm:$0xff]
        %v3815 = vld [vmem:[%s3 + $0x368] sm:$0xff]
        %v3816 = vld [vmem:[%s4 + $0x18] sm:$0x1]
        %v3818 = vsel %vm655, %v3811, 0
        %3820 = vmatprep.subr.mxu0 0.0
        %3821 = vmatpush1.msra.mxu0 0.0
        %3822 = vmatprep.subr.mxu0 0.0
        %3823 = vmatpush1.msra.mxu0 0.0
        %3824 = vmatprep.subr.mxu0 0.0
        %3825 = vmatpush1.msra.mxu0 0.0
        %3826 = vmatprep.subr.mxu0 0.0
        %3827 = vmatpush1.msra.mxu0 0.0
        %3828 = vmatprep.subr.mxu0 0.0
        %3829 = vmatpush1.msra.mxu0 0.0
        %3830 = vmatprep.subr.mxu0 0.0
        %3831 = vmatpush1.msra.mxu0 0.0
        %3832 = vmatprep.subr.mxu0 0.0
        %3833 = vmatpush1.msra.mxu0 0.0
        %3834 = vmatprep.subr.mxu0 0.0
        %3835 = vmatpush1.msra.mxu0 0.0
        %3836 = vmatprep.subr.mxu0 0.0
        %3837 = vmatpush1.msra.mxu0 0.0
        %3838 = vmatprep.subr.mxu0 0.0
        %3839 = vmatpush1.msra.mxu0 0.0
        %3840 = vmatprep.subr.mxu0 0.0
        %3841 = vmatpush1.msra.mxu0 0.0
        %3842 = vmatprep.subr.mxu0 0.0
        %3843 = vmatpush1.msra.mxu0 0.0
        %3844 = vmatprep.subr.mxu0 0.0
        %3845 = vmatpush1.msra.mxu0 %v3815
        %3846 = vmatprep.subr.mxu0 0.0
        %3847 = vmatpush1.msra.mxu0 %v3814
        %3848 = vmatprep.subr.mxu0 0.0
        %3849 = vmatpush1.msra.mxu0 %v3813
        %3850 = vmatprep.subr.mxu0 0.0
        %3851 = vmatpush1.msra.mxu0 %v3812
        %3852 = vmatprep.subr.mxu0 0.0
        %3853 = vmatpush2.msra.mxu0 0.0
        %3854 = vmatprep.subr.mxu0 0.0
        %3855 = vmatpush2.msra.mxu0 0.0
        %3856 = vmatprep.subr.mxu0 0.0
        %3857 = vmatpush2.msra.mxu0 0.0
        %3858 = vmatprep.subr.mxu0 0.0
        %3859 = vmatpush2.msra.mxu0 0.0
        %3860 = vmatprep.subr.mxu0 0.0
        %3861 = vmatpush2.msra.mxu0 0.0
        %3862 = vmatprep.subr.mxu0 0.0
        %3863 = vmatpush2.msra.mxu0 0.0
        %3864 = vmatprep.subr.mxu0 0.0
        %3865 = vmatpush2.msra.mxu0 0.0
        %3866 = vmatprep.subr.mxu0 0.0
        %3867 = vmatpush2.msra.mxu0 0.0
        %3868 = vmatprep.subr.mxu0 0.0
        %3869 = vmatpush2.msra.mxu0 0.0
        %3870 = vmatprep.subr.mxu0 0.0
        %3871 = vmatpush2.msra.mxu0 0.0
        %3872 = vmatprep.subr.mxu0 0.0
        %3873 = vmatpush2.msra.mxu0 0.0
        %3874 = vmatprep.subr.mxu0 0.0
        %3875 = vmatpush2.msra.mxu0 0.0
        %3876 = vmatprep.subr.mxu0 0.0
        %3877 = vmatpush2.msra.mxu0 0.0
        %3878 = vmatprep.subr.mxu0 0.0
        %3879 = vmatpush2.msra.mxu0 0.0
        %3880 = vmatprep.subr.mxu0 0.0
        %3881 = vmatpush2.msra.mxu0 0.0
        %3882 = vmatprep.subr.mxu0 0.0
        %3883 = vmatpush2.msra.mxu0 0.0
        %3884 = vmatprep.mubr.f32.mxu0 0.0
        %3885 = vmatmul.mubr.f32.gmra.mxu0 %v3818
        %v3886 = vpop.f32.mrf.mxu0
        %v3887 = vadd.f32 %v3816, %v3886
        %v3888 = vpop.f32.mrf.mxu0
        %3889 = vdwg.mxu0
        %v3890 = vsub.f32 0.0, %v3887
        %v3891 = vmul.f32 %v3890, 1.442695
        %v3892 = vpow.pop %v3891
        %v3893 = vadd.f32 %v3892, 1.0
        %v3894 = vrcp.pop %v3893
        %v3895 = vmul.f32 1.0, %v3894
        %v3896 = vlaneseq
        %v3897 = vand.u32 %v3896, 127
        %vm3898 = vcmp.eq.s32.totalorder %v3897, 8
        %v3899 = vstv %s1607
        %v3900 = vsel %vm3898, %v3899, 0.0
        %vm3901 = vcmp.eq.s32.totalorder %v3897, 9
        %v3902 = vstv %s1629
        %v3903 = vsel %vm3901, %v3902, %v3900
        %vm3904 = vcmp.eq.s32.totalorder %v3897, 10
        %v3905 = vstv %s2839
        %v3906 = vsel %vm3904, %v3905, %v3903
        %vm3907 = vcmp.eq.s32.totalorder %v3897, 11
        %v3908 = vstv %s2855
        %v3909 = vsel %vm3907, %v3908, %v3906
        %3910 = vst [vmem:[%s246] sm:$0x1] %v3909
        %vm3911 = vcmask 16384
        %3912 = vst.msk [vmem:[%s246] sm:$0x1] %vm3911, %v3895
        %s3913 = sand.u32 %s147, 1
        %s3914 = scalar_lea.sflag [#allocation3], %s3913
        %s3915 = sand.u32 %s147, 1
        %s3916 = scalar_lea.vmem [#allocation2], %s3915
        // Predicated region
        $region41: #{tpu_custom_call.1} parent=39 // pred_check
          %p3917 = pneg %p157
        $region42: #{tpu_custom_call.1} parent=39 // pred_check_branch
          %3919 = sbr.rel (%p3917) target = $region44
        $region43: #{tpu_custom_call.1} parent=39 // pred_region
          %s3921 = ssub.s32 16, 16
          %3922 = vsyncadd %s3914, %s3921
          %s3923 = smul.addr %s19, 16
          %s3924 = scalar_lea.hbm %s5, %s3923
          %s3926 = sshll.u32 %s3916, 4
          %s3927 = int_to_ptr.vmem [resolvable:$true] %s3926
          %3929 = dma.vmem_to_hbm [thread:$0]  %s3927, 16, %s3924, %s3914
        $region44: #{tpu_custom_call.1} parent=39 // pred_fallthru
          _
      $region40: #{tpu_custom_call.1} parent=5 // pred_fallthru
        _
      %p3930 = scmp.le.s32.totalorder 2, %s14
      // Predicated region
      $region45: #{tpu_custom_call.1} parent=5 // pred_check
        %p3931 = pneg %p3930
      $region46: #{tpu_custom_call.1} parent=5 // pred_check_branch
        %3933 = sbr.rel (%p3931) target = $region48
      $region47: #{tpu_custom_call.1} parent=5 // pred_region
        %s3934 = ssub.s32 %s14, 2
        // Predicated region
        $region49: #{tpu_custom_call.1} parent=47 // pred_check
          %p3935 = pneg %p163
        $region50: #{tpu_custom_call.1} parent=47 // pred_check_branch
          %3937 = sbr.rel (%p3935) target = $region52
        $region51: #{tpu_custom_call.1} parent=47 // pred_region
          %s3938 = sand.u32 %s148, 1
          %s3939 = scalar_lea.sflag [#allocation3], %s3938
          %s3940 = sand.u32 %s148, 1
          %s3941 = scalar_lea.vmem [#allocation2], %s3940
          %3942 = dma.done %s3939, 16
        $region52: #{tpu_custom_call.1} parent=47 // pred_fallthru
          _
      $region48: #{tpu_custom_call.1} parent=5 // pred_fallthru
        _
    $region6: #{tpu_custom_call.1} parent=1 // loop_footer
      %s18 = sadd.s32 1, %s14
    $region7: #{tpu_custom_call.1} parent=1 // loop_footer_branch
      %13 = sbr.rel target = $region3
    $region8: #{tpu_custom_call.1} parent=1 // loop_exit
      _
    %3943 = vsyncpa [#allocation3], 1
    %s3944 = scalar_lea.sflag [#allocation3], 1
    %3945 = vsyncpa %s3944, 1

</llo_original>
